<compile_context>
chip_gen: v5e
topology: v5e:2x2
jax: 0.10.0
libtpu: 0.0.40
codegen_flags: <defaults>
</compile_context>

<pallas_src>
import jax
import jax.numpy as jnp
from jax.experimental import pallas as pl
from jax.experimental.pallas import tpu as pltpu

_CPAD = 128  # lane-padded channel width used inside the kernel


# ------------------------------- fused kernel --------------------------------

def _fused_forward_kernel(x_ref, w1_ref, b1_ref, wb_ref, bb_ref, fcw_ref, fcb_ref,
                          o_ref, buf_ref):
    f32 = jnp.float32
    L = x_ref.shape[1]
    K1 = w1_ref.shape[0]          # conv1 kernel size (8)
    C = buf_ref.shape[1]          # padded channel width (128)
    L1 = L - (K1 - 1)             # conv1 output length (stride 1, no padding)

    # ---- conv1: Conv1d(2, 32, k=8, s=1) + BN + ReLU (output channels padded to C) ----
    acc = jnp.dot(x_ref[0, 0:L1, :], w1_ref[0], preferred_element_type=f32)
    for k in range(1, K1):
        acc = acc + jnp.dot(x_ref[0, k:k + L1, :], w1_ref[k],
                            preferred_element_type=f32)
    buf_ref[0:L1, :] = jnp.maximum(acc + b1_ref[...], 0.0)

    # ---- MaxPool1d(kernel=2, stride=2) ----
    Lp = L1 // 2
    pooled = jnp.maximum(buf_ref[pl.ds(0, Lp, stride=2), :],
                         buf_ref[pl.ds(1, Lp, stride=2), :])
    # Layer inputs live at rows 1..Lin; row 0 is a permanent zero row that provides the
    # x[-1] = 0 left padding of the k=3 stride-2 branch.
    buf_ref[1:Lp + 1, :] = pooled
    buf_ref[0:1, :] = jnp.zeros((1, C), f32)

    # ---- 4 parallel-branch blocks, each collapsed into 3 tap matmuls + epilogue ----
    n_blocks = wb_ref.shape[0]
    Lin = Lp
    xnew = pooled
    for blk in range(n_blocks):
        Lout = (Lin + 1) // 2
        if Lin % 2 == 1:          # right tap of the last window would read row Lin+1
            buf_ref[Lin + 1:Lin + 2, :] = jnp.zeros((1, C), f32)
        left = buf_ref[pl.ds(0, Lout, stride=2), :]     # x[2l-1]  (row 0 = zero pad)
        center = buf_ref[pl.ds(1, Lout, stride=2), :]   # x[2l]
        right = buf_ref[pl.ds(2, Lout, stride=2), :]    # x[2l+1]
        acc2 = (jnp.dot(left, wb_ref[blk, 0], preferred_element_type=f32)
                + jnp.dot(center, wb_ref[blk, 1], preferred_element_type=f32)
                + jnp.dot(right, wb_ref[blk, 2], preferred_element_type=f32)
                + bb_ref[blk])
        # cols 0:C   -> concat(branch1, branch2, branch3) pre-activation (+ zero pad)
        # cols C:2C  -> residual pre-activation (+ zero pad)
        xnew = jnp.maximum(jnp.maximum(acc2[:, :C], 0.0) + acc2[:, C:], 0.0)
        Lin = Lout
        if blk < n_blocks - 1:
            buf_ref[1:Lout + 1, :] = xnew

    # ---- AdaptiveAvgPool1d(1) + Linear head ----
    feat = jnp.mean(xnew, axis=0, keepdims=True)                       # [1, C]
    out = jnp.dot(feat, fcw_ref[...], preferred_element_type=f32) + fcb_ref[...]
    o_ref[0] = out.astype(o_ref.dtype)


# ------------------------- weight folding / preparation -----------------------

def _fold_bn(w, b, gamma, beta, mean, var, eps=1e-5):
    """PyTorch Conv1d weight [Cout, Cin, K] + BN -> folded [K*Cin, Cout], bias [1, Cout]."""
    Cout, Cin, K = w.shape
    w2d = jnp.transpose(w, (2, 1, 0)).reshape(K * Cin, Cout)   # rows ordered (k, cin)
    s = gamma / jnp.sqrt(var + eps)
    return w2d * s[None, :], ((b - mean) * s + beta).reshape(1, Cout)


def _fold_bn_p(p):
    return _fold_bn(p["w"], p["b"], p["gamma"], p["beta"], p["mean"], p["var"])


def _prepare_weights(params):
    C = _CPAD
    # conv1: per-tap weights [K1, 2, C], output channels padded 32 -> C.
    p1 = params["conv1"]
    cout1, cin1, k1 = p1["w"].shape
    w1f, b1f = _fold_bn_p(p1)
    w1 = jnp.zeros((k1, cin1, C), jnp.float32).at[:, :, :cout1].set(
        w1f.reshape(k1, cin1, cout1))
    b1 = jnp.zeros((1, C), jnp.float32).at[:, :cout1].set(b1f)

    # blocks: one [3, C, 2C] tap weight + [1, 2C] bias per block.
    # column layout: [branch1 | branch2 | branch3 | pad] [residual | pad]
    wbs, bbs = [], []
    for blk in params["blocks"]:
        cin = blk["branch1"]["w"].shape[1]
        cb = blk["branch1"]["w"].shape[0]      # 32 per branch
        cr = blk["residual"]["w"].shape[0]     # 96 residual
        W = jnp.zeros((3, C, 2 * C), jnp.float32)
        bias = jnp.zeros((1, 2 * C), jnp.float32)
        wf, bf = _fold_bn_p(blk["branch2"])                      # k=3 -> all 3 taps
        W = W.at[:, :cin, cb:2 * cb].set(wf.reshape(3, cin, cb))
        bias = bias.at[:, cb:2 * cb].set(bf)
        wf, bf = _fold_bn_p(blk["branch1"])                      # k=1 -> center tap
        W = W.at[1, :cin, 0:cb].set(wf)
        bias = bias.at[:, 0:cb].set(bf)
        wf, bf = _fold_bn_p(blk["branch3"])                      # k=1 -> center tap
        W = W.at[1, :cin, 2 * cb:3 * cb].set(wf)
        bias = bias.at[:, 2 * cb:3 * cb].set(bf)
        wf, bf = _fold_bn_p(blk["residual"])                     # k=1 -> center tap
        W = W.at[1, :cin, C:C + cr].set(wf)
        bias = bias.at[:, C:C + cr].set(bf)
        wbs.append(W)
        bbs.append(bias)
    wb = jnp.stack(wbs)                                          # [4, 3, C, 2C]
    bb = jnp.stack(bbs)                                          # [4, 1, 2C]

    # head: Linear(96, out_dim), input features padded to C.
    out_dim, fc_in = params["fc_w"].shape
    fcw = jnp.zeros((C, out_dim), jnp.float32).at[:fc_in, :].set(params["fc_w"].T)
    fcb = params["fc_b"].reshape(1, out_dim)
    return w1, b1, wb, bb, fcw, fcb, out_dim


# --------------------------------- forward -----------------------------------

@jax.jit
def modulation_classifier_forward(params, x):
    """x: [B, 2, L] (PyTorch NCL) -> [B, 2 + 1 + num_classes]."""
    B, _, L = x.shape
    x_cl = jnp.transpose(x, (0, 2, 1)).astype(jnp.float32)       # [B, L, 2]
    w1, b1, wb, bb, fcw, fcb, out_dim = _prepare_weights(params)
    K1 = w1.shape[0]
    L1 = L - (K1 - 1)
    C = _CPAD

    out = pl.pallas_call(
        _fused_forward_kernel,
        out_shape=jax.ShapeDtypeStruct((B, 1, out_dim), jnp.float32),
        grid=(B,),
        in_specs=[
            pl.BlockSpec((1, L, x_cl.shape[2]), lambda i: (i, 0, 0)),
            pl.BlockSpec(w1.shape, lambda i: (0, 0, 0)),
            pl.BlockSpec(b1.shape, lambda i: (0, 0)),
            pl.BlockSpec(wb.shape, lambda i: (0, 0, 0, 0)),
            pl.BlockSpec(bb.shape, lambda i: (0, 0, 0)),
            pl.BlockSpec(fcw.shape, lambda i: (0, 0)),
            pl.BlockSpec(fcb.shape, lambda i: (0, 0)),
        ],
        out_specs=pl.BlockSpec((1, 1, out_dim), lambda i: (i, 0, 0)),
        scratch_shapes=[pltpu.VMEM((max(L1, 8), C), jnp.float32)],
        compiler_params=pltpu.CompilerParams(dimension_semantics=("parallel",)),
    )(x_cl, w1, b1, wb, bb, fcw, fcb)
    return out[:, 0, :]


# --------------------------- parameter construction ---------------------------

def init_params(key, num_classes):
    keys = jax.random.split(key, 128)
    it = iter(keys)

    def nrm(shape, scale=0.1):
        return scale * jax.random.normal(next(it), shape, dtype=jnp.float32)

    def conv_bn(cin, cout, k):
        return dict(
            w=nrm((cout, cin, k)),
            b=nrm((cout,)),
            gamma=1.0 + nrm((cout,)),
            beta=nrm((cout,)),
            mean=nrm((cout,)),
            var=1.0 + 0.1 * jax.random.uniform(next(it), (cout,), dtype=jnp.float32),
        )

    params = {"conv1": conv_bn(2, 32, 8), "blocks": []}
    for i in range(4):
        cin = 32 if i == 0 else 96
        params["blocks"].append(dict(
            branch1=conv_bn(cin, 32, 1),
            branch2=conv_bn(cin, 32, 3),
            branch3=conv_bn(cin, 32, 1),
            residual=conv_bn(cin, 96, 1),
        ))
    out_dim = 2 + 1 + num_classes
    params["fc_w"] = nrm((out_dim, 96))   # PyTorch Linear weight layout [out, in]
    params["fc_b"] = nrm((out_dim,))
    return params


# ------------------------------ pure-JAX reference ----------------------------

def _im2col_1d(x_cl, k, stride, pad):
    B, _, Cin = x_cl.shape
    if pad:
        x_cl = jnp.pad(x_cl, ((0, 0), (pad, pad), (0, 0)))
    Lp = x_cl.shape[1]
    Lout = (Lp - k) // stride + 1
    idx = jnp.arange(Lout)[:, None] * stride + jnp.arange(k)[None, :]
    patches = x_cl[:, idx, :].reshape(B, Lout, k * Cin)
    return patches, Lout


def _ref_forward(params, x):
    hi = jax.lax.Precision.HIGHEST
    x = jnp.transpose(x, (0, 2, 1))

    def conv(x_cl, p, stride, pad, relu):
        K = p["w"].shape[2]
        patches, _ = _im2col_1d(x_cl, K, stride, pad)
        w_fold, b_fold = _fold_bn_p(p)
        out = jnp.einsum("blk,kc->blc", patches, w_fold, precision=hi) + b_fold
        return jnp.maximum(out, 0.0) if relu else out

    x = conv(x, params["conv1"], 1, 0, True)
    Lp = x.shape[1] // 2
    x = jnp.maximum(x[:, 0:2 * Lp:2, :], x[:, 1:2 * Lp:2, :])
    for blk in params["blocks"]:
        b1 = conv(x, blk["branch1"], 2, 0, True)
        b2 = conv(x, blk["branch2"], 2, 1, True)
        b3 = conv(x, blk["branch3"], 2, 0, True)
        res = conv(x, blk["residual"], 2, 0, False)
        x = jnp.maximum(jnp.concatenate([b1, b2, b3], axis=-1) + res, 0.0)
    feat = jnp.mean(x, axis=1)
    return jnp.dot(feat, params["fc_w"].T, precision=hi) + params["fc_b"]


# ------------------------------------ main ------------------------------------

if __name__ == "__main__":
    # TODO(synk): stochastic_recursive_inference / _forward_subband (scipy FIR filtering,
    # host-side recursion and torch sampling) are outside forward() and not translated.
    num_classes = 5
    B, L = 2, 135   # L=135 -> conv1: 128 -> pool: 64 -> blocks: 32, 16, 8, 4

    key = jax.random.PRNGKey(0)
    k_param, k_x = jax.random.split(key)
    params = init_params(k_param, num_classes)
    x = jax.random.normal(k_x, (B, 2, L), dtype=jnp.float32)

    out = jax.block_until_ready(modulation_classifier_forward(params, x))
    assert out.shape == (B, 2 + 1 + num_classes), out.shape

    ref = jax.block_until_ready(_ref_forward(params, x))
    assert jnp.allclose(out, ref, rtol=1e-3, atol=1e-3), (out, ref)

    print("KERNEL_OK")
</pallas_src>

<mosaic_0001>
module attributes {stable_mosaic.version = 11 : i64} {
  func.func @_fused_forward_kernel(%arg0: i32, %arg1: memref<1x135x2xf32, #tpu.memory_space<vmem>>, %arg2: memref<8x2x128xf32, #tpu.memory_space<vmem>>, %arg3: memref<1x128xf32, #tpu.memory_space<vmem>>, %arg4: memref<4x3x128x256xf32, #tpu.memory_space<vmem>>, %arg5: memref<4x1x256xf32, #tpu.memory_space<vmem>>, %arg6: memref<128x8xf32, #tpu.memory_space<vmem>>, %arg7: memref<1x8xf32, #tpu.memory_space<vmem>>, %arg8: memref<1x1x8xf32, #tpu.memory_space<vmem>>, %arg9: memref<128x128xf32, #tpu.memory_space<vmem>>) attributes {dimension_semantics = [#tpu.dimension_semantics<parallel>], iteration_bounds = array<i64: 2>, scalar_prefetch = 0 : i64, scratch_operands = 1 : i64, tpu.core_type = #tpu.core_type<tc>, window_params = [{transform_indices = @transform_0, window_bounds = array<i64: 1, 135, 2>}, {pipeline_mode = #tpu.pipeline_mode<synchronous>, transform_indices = @transform_1, window_bounds = array<i64: 8, 2, 128>}, {pipeline_mode = #tpu.pipeline_mode<synchronous>, transform_indices = @transform_2, window_bounds = array<i64: 1, 128>}, {pipeline_mode = #tpu.pipeline_mode<synchronous>, transform_indices = @transform_3, window_bounds = array<i64: 4, 3, 128, 256>}, {pipeline_mode = #tpu.pipeline_mode<synchronous>, transform_indices = @transform_4, window_bounds = array<i64: 4, 1, 256>}, {pipeline_mode = #tpu.pipeline_mode<synchronous>, transform_indices = @transform_5, window_bounds = array<i64: 128, 8>}, {pipeline_mode = #tpu.pipeline_mode<synchronous>, transform_indices = @transform_6, window_bounds = array<i64: 1, 8>}, {transform_indices = @transform_7, window_bounds = array<i64: 1, 1, 8>}]} {
    %c0 = arith.constant 0 : index
    %c0_0 = arith.constant 0 : index
    %c0_1 = arith.constant 0 : index
    %0 = vector.load %arg1[%c0, %c0_0, %c0_1] : memref<1x135x2xf32, #tpu.memory_space<vmem>>, vector<1x128x2xf32>
    %1 = vector.shape_cast %0 : vector<1x128x2xf32> to vector<128x2xf32>
    %c0_2 = arith.constant 0 : index
    %c0_3 = arith.constant 0 : index
    %c0_4 = arith.constant 0 : index
    %2 = vector.load %arg2[%c0_2, %c0_3, %c0_4] : memref<8x2x128xf32, #tpu.memory_space<vmem>>, vector<1x2x128xf32>
    %3 = vector.shape_cast %2 : vector<1x2x128xf32> to vector<2x128xf32>
    %cst = arith.constant dense<0.000000e+00> : vector<128x128xf32>
    %4 = tpu.matmul %1, %3, %cst {dimension_numbers = #tpu.dot_dimension_numbers<[1], [0], [0], [1], [0, 0, 1, 1], [], []>} : vector<128x2xf32>, vector<2x128xf32>, vector<128x128xf32> -> vector<128x128xf32>
    %c0_5 = arith.constant 0 : index
    %c1 = arith.constant 1 : index
    %c0_6 = arith.constant 0 : index
    %5 = vector.load %arg1[%c0_5, %c1, %c0_6] : memref<1x135x2xf32, #tpu.memory_space<vmem>>, vector<1x128x2xf32>
    %6 = vector.shape_cast %5 : vector<1x128x2xf32> to vector<128x2xf32>
    %c1_7 = arith.constant 1 : index
    %c0_8 = arith.constant 0 : index
    %c0_9 = arith.constant 0 : index
    %7 = vector.load %arg2[%c1_7, %c0_8, %c0_9] : memref<8x2x128xf32, #tpu.memory_space<vmem>>, vector<1x2x128xf32>
    %8 = vector.shape_cast %7 : vector<1x2x128xf32> to vector<2x128xf32>
    %cst_10 = arith.constant dense<0.000000e+00> : vector<128x128xf32>
    %9 = tpu.matmul %6, %8, %cst_10 {dimension_numbers = #tpu.dot_dimension_numbers<[1], [0], [0], [1], [0, 0, 1, 1], [], []>} : vector<128x2xf32>, vector<2x128xf32>, vector<128x128xf32> -> vector<128x128xf32>
    %10 = arith.addf %4, %9 : vector<128x128xf32>
    %c0_11 = arith.constant 0 : index
    %c2 = arith.constant 2 : index
    %c0_12 = arith.constant 0 : index
    %11 = vector.load %arg1[%c0_11, %c2, %c0_12] : memref<1x135x2xf32, #tpu.memory_space<vmem>>, vector<1x128x2xf32>
    %12 = vector.shape_cast %11 : vector<1x128x2xf32> to vector<128x2xf32>
    %c2_13 = arith.constant 2 : index
    %c0_14 = arith.constant 0 : index
    %c0_15 = arith.constant 0 : index
    %13 = vector.load %arg2[%c2_13, %c0_14, %c0_15] : memref<8x2x128xf32, #tpu.memory_space<vmem>>, vector<1x2x128xf32>
    %14 = vector.shape_cast %13 : vector<1x2x128xf32> to vector<2x128xf32>
    %cst_16 = arith.constant dense<0.000000e+00> : vector<128x128xf32>
    %15 = tpu.matmul %12, %14, %cst_16 {dimension_numbers = #tpu.dot_dimension_numbers<[1], [0], [0], [1], [0, 0, 1, 1], [], []>} : vector<128x2xf32>, vector<2x128xf32>, vector<128x128xf32> -> vector<128x128xf32>
    %16 = arith.addf %10, %15 : vector<128x128xf32>
    %c0_17 = arith.constant 0 : index
    %c3 = arith.constant 3 : index
    %c0_18 = arith.constant 0 : index
    %17 = vector.load %arg1[%c0_17, %c3, %c0_18] : memref<1x135x2xf32, #tpu.memory_space<vmem>>, vector<1x128x2xf32>
    %18 = vector.shape_cast %17 : vector<1x128x2xf32> to vector<128x2xf32>
    %c3_19 = arith.constant 3 : index
    %c0_20 = arith.constant 0 : index
    %c0_21 = arith.constant 0 : index
    %19 = vector.load %arg2[%c3_19, %c0_20, %c0_21] : memref<8x2x128xf32, #tpu.memory_space<vmem>>, vector<1x2x128xf32>
    %20 = vector.shape_cast %19 : vector<1x2x128xf32> to vector<2x128xf32>
    %cst_22 = arith.constant dense<0.000000e+00> : vector<128x128xf32>
    %21 = tpu.matmul %18, %20, %cst_22 {dimension_numbers = #tpu.dot_dimension_numbers<[1], [0], [0], [1], [0, 0, 1, 1], [], []>} : vector<128x2xf32>, vector<2x128xf32>, vector<128x128xf32> -> vector<128x128xf32>
    %22 = arith.addf %16, %21 : vector<128x128xf32>
    %c0_23 = arith.constant 0 : index
    %c4 = arith.constant 4 : index
    %c0_24 = arith.constant 0 : index
    %23 = vector.load %arg1[%c0_23, %c4, %c0_24] : memref<1x135x2xf32, #tpu.memory_space<vmem>>, vector<1x128x2xf32>
    %24 = vector.shape_cast %23 : vector<1x128x2xf32> to vector<128x2xf32>
    %c4_25 = arith.constant 4 : index
    %c0_26 = arith.constant 0 : index
    %c0_27 = arith.constant 0 : index
    %25 = vector.load %arg2[%c4_25, %c0_26, %c0_27] : memref<8x2x128xf32, #tpu.memory_space<vmem>>, vector<1x2x128xf32>
    %26 = vector.shape_cast %25 : vector<1x2x128xf32> to vector<2x128xf32>
    %cst_28 = arith.constant dense<0.000000e+00> : vector<128x128xf32>
    %27 = tpu.matmul %24, %26, %cst_28 {dimension_numbers = #tpu.dot_dimension_numbers<[1], [0], [0], [1], [0, 0, 1, 1], [], []>} : vector<128x2xf32>, vector<2x128xf32>, vector<128x128xf32> -> vector<128x128xf32>
    %28 = arith.addf %22, %27 : vector<128x128xf32>
    %c0_29 = arith.constant 0 : index
    %c5 = arith.constant 5 : index
    %c0_30 = arith.constant 0 : index
    %29 = vector.load %arg1[%c0_29, %c5, %c0_30] : memref<1x135x2xf32, #tpu.memory_space<vmem>>, vector<1x128x2xf32>
    %30 = vector.shape_cast %29 : vector<1x128x2xf32> to vector<128x2xf32>
    %c5_31 = arith.constant 5 : index
    %c0_32 = arith.constant 0 : index
    %c0_33 = arith.constant 0 : index
    %31 = vector.load %arg2[%c5_31, %c0_32, %c0_33] : memref<8x2x128xf32, #tpu.memory_space<vmem>>, vector<1x2x128xf32>
    %32 = vector.shape_cast %31 : vector<1x2x128xf32> to vector<2x128xf32>
    %cst_34 = arith.constant dense<0.000000e+00> : vector<128x128xf32>
    %33 = tpu.matmul %30, %32, %cst_34 {dimension_numbers = #tpu.dot_dimension_numbers<[1], [0], [0], [1], [0, 0, 1, 1], [], []>} : vector<128x2xf32>, vector<2x128xf32>, vector<128x128xf32> -> vector<128x128xf32>
    %34 = arith.addf %28, %33 : vector<128x128xf32>
    %c0_35 = arith.constant 0 : index
    %c6 = arith.constant 6 : index
    %c0_36 = arith.constant 0 : index
    %35 = vector.load %arg1[%c0_35, %c6, %c0_36] : memref<1x135x2xf32, #tpu.memory_space<vmem>>, vector<1x128x2xf32>
    %36 = vector.shape_cast %35 : vector<1x128x2xf32> to vector<128x2xf32>
    %c6_37 = arith.constant 6 : index
    %c0_38 = arith.constant 0 : index
    %c0_39 = arith.constant 0 : index
    %37 = vector.load %arg2[%c6_37, %c0_38, %c0_39] : memref<8x2x128xf32, #tpu.memory_space<vmem>>, vector<1x2x128xf32>
    %38 = vector.shape_cast %37 : vector<1x2x128xf32> to vector<2x128xf32>
    %cst_40 = arith.constant dense<0.000000e+00> : vector<128x128xf32>
    %39 = tpu.matmul %36, %38, %cst_40 {dimension_numbers = #tpu.dot_dimension_numbers<[1], [0], [0], [1], [0, 0, 1, 1], [], []>} : vector<128x2xf32>, vector<2x128xf32>, vector<128x128xf32> -> vector<128x128xf32>
    %40 = arith.addf %34, %39 : vector<128x128xf32>
    %c0_41 = arith.constant 0 : index
    %c7 = arith.constant 7 : index
    %c0_42 = arith.constant 0 : index
    %41 = vector.load %arg1[%c0_41, %c7, %c0_42] : memref<1x135x2xf32, #tpu.memory_space<vmem>>, vector<1x128x2xf32>
    %42 = vector.shape_cast %41 : vector<1x128x2xf32> to vector<128x2xf32>
    %c7_43 = arith.constant 7 : index
    %c0_44 = arith.constant 0 : index
    %c0_45 = arith.constant 0 : index
    %43 = vector.load %arg2[%c7_43, %c0_44, %c0_45] : memref<8x2x128xf32, #tpu.memory_space<vmem>>, vector<1x2x128xf32>
    %44 = vector.shape_cast %43 : vector<1x2x128xf32> to vector<2x128xf32>
    %cst_46 = arith.constant dense<0.000000e+00> : vector<128x128xf32>
    %45 = tpu.matmul %42, %44, %cst_46 {dimension_numbers = #tpu.dot_dimension_numbers<[1], [0], [0], [1], [0, 0, 1, 1], [], []>} : vector<128x2xf32>, vector<2x128xf32>, vector<128x128xf32> -> vector<128x128xf32>
    %46 = arith.addf %40, %45 : vector<128x128xf32>
    %c0_47 = arith.constant 0 : index
    %c0_48 = arith.constant 0 : index
    %47 = vector.load %arg3[%c0_47, %c0_48] : memref<1x128xf32, #tpu.memory_space<vmem>>, vector<1x128xf32>
    %48 = vector.broadcast %47 : vector<1x128xf32> to vector<128x128xf32>
    %49 = arith.addf %46, %48 : vector<128x128xf32>
    %cst_49 = arith.constant 0.000000e+00 : f32
    %50 = vector.broadcast %cst_49 : f32 to vector<128x128xf32>
    %51 = arith.maximumf %49, %50 : vector<128x128xf32>
    %c0_50 = arith.constant 0 : index
    %c0_51 = arith.constant 0 : index
    %52 = vector.load %arg9[%c0_50, %c0_51] : memref<128x128xf32, #tpu.memory_space<vmem>>, vector<128x128xf32>
    tpu.vector_store %arg9[%c0_50, %c0_51], %51 {strides = array<i32>} : memref<128x128xf32, #tpu.memory_space<vmem>>, vector<128x128xf32>,
    %c0_52 = arith.constant 0 : index
    %c0_53 = arith.constant 0 : index
    %53 = tpu.strided_load %arg9[%c0_52, %c0_53] {strides = array<i32: 2, 1>} : memref<128x128xf32, #tpu.memory_space<vmem>>, vector<64x128xf32>
    %c1_54 = arith.constant 1 : index
    %c0_55 = arith.constant 0 : index
    %54 = tpu.strided_load %arg9[%c1_54, %c0_55] {strides = array<i32: 2, 1>} : memref<128x128xf32, #tpu.memory_space<vmem>>, vector<64x128xf32>
    %55 = arith.maximumf %53, %54 : vector<64x128xf32>
    %c1_56 = arith.constant 1 : index
    %c0_57 = arith.constant 0 : index
    %56 = vector.load %arg9[%c1_56, %c0_57] : memref<128x128xf32, #tpu.memory_space<vmem>>, vector<64x128xf32>
    tpu.vector_store %arg9[%c1_56, %c0_57], %55 {strides = array<i32>} : memref<128x128xf32, #tpu.memory_space<vmem>>, vector<64x128xf32>,
    %cst_58 = arith.constant 0.000000e+00 : f32
    %57 = vector.broadcast %cst_58 : f32 to vector<1x128xf32>
    %c0_59 = arith.constant 0 : index
    %c0_60 = arith.constant 0 : index
    %58 = vector.load %arg9[%c0_59, %c0_60] : memref<128x128xf32, #tpu.memory_space<vmem>>, vector<1x128xf32>
    tpu.vector_store %arg9[%c0_59, %c0_60], %57 {strides = array<i32>} : memref<128x128xf32, #tpu.memory_space<vmem>>, vector<1x128xf32>,
    %c0_61 = arith.constant 0 : index
    %c0_62 = arith.constant 0 : index
    %59 = tpu.strided_load %arg9[%c0_61, %c0_62] {strides = array<i32: 2, 1>} : memref<128x128xf32, #tpu.memory_space<vmem>>, vector<32x128xf32>
    %c1_63 = arith.constant 1 : index
    %c0_64 = arith.constant 0 : index
    %60 = tpu.strided_load %arg9[%c1_63, %c0_64] {strides = array<i32: 2, 1>} : memref<128x128xf32, #tpu.memory_space<vmem>>, vector<32x128xf32>
    %c2_65 = arith.constant 2 : index
    %c0_66 = arith.constant 0 : index
    %61 = tpu.strided_load %arg9[%c2_65, %c0_66] {strides = array<i32: 2, 1>} : memref<128x128xf32, #tpu.memory_space<vmem>>, vector<32x128xf32>
    %c0_67 = arith.constant 0 : index
    %c0_68 = arith.constant 0 : index
    %c0_69 = arith.constant 0 : index
    %c0_70 = arith.constant 0 : index
    %62 = vector.load %arg4[%c0_67, %c0_68, %c0_69, %c0_70] : memref<4x3x128x256xf32, #tpu.memory_space<vmem>>, vector<1x1x128x256xf32>
    %63 = vector.shape_cast %62 : vector<1x1x128x256xf32> to vector<128x256xf32>
    %cst_71 = arith.constant dense<0.000000e+00> : vector<32x256xf32>
    %64 = tpu.matmul %59, %63, %cst_71 {dimension_numbers = #tpu.dot_dimension_numbers<[1], [0], [0], [1], [0, 0, 1, 1], [], []>} : vector<32x128xf32>, vector<128x256xf32>, vector<32x256xf32> -> vector<32x256xf32>
    %c0_72 = arith.constant 0 : index
    %c1_73 = arith.constant 1 : index
    %c0_74 = arith.constant 0 : index
    %c0_75 = arith.constant 0 : index
    %65 = vector.load %arg4[%c0_72, %c1_73, %c0_74, %c0_75] : memref<4x3x128x256xf32, #tpu.memory_space<vmem>>, vector<1x1x128x256xf32>
    %66 = vector.shape_cast %65 : vector<1x1x128x256xf32> to vector<128x256xf32>
    %cst_76 = arith.constant dense<0.000000e+00> : vector<32x256xf32>
    %67 = tpu.matmul %60, %66, %cst_76 {dimension_numbers = #tpu.dot_dimension_numbers<[1], [0], [0], [1], [0, 0, 1, 1], [], []>} : vector<32x128xf32>, vector<128x256xf32>, vector<32x256xf32> -> vector<32x256xf32>
    %68 = arith.addf %64, %67 : vector<32x256xf32>
    %c0_77 = arith.constant 0 : index
    %c2_78 = arith.constant 2 : index
    %c0_79 = arith.constant 0 : index
    %c0_80 = arith.constant 0 : index
    %69 = vector.load %arg4[%c0_77, %c2_78, %c0_79, %c0_80] : memref<4x3x128x256xf32, #tpu.memory_space<vmem>>, vector<1x1x128x256xf32>
    %70 = vector.shape_cast %69 : vector<1x1x128x256xf32> to vector<128x256xf32>
    %cst_81 = arith.constant dense<0.000000e+00> : vector<32x256xf32>
    %71 = tpu.matmul %61, %70, %cst_81 {dimension_numbers = #tpu.dot_dimension_numbers<[1], [0], [0], [1], [0, 0, 1, 1], [], []>} : vector<32x128xf32>, vector<128x256xf32>, vector<32x256xf32> -> vector<32x256xf32>
    %72 = arith.addf %68, %71 : vector<32x256xf32>
    %c0_82 = arith.constant 0 : index
    %c0_83 = arith.constant 0 : index
    %c0_84 = arith.constant 0 : index
    %73 = vector.load %arg5[%c0_82, %c0_83, %c0_84] : memref<4x1x256xf32, #tpu.memory_space<vmem>>, vector<1x1x256xf32>
    %74 = vector.shape_cast %73 : vector<1x1x256xf32> to vector<1x256xf32>
    %75 = vector.broadcast %74 : vector<1x256xf32> to vector<32x256xf32>
    %76 = arith.addf %72, %75 : vector<32x256xf32>
    %77 = vector.extract_strided_slice %76 {offsets = [0, 0], sizes = [32, 128], strides = [1, 1]} : vector<32x256xf32> to vector<32x128xf32>
    %cst_85 = arith.constant 0.000000e+00 : f32
    %78 = vector.broadcast %cst_85 : f32 to vector<32x128xf32>
    %79 = arith.maximumf %77, %78 : vector<32x128xf32>
    %80 = vector.extract_strided_slice %76 {offsets = [0, 128], sizes = [32, 128], strides = [1, 1]} : vector<32x256xf32> to vector<32x128xf32>
    %81 = arith.addf %79, %80 : vector<32x128xf32>
    %cst_86 = arith.constant 0.000000e+00 : f32
    %82 = vector.broadcast %cst_86 : f32 to vector<32x128xf32>
    %83 = arith.maximumf %81, %82 : vector<32x128xf32>
    %c1_87 = arith.constant 1 : index
    %c0_88 = arith.constant 0 : index
    %84 = vector.load %arg9[%c1_87, %c0_88] : memref<128x128xf32, #tpu.memory_space<vmem>>, vector<32x128xf32>
    tpu.vector_store %arg9[%c1_87, %c0_88], %83 {strides = array<i32>} : memref<128x128xf32, #tpu.memory_space<vmem>>, vector<32x128xf32>,
    %c0_89 = arith.constant 0 : index
    %c0_90 = arith.constant 0 : index
    %85 = tpu.strided_load %arg9[%c0_89, %c0_90] {strides = array<i32: 2, 1>} : memref<128x128xf32, #tpu.memory_space<vmem>>, vector<16x128xf32>
    %c1_91 = arith.constant 1 : index
    %c0_92 = arith.constant 0 : index
    %86 = tpu.strided_load %arg9[%c1_91, %c0_92] {strides = array<i32: 2, 1>} : memref<128x128xf32, #tpu.memory_space<vmem>>, vector<16x128xf32>
    %c2_93 = arith.constant 2 : index
    %c0_94 = arith.constant 0 : index
    %87 = tpu.strided_load %arg9[%c2_93, %c0_94] {strides = array<i32: 2, 1>} : memref<128x128xf32, #tpu.memory_space<vmem>>, vector<16x128xf32>
    %c1_95 = arith.constant 1 : index
    %c0_96 = arith.constant 0 : index
    %c0_97 = arith.constant 0 : index
    %c0_98 = arith.constant 0 : index
    %88 = vector.load %arg4[%c1_95, %c0_96, %c0_97, %c0_98] : memref<4x3x128x256xf32, #tpu.memory_space<vmem>>, vector<1x1x128x256xf32>
    %89 = vector.shape_cast %88 : vector<1x1x128x256xf32> to vector<128x256xf32>
    %cst_99 = arith.constant dense<0.000000e+00> : vector<16x256xf32>
    %90 = tpu.matmul %85, %89, %cst_99 {dimension_numbers = #tpu.dot_dimension_numbers<[1], [0], [0], [1], [0, 0, 1, 1], [], []>} : vector<16x128xf32>, vector<128x256xf32>, vector<16x256xf32> -> vector<16x256xf32>
    %c1_100 = arith.constant 1 : index
    %c1_101 = arith.constant 1 : index
    %c0_102 = arith.constant 0 : index
    %c0_103 = arith.constant 0 : index
    %91 = vector.load %arg4[%c1_100, %c1_101, %c0_102, %c0_103] : memref<4x3x128x256xf32, #tpu.memory_space<vmem>>, vector<1x1x128x256xf32>
    %92 = vector.shape_cast %91 : vector<1x1x128x256xf32> to vector<128x256xf32>
    %cst_104 = arith.constant dense<0.000000e+00> : vector<16x256xf32>
    %93 = tpu.matmul %86, %92, %cst_104 {dimension_numbers = #tpu.dot_dimension_numbers<[1], [0], [0], [1], [0, 0, 1, 1], [], []>} : vector<16x128xf32>, vector<128x256xf32>, vector<16x256xf32> -> vector<16x256xf32>
    %94 = arith.addf %90, %93 : vector<16x256xf32>
    %c1_105 = arith.constant 1 : index
    %c2_106 = arith.constant 2 : index
    %c0_107 = arith.constant 0 : index
    %c0_108 = arith.constant 0 : index
    %95 = vector.load %arg4[%c1_105, %c2_106, %c0_107, %c0_108] : memref<4x3x128x256xf32, #tpu.memory_space<vmem>>, vector<1x1x128x256xf32>
    %96 = vector.shape_cast %95 : vector<1x1x128x256xf32> to vector<128x256xf32>
    %cst_109 = arith.constant dense<0.000000e+00> : vector<16x256xf32>
    %97 = tpu.matmul %87, %96, %cst_109 {dimension_numbers = #tpu.dot_dimension_numbers<[1], [0], [0], [1], [0, 0, 1, 1], [], []>} : vector<16x128xf32>, vector<128x256xf32>, vector<16x256xf32> -> vector<16x256xf32>
    %98 = arith.addf %94, %97 : vector<16x256xf32>
    %c1_110 = arith.constant 1 : index
    %c0_111 = arith.constant 0 : index
    %c0_112 = arith.constant 0 : index
    %99 = vector.load %arg5[%c1_110, %c0_111, %c0_112] : memref<4x1x256xf32, #tpu.memory_space<vmem>>, vector<1x1x256xf32>
    %100 = vector.shape_cast %99 : vector<1x1x256xf32> to vector<1x256xf32>
    %101 = vector.broadcast %100 : vector<1x256xf32> to vector<16x256xf32>
    %102 = arith.addf %98, %101 : vector<16x256xf32>
    %103 = vector.extract_strided_slice %102 {offsets = [0, 0], sizes = [16, 128], strides = [1, 1]} : vector<16x256xf32> to vector<16x128xf32>
    %cst_113 = arith.constant 0.000000e+00 : f32
    %104 = vector.broadcast %cst_113 : f32 to vector<16x128xf32>
    %105 = arith.maximumf %103, %104 : vector<16x128xf32>
    %106 = vector.extract_strided_slice %102 {offsets = [0, 128], sizes = [16, 128], strides = [1, 1]} : vector<16x256xf32> to vector<16x128xf32>
    %107 = arith.addf %105, %106 : vector<16x128xf32>
    %cst_114 = arith.constant 0.000000e+00 : f32
    %108 = vector.broadcast %cst_114 : f32 to vector<16x128xf32>
    %109 = arith.maximumf %107, %108 : vector<16x128xf32>
    %c1_115 = arith.constant 1 : index
    %c0_116 = arith.constant 0 : index
    %110 = vector.load %arg9[%c1_115, %c0_116] : memref<128x128xf32, #tpu.memory_space<vmem>>, vector<16x128xf32>
    tpu.vector_store %arg9[%c1_115, %c0_116], %109 {strides = array<i32>} : memref<128x128xf32, #tpu.memory_space<vmem>>, vector<16x128xf32>,
    %c0_117 = arith.constant 0 : index
    %c0_118 = arith.constant 0 : index
    %111 = tpu.strided_load %arg9[%c0_117, %c0_118] {strides = array<i32: 2, 1>} : memref<128x128xf32, #tpu.memory_space<vmem>>, vector<8x128xf32>
    %c1_119 = arith.constant 1 : index
    %c0_120 = arith.constant 0 : index
    %112 = tpu.strided_load %arg9[%c1_119, %c0_120] {strides = array<i32: 2, 1>} : memref<128x128xf32, #tpu.memory_space<vmem>>, vector<8x128xf32>
    %c2_121 = arith.constant 2 : index
    %c0_122 = arith.constant 0 : index
    %113 = tpu.strided_load %arg9[%c2_121, %c0_122] {strides = array<i32: 2, 1>} : memref<128x128xf32, #tpu.memory_space<vmem>>, vector<8x128xf32>
    %c2_123 = arith.constant 2 : index
    %c0_124 = arith.constant 0 : index
    %c0_125 = arith.constant 0 : index
    %c0_126 = arith.constant 0 : index
    %114 = vector.load %arg4[%c2_123, %c0_124, %c0_125, %c0_126] : memref<4x3x128x256xf32, #tpu.memory_space<vmem>>, vector<1x1x128x256xf32>
    %115 = vector.shape_cast %114 : vector<1x1x128x256xf32> to vector<128x256xf32>
    %cst_127 = arith.constant dense<0.000000e+00> : vector<8x256xf32>
    %116 = tpu.matmul %111, %115, %cst_127 {dimension_numbers = #tpu.dot_dimension_numbers<[1], [0], [0], [1], [0, 0, 1, 1], [], []>} : vector<8x128xf32>, vector<128x256xf32>, vector<8x256xf32> -> vector<8x256xf32>
    %c2_128 = arith.constant 2 : index
    %c1_129 = arith.constant 1 : index
    %c0_130 = arith.constant 0 : index
    %c0_131 = arith.constant 0 : index
    %117 = vector.load %arg4[%c2_128, %c1_129, %c0_130, %c0_131] : memref<4x3x128x256xf32, #tpu.memory_space<vmem>>, vector<1x1x128x256xf32>
    %118 = vector.shape_cast %117 : vector<1x1x128x256xf32> to vector<128x256xf32>
    %cst_132 = arith.constant dense<0.000000e+00> : vector<8x256xf32>
    %119 = tpu.matmul %112, %118, %cst_132 {dimension_numbers = #tpu.dot_dimension_numbers<[1], [0], [0], [1], [0, 0, 1, 1], [], []>} : vector<8x128xf32>, vector<128x256xf32>, vector<8x256xf32> -> vector<8x256xf32>
    %120 = arith.addf %116, %119 : vector<8x256xf32>
    %c2_133 = arith.constant 2 : index
    %c2_134 = arith.constant 2 : index
    %c0_135 = arith.constant 0 : index
    %c0_136 = arith.constant 0 : index
    %121 = vector.load %arg4[%c2_133, %c2_134, %c0_135, %c0_136] : memref<4x3x128x256xf32, #tpu.memory_space<vmem>>, vector<1x1x128x256xf32>
    %122 = vector.shape_cast %121 : vector<1x1x128x256xf32> to vector<128x256xf32>
    %cst_137 = arith.constant dense<0.000000e+00> : vector<8x256xf32>
    %123 = tpu.matmul %113, %122, %cst_137 {dimension_numbers = #tpu.dot_dimension_numbers<[1], [0], [0], [1], [0, 0, 1, 1], [], []>} : vector<8x128xf32>, vector<128x256xf32>, vector<8x256xf32> -> vector<8x256xf32>
    %124 = arith.addf %120, %123 : vector<8x256xf32>
    %c2_138 = arith.constant 2 : index
    %c0_139 = arith.constant 0 : index
    %c0_140 = arith.constant 0 : index
    %125 = vector.load %arg5[%c2_138, %c0_139, %c0_140] : memref<4x1x256xf32, #tpu.memory_space<vmem>>, vector<1x1x256xf32>
    %126 = vector.shape_cast %125 : vector<1x1x256xf32> to vector<1x256xf32>
    %127 = vector.broadcast %126 : vector<1x256xf32> to vector<8x256xf32>
    %128 = arith.addf %124, %127 : vector<8x256xf32>
    %129 = vector.extract_strided_slice %128 {offsets = [0, 0], sizes = [8, 128], strides = [1, 1]} : vector<8x256xf32> to vector<8x128xf32>
    %cst_141 = arith.constant 0.000000e+00 : f32
    %130 = vector.broadcast %cst_141 : f32 to vector<8x128xf32>
    %131 = arith.maximumf %129, %130 : vector<8x128xf32>
    %132 = vector.extract_strided_slice %128 {offsets = [0, 128], sizes = [8, 128], strides = [1, 1]} : vector<8x256xf32> to vector<8x128xf32>
    %133 = arith.addf %131, %132 : vector<8x128xf32>
    %cst_142 = arith.constant 0.000000e+00 : f32
    %134 = vector.broadcast %cst_142 : f32 to vector<8x128xf32>
    %135 = arith.maximumf %133, %134 : vector<8x128xf32>
    %c1_143 = arith.constant 1 : index
    %c0_144 = arith.constant 0 : index
    %136 = vector.load %arg9[%c1_143, %c0_144] : memref<128x128xf32, #tpu.memory_space<vmem>>, vector<8x128xf32>
    tpu.vector_store %arg9[%c1_143, %c0_144], %135 {strides = array<i32>} : memref<128x128xf32, #tpu.memory_space<vmem>>, vector<8x128xf32>,
    %c0_145 = arith.constant 0 : index
    %c0_146 = arith.constant 0 : index
    %137 = tpu.strided_load %arg9[%c0_145, %c0_146] {strides = array<i32: 2, 1>} : memref<128x128xf32, #tpu.memory_space<vmem>>, vector<4x128xf32>
    %c1_147 = arith.constant 1 : index
    %c0_148 = arith.constant 0 : index
    %138 = tpu.strided_load %arg9[%c1_147, %c0_148] {strides = array<i32: 2, 1>} : memref<128x128xf32, #tpu.memory_space<vmem>>, vector<4x128xf32>
    %c2_149 = arith.constant 2 : index
    %c0_150 = arith.constant 0 : index
    %139 = tpu.strided_load %arg9[%c2_149, %c0_150] {strides = array<i32: 2, 1>} : memref<128x128xf32, #tpu.memory_space<vmem>>, vector<4x128xf32>
    %c3_151 = arith.constant 3 : index
    %c0_152 = arith.constant 0 : index
    %c0_153 = arith.constant 0 : index
    %c0_154 = arith.constant 0 : index
    %140 = vector.load %arg4[%c3_151, %c0_152, %c0_153, %c0_154] : memref<4x3x128x256xf32, #tpu.memory_space<vmem>>, vector<1x1x128x256xf32>
    %141 = vector.shape_cast %140 : vector<1x1x128x256xf32> to vector<128x256xf32>
    %cst_155 = arith.constant dense<0.000000e+00> : vector<4x256xf32>
    %142 = tpu.matmul %137, %141, %cst_155 {dimension_numbers = #tpu.dot_dimension_numbers<[1], [0], [0], [1], [0, 0, 1, 1], [], []>} : vector<4x128xf32>, vector<128x256xf32>, vector<4x256xf32> -> vector<4x256xf32>
    %c3_156 = arith.constant 3 : index
    %c1_157 = arith.constant 1 : index
    %c0_158 = arith.constant 0 : index
    %c0_159 = arith.constant 0 : index
    %143 = vector.load %arg4[%c3_156, %c1_157, %c0_158, %c0_159] : memref<4x3x128x256xf32, #tpu.memory_space<vmem>>, vector<1x1x128x256xf32>
    %144 = vector.shape_cast %143 : vector<1x1x128x256xf32> to vector<128x256xf32>
    %cst_160 = arith.constant dense<0.000000e+00> : vector<4x256xf32>
    %145 = tpu.matmul %138, %144, %cst_160 {dimension_numbers = #tpu.dot_dimension_numbers<[1], [0], [0], [1], [0, 0, 1, 1], [], []>} : vector<4x128xf32>, vector<128x256xf32>, vector<4x256xf32> -> vector<4x256xf32>
    %146 = arith.addf %142, %145 : vector<4x256xf32>
    %c3_161 = arith.constant 3 : index
    %c2_162 = arith.constant 2 : index
    %c0_163 = arith.constant 0 : index
    %c0_164 = arith.constant 0 : index
    %147 = vector.load %arg4[%c3_161, %c2_162, %c0_163, %c0_164] : memref<4x3x128x256xf32, #tpu.memory_space<vmem>>, vector<1x1x128x256xf32>
    %148 = vector.shape_cast %147 : vector<1x1x128x256xf32> to vector<128x256xf32>
    %cst_165 = arith.constant dense<0.000000e+00> : vector<4x256xf32>
    %149 = tpu.matmul %139, %148, %cst_165 {dimension_numbers = #tpu.dot_dimension_numbers<[1], [0], [0], [1], [0, 0, 1, 1], [], []>} : vector<4x128xf32>, vector<128x256xf32>, vector<4x256xf32> -> vector<4x256xf32>
    %150 = arith.addf %146, %149 : vector<4x256xf32>
    %c3_166 = arith.constant 3 : index
    %c0_167 = arith.constant 0 : index
    %c0_168 = arith.constant 0 : index
    %151 = vector.load %arg5[%c3_166, %c0_167, %c0_168] : memref<4x1x256xf32, #tpu.memory_space<vmem>>, vector<1x1x256xf32>
    %152 = vector.shape_cast %151 : vector<1x1x256xf32> to vector<1x256xf32>
    %153 = vector.broadcast %152 : vector<1x256xf32> to vector<4x256xf32>
    %154 = arith.addf %150, %153 : vector<4x256xf32>
    %155 = vector.extract_strided_slice %154 {offsets = [0, 0], sizes = [4, 128], strides = [1, 1]} : vector<4x256xf32> to vector<4x128xf32>
    %cst_169 = arith.constant 0.000000e+00 : f32
    %156 = vector.broadcast %cst_169 : f32 to vector<4x128xf32>
    %157 = arith.maximumf %155, %156 : vector<4x128xf32>
    %158 = vector.extract_strided_slice %154 {offsets = [0, 128], sizes = [4, 128], strides = [1, 1]} : vector<4x256xf32> to vector<4x128xf32>
    %159 = arith.addf %157, %158 : vector<4x128xf32>
    %cst_170 = arith.constant 0.000000e+00 : f32
    %160 = vector.broadcast %cst_170 : f32 to vector<4x128xf32>
    %161 = arith.maximumf %159, %160 : vector<4x128xf32>
    %cst_171 = arith.constant dense<0.000000e+00> : vector<128xf32>
    %162 = vector.multi_reduction <add>, %161, %cst_171 [0] : vector<4x128xf32> to vector<128xf32>
    %163 = vector.shape_cast %162 : vector<128xf32> to vector<1x128xf32>
    %cst_172 = arith.constant 4.000000e+00 : f32
    %164 = vector.broadcast %cst_172 : f32 to vector<1x128xf32>
    %165 = arith.divf %163, %164 : vector<1x128xf32>
    %c0_173 = arith.constant 0 : index
    %c0_174 = arith.constant 0 : index
    %166 = vector.load %arg6[%c0_173, %c0_174] : memref<128x8xf32, #tpu.memory_space<vmem>>, vector<128x8xf32>
    %cst_175 = arith.constant dense<0.000000e+00> : vector<1x8xf32>
    %167 = tpu.matmul %165, %166, %cst_175 {dimension_numbers = #tpu.dot_dimension_numbers<[1], [0], [0], [1], [0, 0, 1, 1], [], []>} : vector<1x128xf32>, vector<128x8xf32>, vector<1x8xf32> -> vector<1x8xf32>
    %c0_176 = arith.constant 0 : index
    %c0_177 = arith.constant 0 : index
    %168 = vector.load %arg7[%c0_176, %c0_177] : memref<1x8xf32, #tpu.memory_space<vmem>>, vector<1x8xf32>
    %169 = arith.addf %167, %168 : vector<1x8xf32>
    %c0_178 = arith.constant 0 : index
    %c0_179 = arith.constant 0 : index
    %c0_180 = arith.constant 0 : index
    %170 = vector.load %arg8[%c0_178, %c0_179, %c0_180] : memref<1x1x8xf32, #tpu.memory_space<vmem>>, vector<1x1x8xf32>
    %171 = vector.shape_cast %170 : vector<1x1x8xf32> to vector<1x8xf32>
    %172 = vector.shape_cast %169 : vector<1x8xf32> to vector<1x1x8xf32>
    tpu.vector_store %arg8[%c0_178, %c0_179, %c0_180], %172 {strides = array<i32>} : memref<1x1x8xf32, #tpu.memory_space<vmem>>, vector<1x1x8xf32>,
    return
  }
  func.func @transform_0(%arg0: i32) -> (i32, i32, i32) {
    %c0_i32 = arith.constant 0 : i32
    %c0_i32_0 = arith.constant 0 : i32
    %c0_i32_1 = arith.constant 0 : i32
    return %arg0, %c0_i32, %c0_i32_0 : i32, i32, i32
  }
  func.func @transform_1(%arg0: i32) -> (i32, i32, i32) {
    %c0_i32 = arith.constant 0 : i32
    %c0_i32_0 = arith.constant 0 : i32
    %c0_i32_1 = arith.constant 0 : i32
    %c0_i32_2 = arith.constant 0 : i32
    return %c0_i32, %c0_i32_0, %c0_i32_1 : i32, i32, i32
  }
  func.func @transform_2(%arg0: i32) -> (i32, i32) {
    %c0_i32 = arith.constant 0 : i32
    %c0_i32_0 = arith.constant 0 : i32
    %c0_i32_1 = arith.constant 0 : i32
    return %c0_i32, %c0_i32_0 : i32, i32
  }
  func.func @transform_3(%arg0: i32) -> (i32, i32, i32, i32) {
    %c0_i32 = arith.constant 0 : i32
    %c0_i32_0 = arith.constant 0 : i32
    %c0_i32_1 = arith.constant 0 : i32
    %c0_i32_2 = arith.constant 0 : i32
    %c0_i32_3 = arith.constant 0 : i32
    return %c0_i32, %c0_i32_0, %c0_i32_1, %c0_i32_2 : i32, i32, i32, i32
  }
  func.func @transform_4(%arg0: i32) -> (i32, i32, i32) {
    %c0_i32 = arith.constant 0 : i32
    %c0_i32_0 = arith.constant 0 : i32
    %c0_i32_1 = arith.constant 0 : i32
    %c0_i32_2 = arith.constant 0 : i32
    return %c0_i32, %c0_i32_0, %c0_i32_1 : i32, i32, i32
  }
  func.func @transform_5(%arg0: i32) -> (i32, i32) {
    %c0_i32 = arith.constant 0 : i32
    %c0_i32_0 = arith.constant 0 : i32
    %c0_i32_1 = arith.constant 0 : i32
    return %c0_i32, %c0_i32_0 : i32, i32
  }
  func.func @transform_6(%arg0: i32) -> (i32, i32) {
    %c0_i32 = arith.constant 0 : i32
    %c0_i32_0 = arith.constant 0 : i32
    %c0_i32_1 = arith.constant 0 : i32
    return %c0_i32, %c0_i32_0 : i32, i32
  }
  func.func @transform_7(%arg0: i32) -> (i32, i32, i32) {
    %c0_i32 = arith.constant 0 : i32
    %c0_i32_0 = arith.constant 0 : i32
    %c0_i32_1 = arith.constant 0 : i32
    return %arg0, %c0_i32, %c0_i32_0 : i32, i32, i32
  }
}

</mosaic_0001>

<llo_original>
// kernel: modulation_classifier_forward.1
$region0: #{modulation_classifier_forward.1}
  #allocation0 [shape = 'u32[]', space=smem, size = 0x4, offset = 0x4, fixed_abs, tag = 'smem constant byte address 0x4 - core index']
  #allocation1 [shape = 'u32[72,128]{1,0:T(1,128)}', space=vmem, size = 0x9000, scoped, tag = 'internal scratch']
  #allocation2 [shape = 'f32[128,128]{1,0:T(8,128)}', space=vmem, size = 0x10000, scoped, tag = 'scratch operand']
  %s0 = inlined_call_operand.vmem [shape: f32[2,135,2], index: 0, kind: input, shape index: {}]
  %s1 = inlined_call_operand.vmem [shape: f32[8,2,128], index: 1, kind: input, shape index: {}]
  %s2 = inlined_call_operand.vmem [shape: f32[1,128], index: 2, kind: input, shape index: {}]
  %s3 = inlined_call_operand.vmem [shape: f32[4,3,128,256], index: 3, kind: input, shape index: {}]
  %s4 = inlined_call_operand.vmem [shape: f32[4,1,256], index: 4, kind: input, shape index: {}]
  %s5 = inlined_call_operand.vmem [shape: f32[128,8], index: 5, kind: input, shape index: {}]
  %s6 = inlined_call_operand.vmem [shape: f32[1,8], index: 6, kind: input, shape index: {}]
  %s7 = inlined_call_operand.hbm [shape: f32[2,1,8], index: 7, kind: output, shape index: {}]
  %s8 = sld [smem:[#allocation0]]
  $region61: #{modulation_classifier_forward.1} parent=0
    _
  %s10 = ssub.s32 1, %s8
  %s11 = scalar_select 0, %s10, %s8
  $region1: #{modulation_classifier_forward.1} parent=0
    #allocation3 [shape = 'u8[1024]{0}', space=vmem, size = 0x400, scoped, tag = 'output window, operand 0']
    #allocation4 [shape = 's32[2]{0}', space=sflag, size = 0x8, scoped, tag = 'scoped memory for modulation_classifier_forward.1']
    %12 = vsyncpa [#allocation4], 0
    %s13 = scalar_lea.sflag [#allocation4], 1
    %14 = vsyncpa %s13, 0
    loop: start=0, step=1, limit=4
    $region2: #{modulation_classifier_forward.1} parent=1 // loop_pre_header
      _
    $region3: #{modulation_classifier_forward.1} parent=1 // loop_header
      %s16 = sphi 0, %s20
      %p17 = scmp.ge.s32.totalorder %s16, 4
      %s26 = sphi 0, %s28
      %s29 = sphi 0, %s26
      %s30 = sphi 0, %s29
      %s46 = sphi 0, %s30
      %s50 = sphi 0, %s50
      %s52 = sphi 0, %s50
      %s53 = sphi 0, %s52
      %s67 = sphi 0, %s53
      %s71 = sphi 0, %s71
      %s73 = sphi 0, %s71
      %s74 = sphi 0, %s73
      %s88 = sphi 0, %s74
      %s92 = sphi 0, %s92
      %s94 = sphi 0, %s92
      %s95 = sphi 0, %s94
      %s109 = sphi 0, %s95
      %s113 = sphi 0, %s113
      %s115 = sphi 0, %s113
      %s116 = sphi 0, %s115
      %s130 = sphi 0, %s116
      %s134 = sphi 0, %s134
      %s136 = sphi 0, %s134
      %s137 = sphi 0, %s136
      %s151 = sphi 0, %s137
      %s155 = sphi 0, %s155
      %s157 = sphi 0, %s155
      %s158 = sphi 0, %s157
      %s172 = sphi 0, %s158
      %s178 = sphi 0, %s180
      %s181 = sphi 0, %s178
      %s182 = sphi 0, %s181
      %s198 = sphi 0, %s182
    $region4: #{modulation_classifier_forward.1} parent=1 // loop_header_branch
      %19 = sbr.rel (%p17) target = $region8
    $region5: #{modulation_classifier_forward.1} parent=1 // loop_body
      %s21 = ssub.s32 %s16, 1
      %s22 = ssub.s32 %s16, 2
      %s23 = sadd.s32 %s16, 1
      %s24 = ssub.s32 %s16, %s23
      %p25 = scmp.eq.s32.totalorder %s24, 0
      %s27 = sadd.s32 %s26, 1
      %s28 = scalar_select %p25, %s26, %s27
      %p31 = pneg %p25
      %p32 = scmp.eq.s32.totalorder %s16, 1
      %p33 = por %p31, %p32
      %p34 = scmp.ne.s32.totalorder %s26, %s29
      %p35 = scmp.eq.s32.totalorder %s16, 0
      %p36 = por %p34, %p35
      %p37 = scmp.ne.s32.totalorder %s26, %s29
      %p38 = scmp.eq.s32.totalorder %s21, 1
      %p39 = por %p37, %p38
      %p40 = scmp.ne.s32.totalorder %s29, %s30
      %p41 = scmp.eq.s32.totalorder %s21, 0
      %p42 = por %p40, %p41
      %p43 = scmp.ne.s32.totalorder %s29, %s30
      %p44 = scmp.eq.s32.totalorder %s22, 1
      %p45 = por %p43, %p44
      %p47 = scmp.ne.s32.totalorder %s30, %s46
      %p48 = scmp.eq.s32.totalorder %s22, 0
      %p49 = por %p47, %p48
      %s51 = sadd.s32 %s50, 1
      %p54 = scmp.eq.s32.totalorder %s16, 1
      %p55 = scmp.ne.s32.totalorder %s50, %s52
      %p56 = scmp.eq.s32.totalorder %s16, 0
      %p57 = por %p55, %p56
      %p58 = scmp.ne.s32.totalorder %s50, %s52
      %p59 = scmp.eq.s32.totalorder %s21, 1
      %p60 = por %p58, %p59
      %p61 = scmp.ne.s32.totalorder %s52, %s53
      %p62 = scmp.eq.s32.totalorder %s21, 0
      %p63 = por %p61, %p62
      %p64 = scmp.ne.s32.totalorder %s52, %s53
      %p65 = scmp.eq.s32.totalorder %s22, 1
      %p66 = por %p64, %p65
      %p68 = scmp.ne.s32.totalorder %s53, %s67
      %p69 = scmp.eq.s32.totalorder %s22, 0
      %p70 = por %p68, %p69
      %s72 = sadd.s32 %s71, 1
      %p75 = scmp.eq.s32.totalorder %s16, 1
      %p76 = scmp.ne.s32.totalorder %s71, %s73
      %p77 = scmp.eq.s32.totalorder %s16, 0
      %p78 = por %p76, %p77
      %p79 = scmp.ne.s32.totalorder %s71, %s73
      %p80 = scmp.eq.s32.totalorder %s21, 1
      %p81 = por %p79, %p80
      %p82 = scmp.ne.s32.totalorder %s73, %s74
      %p83 = scmp.eq.s32.totalorder %s21, 0
      %p84 = por %p82, %p83
      %p85 = scmp.ne.s32.totalorder %s73, %s74
      %p86 = scmp.eq.s32.totalorder %s22, 1
      %p87 = por %p85, %p86
      %p89 = scmp.ne.s32.totalorder %s74, %s88
      %p90 = scmp.eq.s32.totalorder %s22, 0
      %p91 = por %p89, %p90
      %s93 = sadd.s32 %s92, 1
      %p96 = scmp.eq.s32.totalorder %s16, 1
      %p97 = scmp.ne.s32.totalorder %s92, %s94
      %p98 = scmp.eq.s32.totalorder %s16, 0
      %p99 = por %p97, %p98
      %p100 = scmp.ne.s32.totalorder %s92, %s94
      %p101 = scmp.eq.s32.totalorder %s21, 1
      %p102 = por %p100, %p101
      %p103 = scmp.ne.s32.totalorder %s94, %s95
      %p104 = scmp.eq.s32.totalorder %s21, 0
      %p105 = por %p103, %p104
      %p106 = scmp.ne.s32.totalorder %s94, %s95
      %p107 = scmp.eq.s32.totalorder %s22, 1
      %p108 = por %p106, %p107
      %p110 = scmp.ne.s32.totalorder %s95, %s109
      %p111 = scmp.eq.s32.totalorder %s22, 0
      %p112 = por %p110, %p111
      %s114 = sadd.s32 %s113, 1
      %p117 = scmp.eq.s32.totalorder %s16, 1
      %p118 = scmp.ne.s32.totalorder %s113, %s115
      %p119 = scmp.eq.s32.totalorder %s16, 0
      %p120 = por %p118, %p119
      %p121 = scmp.ne.s32.totalorder %s113, %s115
      %p122 = scmp.eq.s32.totalorder %s21, 1
      %p123 = por %p121, %p122
      %p124 = scmp.ne.s32.totalorder %s115, %s116
      %p125 = scmp.eq.s32.totalorder %s21, 0
      %p126 = por %p124, %p125
      %p127 = scmp.ne.s32.totalorder %s115, %s116
      %p128 = scmp.eq.s32.totalorder %s22, 1
      %p129 = por %p127, %p128
      %p131 = scmp.ne.s32.totalorder %s116, %s130
      %p132 = scmp.eq.s32.totalorder %s22, 0
      %p133 = por %p131, %p132
      %s135 = sadd.s32 %s134, 1
      %p138 = scmp.eq.s32.totalorder %s16, 1
      %p139 = scmp.ne.s32.totalorder %s134, %s136
      %p140 = scmp.eq.s32.totalorder %s16, 0
      %p141 = por %p139, %p140
      %p142 = scmp.ne.s32.totalorder %s134, %s136
      %p143 = scmp.eq.s32.totalorder %s21, 1
      %p144 = por %p142, %p143
      %p145 = scmp.ne.s32.totalorder %s136, %s137
      %p146 = scmp.eq.s32.totalorder %s21, 0
      %p147 = por %p145, %p146
      %p148 = scmp.ne.s32.totalorder %s136, %s137
      %p149 = scmp.eq.s32.totalorder %s22, 1
      %p150 = por %p148, %p149
      %p152 = scmp.ne.s32.totalorder %s137, %s151
      %p153 = scmp.eq.s32.totalorder %s22, 0
      %p154 = por %p152, %p153
      %s156 = sadd.s32 %s155, 1
      %p159 = scmp.eq.s32.totalorder %s16, 1
      %p160 = scmp.ne.s32.totalorder %s155, %s157
      %p161 = scmp.eq.s32.totalorder %s16, 0
      %p162 = por %p160, %p161
      %p163 = scmp.ne.s32.totalorder %s155, %s157
      %p164 = scmp.eq.s32.totalorder %s21, 1
      %p165 = por %p163, %p164
      %p166 = scmp.ne.s32.totalorder %s157, %s158
      %p167 = scmp.eq.s32.totalorder %s21, 0
      %p168 = por %p166, %p167
      %p169 = scmp.ne.s32.totalorder %s157, %s158
      %p170 = scmp.eq.s32.totalorder %s22, 1
      %p171 = por %p169, %p170
      %p173 = scmp.ne.s32.totalorder %s158, %s172
      %p174 = scmp.eq.s32.totalorder %s22, 0
      %p175 = por %p173, %p174
      %s176 = ssub.s32 %s16, %s23
      %p177 = scmp.eq.s32.totalorder %s176, 0
      %s179 = sadd.s32 %s178, 1
      %s180 = scalar_select %p177, %s178, %s179
      %p183 = pneg %p177
      %p184 = scmp.eq.s32.totalorder %s16, 1
      %p185 = por %p183, %p184
      %p186 = scmp.ne.s32.totalorder %s178, %s181
      %p187 = scmp.eq.s32.totalorder %s16, 0
      %p188 = por %p186, %p187
      %p189 = scmp.ne.s32.totalorder %s178, %s181
      %p190 = scmp.eq.s32.totalorder %s21, 1
      %p191 = por %p189, %p190
      %p192 = scmp.ne.s32.totalorder %s181, %s182
      %p193 = scmp.eq.s32.totalorder %s21, 0
      %p194 = por %p192, %p193
      %p195 = scmp.ne.s32.totalorder %s181, %s182
      %p196 = scmp.eq.s32.totalorder %s22, 1
      %p197 = por %p195, %p196
      %p199 = scmp.ne.s32.totalorder %s182, %s198
      %p200 = scmp.eq.s32.totalorder %s22, 0
      %p201 = por %p199, %p200
      %p202 = scmp.le.s32.totalorder 1, %s16
      %p203 = scmp.lt.s32.totalorder %s16, 3
      %p204 = pnand %p202, %p203
      %p205 = pneg %p204
      // Predicated region
      $region9: #{modulation_classifier_forward.1} parent=5 // pred_check
        _
      $region10: #{modulation_classifier_forward.1} parent=5 // pred_check_branch
        %207 = sbr.rel (%p204) target = $region12
      $region11: #{modulation_classifier_forward.1} parent=5 // pred_region
        %s208 = ssub.s32 %s16, 1
        // Predicated region
        $region13: #{modulation_classifier_forward.1} parent=11 // pred_check
          %p209 = pneg %p63
        $region14: #{modulation_classifier_forward.1} parent=11 // pred_check_branch
          %211 = sbr.rel (%p209) target = $region16
        $region15: #{modulation_classifier_forward.1} parent=11 // pred_region
          _
        $region16: #{modulation_classifier_forward.1} parent=11 // pred_fallthru
          _
        // Predicated region
        $region17: #{modulation_classifier_forward.1} parent=11 // pred_check
          %p212 = pneg %p84
        $region18: #{modulation_classifier_forward.1} parent=11 // pred_check_branch
          %214 = sbr.rel (%p212) target = $region20
        $region19: #{modulation_classifier_forward.1} parent=11 // pred_region
          _
        $region20: #{modulation_classifier_forward.1} parent=11 // pred_fallthru
          _
        // Predicated region
        $region21: #{modulation_classifier_forward.1} parent=11 // pred_check
          %p215 = pneg %p105
        $region22: #{modulation_classifier_forward.1} parent=11 // pred_check_branch
          %217 = sbr.rel (%p215) target = $region24
        $region23: #{modulation_classifier_forward.1} parent=11 // pred_region
          _
        $region24: #{modulation_classifier_forward.1} parent=11 // pred_fallthru
          _
        // Predicated region
        $region25: #{modulation_classifier_forward.1} parent=11 // pred_check
          %p218 = pneg %p126
        $region26: #{modulation_classifier_forward.1} parent=11 // pred_check_branch
          %220 = sbr.rel (%p218) target = $region28
        $region27: #{modulation_classifier_forward.1} parent=11 // pred_region
          _
        $region28: #{modulation_classifier_forward.1} parent=11 // pred_fallthru
          _
        // Predicated region
        $region29: #{modulation_classifier_forward.1} parent=11 // pred_check
          %p221 = pneg %p147
        $region30: #{modulation_classifier_forward.1} parent=11 // pred_check_branch
          %223 = sbr.rel (%p221) target = $region32
        $region31: #{modulation_classifier_forward.1} parent=11 // pred_region
          _
        $region32: #{modulation_classifier_forward.1} parent=11 // pred_fallthru
          _
        // Predicated region
        $region33: #{modulation_classifier_forward.1} parent=11 // pred_check
          %p224 = pneg %p168
        $region34: #{modulation_classifier_forward.1} parent=11 // pred_check_branch
          %226 = sbr.rel (%p224) target = $region36
        $region35: #{modulation_classifier_forward.1} parent=11 // pred_region
          _
        $region36: #{modulation_classifier_forward.1} parent=11 // pred_fallthru
          _
      $region12: #{modulation_classifier_forward.1} parent=5 // pred_fallthru
        _
      %p227 = scmp.lt.s32.totalorder %s16, 2
      // Predicated region
      $region37: #{modulation_classifier_forward.1} parent=5 // pred_check
        %p228 = pneg %p227
      $region38: #{modulation_classifier_forward.1} parent=5 // pred_check_branch
        %230 = sbr.rel (%p228) target = $region40
      $region39: #{modulation_classifier_forward.1} parent=5 // pred_region
        // Predicated region
        $region41: #{modulation_classifier_forward.1} parent=39 // pred_check
          %p231 = pneg %p36
        $region42: #{modulation_classifier_forward.1} parent=39 // pred_check_branch
          %233 = sbr.rel (%p231) target = $region44
        $region43: #{modulation_classifier_forward.1} parent=39 // pred_region
          %p234 = scmp.lt.s32.totalorder %s16, 1
          %s235 = scalar_select %p234, %s16, 1
          %s236 = smul.addr %s235, 17
          %s237 = smul.addr %s236, 8
          %s238 = scalar_lea.vmem %s0, %s237
        $region44: #{modulation_classifier_forward.1} parent=39 // pred_fallthru
          _
      $region40: #{modulation_classifier_forward.1} parent=5 // pred_fallthru
        _
      %p239 = scmp.le.s32.totalorder 1, %s16
      %p240 = scmp.lt.s32.totalorder %s16, 3
      %p241 = pnand %p239, %p240
      %p242 = pneg %p241
      // Predicated region
      $region45: #{modulation_classifier_forward.1} parent=5 // pred_check
        _
      $region46: #{modulation_classifier_forward.1} parent=5 // pred_check_branch
        %244 = sbr.rel (%p241) target = $region48
      $region47: #{modulation_classifier_forward.1} parent=5 // pred_region
        %s245 = ssub.s32 %s16, 1
        %p246 = scmp.lt.s32.totalorder %s21, 1
        %s247 = scalar_select %p246, %s21, 1
        %s248 = smul.addr %s247, 17
        %s249 = smul.addr %s248, 8
        %s250 = scalar_lea.vmem %s0, %s249
        %p251 = pneg %p42
        %p252 = pneg %p39
        %p253 = pneg %p63
        %p254 = pneg %p60
        %p255 = pneg %p84
        %p256 = pneg %p81
        %p257 = pneg %p105
        %p258 = pneg %p102
        %p259 = pneg %p126
        %p260 = pneg %p123
        %p261 = pneg %p147
        %p262 = pneg %p144
        %p263 = pneg %p168
        %p264 = pneg %p165
        %p265 = pneg %p194
        %p266 = pneg %p191
        %s267 = sand.u32 %s181, 1
        %s268 = scalar_lea.sflag [#allocation4], %s267
        %s269 = sand.u32 %s181, 1
        %s270 = scalar_lea.vmem [#allocation3], %s269
        %p271 = scmp.lt.s32.totalorder %s21, 1
        %s272 = scalar_select %p271, %s21, 1
        %s273 = smul.addr %s272, 17
        %s274 = smul.addr %s273, 8
        %s275 = scalar_lea.vmem %s0, %s274
        %v276 = vld [vmem:[%s275] sm:$0xff]
        %v277 = vld [vmem:[%s275 + $0x8] sm:$0xff]
        %v278 = vld [vmem:[%s275 + $0x10] sm:$0xff]
        %v279 = vld [vmem:[%s275 + $0x18] sm:$0xff]
        %v280 = vld [vmem:[%s275 + $0x20] sm:$0xff]
        %v281 = vld [vmem:[%s275 + $0x28] sm:$0xff]
        %v282 = vld [vmem:[%s275 + $0x30] sm:$0xff]
        %v283 = vld [vmem:[%s275 + $0x38] sm:$0xff]
        %v284 = vld [vmem:[%s275 + $0x40] sm:$0xff]
        %v285 = vld [vmem:[%s275 + $0x48] sm:$0xff]
        %v286 = vld [vmem:[%s275 + $0x50] sm:$0xff]
        %v287 = vld [vmem:[%s275 + $0x58] sm:$0xff]
        %v288 = vld [vmem:[%s275 + $0x60] sm:$0xff]
        %v289 = vld [vmem:[%s275 + $0x68] sm:$0xff]
        %v290 = vld [vmem:[%s275 + $0x70] sm:$0xff]
        %v291 = vld [vmem:[%s275 + $0x78] sm:$0xff]
        %v292 = vld [vmem:[%s1] sm:$0x3]
        %v293 = vld [vmem:[%s275 + $0x1] sm:$0xff]
        %v294 = vld [vmem:[%s275 + $0x9] sm:$0xff]
        %v295 = vld [vmem:[%s275 + $0x11] sm:$0xff]
        %v296 = vld [vmem:[%s275 + $0x19] sm:$0xff]
        %v297 = vld [vmem:[%s275 + $0x21] sm:$0xff]
        %v298 = vld [vmem:[%s275 + $0x29] sm:$0xff]
        %v299 = vld [vmem:[%s275 + $0x31] sm:$0xff]
        %v300 = vld [vmem:[%s275 + $0x39] sm:$0xff]
        %v301 = vld [vmem:[%s275 + $0x41] sm:$0xff]
        %v302 = vld [vmem:[%s275 + $0x49] sm:$0xff]
        %v303 = vld [vmem:[%s275 + $0x51] sm:$0xff]
        %v304 = vld [vmem:[%s275 + $0x59] sm:$0xff]
        %v305 = vld [vmem:[%s275 + $0x61] sm:$0xff]
        %v306 = vld [vmem:[%s275 + $0x69] sm:$0xff]
        %v307 = vld [vmem:[%s275 + $0x71] sm:$0xff]
        %v308 = vld [vmem:[%s275 + $0x79] sm:$0xff]
        %s309 = scalar_lea.vmem %s1, 2
        %v310 = vld [vmem:[%s309] sm:$0x3]
        %vm311 = vcmask 15360
        %v313 = vsel %vm311, %v293, 0
        %v316 = vsel %vm311, %v294, 0
        %v319 = vsel %vm311, %v295, 0
        %v322 = vsel %vm311, %v296, 0
        %v325 = vsel %vm311, %v297, 0
        %v328 = vsel %vm311, %v298, 0
        %v331 = vsel %vm311, %v299, 0
        %v334 = vsel %vm311, %v300, 0
        %v337 = vsel %vm311, %v301, 0
        %v340 = vsel %vm311, %v302, 0
        %v343 = vsel %vm311, %v303, 0
        %v346 = vsel %vm311, %v304, 0
        %v349 = vsel %vm311, %v305, 0
        %v352 = vsel %vm311, %v306, 0
        %v355 = vsel %vm311, %v307, 0
        %v358 = vsel %vm311, %v308, 0
        %vm360 = vcmask 1041408
        %v362 = vsel %vm360, %v310, 0
        %364 = vmatpush.msra.mxu0 0.0
        %365 = vmatpush.msra.mxu0 0.0
        %366 = vmatpush.msra.mxu0 0.0
        %367 = vmatpush.msra.mxu0 0.0
        %368 = vmatpush.msra.mxu0 0.0
        %369 = vmatpush.msra.mxu0 0.0
        %370 = vmatpush.msra.mxu0 0.0
        %371 = vmatpush.msra.mxu0 0.0
        %372 = vmatpush.msra.mxu0 0.0
        %373 = vmatpush.msra.mxu0 0.0
        %374 = vmatpush.msra.mxu0 0.0
        %375 = vmatpush.msra.mxu0 0.0
        %376 = vmatpush.msra.mxu0 0.0
        %377 = vmatpush.msra.mxu0 0.0
        %378 = vmatpush.msra.mxu0 0.0
        %379 = vmatpush.msra.mxu0 %v362
        %380 = vmatmul.f32.gmra.mxu0 %v313
        %v381 = vpop.f32.mrf.mxu0
        %v382 = vadd.f32 0.0, %v381
        %383 = vmatmul.f32.gmra.mxu0 %v316
        %v384 = vpop.f32.mrf.mxu0
        %v385 = vadd.f32 0.0, %v384
        %386 = vmatmul.f32.gmra.mxu0 %v319
        %v387 = vpop.f32.mrf.mxu0
        %v388 = vadd.f32 0.0, %v387
        %389 = vmatmul.f32.gmra.mxu0 %v322
        %v390 = vpop.f32.mrf.mxu0
        %v391 = vadd.f32 0.0, %v390
        %392 = vmatmul.f32.gmra.mxu0 %v325
        %v393 = vpop.f32.mrf.mxu0
        %v394 = vadd.f32 0.0, %v393
        %395 = vmatmul.f32.gmra.mxu0 %v328
        %v396 = vpop.f32.mrf.mxu0
        %v397 = vadd.f32 0.0, %v396
        %398 = vmatmul.f32.gmra.mxu0 %v331
        %v399 = vpop.f32.mrf.mxu0
        %v400 = vadd.f32 0.0, %v399
        %401 = vmatmul.f32.gmra.mxu0 %v334
        %v402 = vpop.f32.mrf.mxu0
        %v403 = vadd.f32 0.0, %v402
        %404 = vmatmul.f32.gmra.mxu0 %v337
        %v405 = vpop.f32.mrf.mxu0
        %v406 = vadd.f32 0.0, %v405
        %407 = vmatmul.f32.gmra.mxu0 %v340
        %v408 = vpop.f32.mrf.mxu0
        %v409 = vadd.f32 0.0, %v408
        %410 = vmatmul.f32.gmra.mxu0 %v343
        %v411 = vpop.f32.mrf.mxu0
        %v412 = vadd.f32 0.0, %v411
        %413 = vmatmul.f32.gmra.mxu0 %v346
        %v414 = vpop.f32.mrf.mxu0
        %v415 = vadd.f32 0.0, %v414
        %416 = vmatmul.f32.gmra.mxu0 %v349
        %v417 = vpop.f32.mrf.mxu0
        %v418 = vadd.f32 0.0, %v417
        %419 = vmatmul.f32.gmra.mxu0 %v352
        %v420 = vpop.f32.mrf.mxu0
        %v421 = vadd.f32 0.0, %v420
        %422 = vmatmul.f32.gmra.mxu0 %v355
        %v423 = vpop.f32.mrf.mxu0
        %v424 = vadd.f32 0.0, %v423
        %425 = vmatmul.f32.gmra.mxu0 %v358
        %v426 = vpop.f32.mrf.mxu0
        %v427 = vadd.f32 0.0, %v426
        %428 = vdwg.mxu0
        %v430 = vsel %vm311, %v276, 0
        %v433 = vsel %vm311, %v277, 0
        %v436 = vsel %vm311, %v278, 0
        %v439 = vsel %vm311, %v279, 0
        %v442 = vsel %vm311, %v280, 0
        %v445 = vsel %vm311, %v281, 0
        %v448 = vsel %vm311, %v282, 0
        %v451 = vsel %vm311, %v283, 0
        %v454 = vsel %vm311, %v284, 0
        %v457 = vsel %vm311, %v285, 0
        %v460 = vsel %vm311, %v286, 0
        %v463 = vsel %vm311, %v287, 0
        %v466 = vsel %vm311, %v288, 0
        %v469 = vsel %vm311, %v289, 0
        %v472 = vsel %vm311, %v290, 0
        %v475 = vsel %vm311, %v291, 0
        %v478 = vsel %vm360, %v292, 0
        %480 = vmatpush.msra.mxu0 0.0
        %481 = vmatpush.msra.mxu0 0.0
        %482 = vmatpush.msra.mxu0 0.0
        %483 = vmatpush.msra.mxu0 0.0
        %484 = vmatpush.msra.mxu0 0.0
        %485 = vmatpush.msra.mxu0 0.0
        %486 = vmatpush.msra.mxu0 0.0
        %487 = vmatpush.msra.mxu0 0.0
        %488 = vmatpush.msra.mxu0 0.0
        %489 = vmatpush.msra.mxu0 0.0
        %490 = vmatpush.msra.mxu0 0.0
        %491 = vmatpush.msra.mxu0 0.0
        %492 = vmatpush.msra.mxu0 0.0
        %493 = vmatpush.msra.mxu0 0.0
        %494 = vmatpush.msra.mxu0 0.0
        %495 = vmatpush.msra.mxu0 %v478
        %496 = vmatmul.f32.gmra.mxu0 %v430
        %v497 = vpop.f32.mrf.mxu0
        %v498 = vadd.f32 %v382, %v497
        %499 = vmatmul.f32.gmra.mxu0 %v433
        %v500 = vpop.f32.mrf.mxu0
        %v501 = vadd.f32 %v385, %v500
        %502 = vmatmul.f32.gmra.mxu0 %v436
        %v503 = vpop.f32.mrf.mxu0
        %v504 = vadd.f32 %v388, %v503
        %505 = vmatmul.f32.gmra.mxu0 %v439
        %v506 = vpop.f32.mrf.mxu0
        %v507 = vadd.f32 %v391, %v506
        %508 = vmatmul.f32.gmra.mxu0 %v442
        %v509 = vpop.f32.mrf.mxu0
        %v510 = vadd.f32 %v394, %v509
        %511 = vmatmul.f32.gmra.mxu0 %v445
        %v512 = vpop.f32.mrf.mxu0
        %v513 = vadd.f32 %v397, %v512
        %514 = vmatmul.f32.gmra.mxu0 %v448
        %v515 = vpop.f32.mrf.mxu0
        %v516 = vadd.f32 %v400, %v515
        %517 = vmatmul.f32.gmra.mxu0 %v451
        %v518 = vpop.f32.mrf.mxu0
        %v519 = vadd.f32 %v403, %v518
        %520 = vmatmul.f32.gmra.mxu0 %v454
        %v521 = vpop.f32.mrf.mxu0
        %v522 = vadd.f32 %v406, %v521
        %523 = vmatmul.f32.gmra.mxu0 %v457
        %v524 = vpop.f32.mrf.mxu0
        %v525 = vadd.f32 %v409, %v524
        %526 = vmatmul.f32.gmra.mxu0 %v460
        %v527 = vpop.f32.mrf.mxu0
        %v528 = vadd.f32 %v412, %v527
        %529 = vmatmul.f32.gmra.mxu0 %v463
        %v530 = vpop.f32.mrf.mxu0
        %v531 = vadd.f32 %v415, %v530
        %532 = vmatmul.f32.gmra.mxu0 %v466
        %v533 = vpop.f32.mrf.mxu0
        %v534 = vadd.f32 %v418, %v533
        %535 = vmatmul.f32.gmra.mxu0 %v469
        %v536 = vpop.f32.mrf.mxu0
        %v537 = vadd.f32 %v421, %v536
        %538 = vmatmul.f32.gmra.mxu0 %v472
        %v539 = vpop.f32.mrf.mxu0
        %v540 = vadd.f32 %v424, %v539
        %541 = vmatmul.f32.gmra.mxu0 %v475
        %v542 = vpop.f32.mrf.mxu0
        %v543 = vadd.f32 %v427, %v542
        %544 = vdwg.mxu0
        %v545 = vld [vmem:[%s275 + $0x2] sm:$0xff]
        %v546 = vld [vmem:[%s275 + $0xa] sm:$0xff]
        %v547 = vld [vmem:[%s275 + $0x12] sm:$0xff]
        %v548 = vld [vmem:[%s275 + $0x1a] sm:$0xff]
        %v549 = vld [vmem:[%s275 + $0x22] sm:$0xff]
        %v550 = vld [vmem:[%s275 + $0x2a] sm:$0xff]
        %v551 = vld [vmem:[%s275 + $0x32] sm:$0xff]
        %v552 = vld [vmem:[%s275 + $0x3a] sm:$0xff]
        %v553 = vld [vmem:[%s275 + $0x42] sm:$0xff]
        %v554 = vld [vmem:[%s275 + $0x4a] sm:$0xff]
        %v555 = vld [vmem:[%s275 + $0x52] sm:$0xff]
        %v556 = vld [vmem:[%s275 + $0x5a] sm:$0xff]
        %v557 = vld [vmem:[%s275 + $0x62] sm:$0xff]
        %v558 = vld [vmem:[%s275 + $0x6a] sm:$0xff]
        %v559 = vld [vmem:[%s275 + $0x72] sm:$0xff]
        %v560 = vld [vmem:[%s275 + $0x7a] sm:$0xff]
        %s561 = scalar_lea.vmem %s1, 4
        %v562 = vld [vmem:[%s561] sm:$0x3]
        %v564 = vsel %vm311, %v545, 0
        %v567 = vsel %vm311, %v546, 0
        %v570 = vsel %vm311, %v547, 0
        %v573 = vsel %vm311, %v548, 0
        %v576 = vsel %vm311, %v549, 0
        %v579 = vsel %vm311, %v550, 0
        %v582 = vsel %vm311, %v551, 0
        %v585 = vsel %vm311, %v552, 0
        %v588 = vsel %vm311, %v553, 0
        %v591 = vsel %vm311, %v554, 0
        %v594 = vsel %vm311, %v555, 0
        %v597 = vsel %vm311, %v556, 0
        %v600 = vsel %vm311, %v557, 0
        %v603 = vsel %vm311, %v558, 0
        %v606 = vsel %vm311, %v559, 0
        %v609 = vsel %vm311, %v560, 0
        %v612 = vsel %vm360, %v562, 0
        %614 = vmatpush.msra.mxu0 0.0
        %615 = vmatpush.msra.mxu0 0.0
        %616 = vmatpush.msra.mxu0 0.0
        %617 = vmatpush.msra.mxu0 0.0
        %618 = vmatpush.msra.mxu0 0.0
        %619 = vmatpush.msra.mxu0 0.0
        %620 = vmatpush.msra.mxu0 0.0
        %621 = vmatpush.msra.mxu0 0.0
        %622 = vmatpush.msra.mxu0 0.0
        %623 = vmatpush.msra.mxu0 0.0
        %624 = vmatpush.msra.mxu0 0.0
        %625 = vmatpush.msra.mxu0 0.0
        %626 = vmatpush.msra.mxu0 0.0
        %627 = vmatpush.msra.mxu0 0.0
        %628 = vmatpush.msra.mxu0 0.0
        %629 = vmatpush.msra.mxu0 %v612
        %630 = vmatmul.f32.gmra.mxu0 %v564
        %v631 = vpop.f32.mrf.mxu0
        %v632 = vadd.f32 0.0, %v631
        %633 = vmatmul.f32.gmra.mxu0 %v567
        %v634 = vpop.f32.mrf.mxu0
        %v635 = vadd.f32 0.0, %v634
        %636 = vmatmul.f32.gmra.mxu0 %v570
        %v637 = vpop.f32.mrf.mxu0
        %v638 = vadd.f32 0.0, %v637
        %639 = vmatmul.f32.gmra.mxu0 %v573
        %v640 = vpop.f32.mrf.mxu0
        %v641 = vadd.f32 0.0, %v640
        %642 = vmatmul.f32.gmra.mxu0 %v576
        %v643 = vpop.f32.mrf.mxu0
        %v644 = vadd.f32 0.0, %v643
        %645 = vmatmul.f32.gmra.mxu0 %v579
        %v646 = vpop.f32.mrf.mxu0
        %v647 = vadd.f32 0.0, %v646
        %648 = vmatmul.f32.gmra.mxu0 %v582
        %v649 = vpop.f32.mrf.mxu0
        %v650 = vadd.f32 0.0, %v649
        %651 = vmatmul.f32.gmra.mxu0 %v585
        %v652 = vpop.f32.mrf.mxu0
        %v653 = vadd.f32 0.0, %v652
        %654 = vmatmul.f32.gmra.mxu0 %v588
        %v655 = vpop.f32.mrf.mxu0
        %v656 = vadd.f32 0.0, %v655
        %657 = vmatmul.f32.gmra.mxu0 %v591
        %v658 = vpop.f32.mrf.mxu0
        %v659 = vadd.f32 0.0, %v658
        %660 = vmatmul.f32.gmra.mxu0 %v594
        %v661 = vpop.f32.mrf.mxu0
        %v662 = vadd.f32 0.0, %v661
        %663 = vmatmul.f32.gmra.mxu0 %v597
        %v664 = vpop.f32.mrf.mxu0
        %v665 = vadd.f32 0.0, %v664
        %666 = vmatmul.f32.gmra.mxu0 %v600
        %v667 = vpop.f32.mrf.mxu0
        %v668 = vadd.f32 0.0, %v667
        %669 = vmatmul.f32.gmra.mxu0 %v603
        %v670 = vpop.f32.mrf.mxu0
        %v671 = vadd.f32 0.0, %v670
        %672 = vmatmul.f32.gmra.mxu0 %v606
        %v673 = vpop.f32.mrf.mxu0
        %v674 = vadd.f32 0.0, %v673
        %675 = vmatmul.f32.gmra.mxu0 %v609
        %v676 = vpop.f32.mrf.mxu0
        %v677 = vadd.f32 0.0, %v676
        %678 = vdwg.mxu0
        %v679 = vadd.f32 %v498, %v632
        %v680 = vadd.f32 %v501, %v635
        %v681 = vadd.f32 %v504, %v638
        %v682 = vadd.f32 %v507, %v641
        %v683 = vadd.f32 %v510, %v644
        %v684 = vadd.f32 %v513, %v647
        %v685 = vadd.f32 %v516, %v650
        %v686 = vadd.f32 %v519, %v653
        %v687 = vadd.f32 %v522, %v656
        %v688 = vadd.f32 %v525, %v659
        %v689 = vadd.f32 %v528, %v662
        %v690 = vadd.f32 %v531, %v665
        %v691 = vadd.f32 %v534, %v668
        %v692 = vadd.f32 %v537, %v671
        %v693 = vadd.f32 %v540, %v674
        %v694 = vadd.f32 %v543, %v677
        %v695 = vld [vmem:[%s275 + $0x3] sm:$0xff]
        %v696 = vld [vmem:[%s275 + $0xb] sm:$0xff]
        %v697 = vld [vmem:[%s275 + $0x13] sm:$0xff]
        %v698 = vld [vmem:[%s275 + $0x1b] sm:$0xff]
        %v699 = vld [vmem:[%s275 + $0x23] sm:$0xff]
        %v700 = vld [vmem:[%s275 + $0x2b] sm:$0xff]
        %v701 = vld [vmem:[%s275 + $0x33] sm:$0xff]
        %v702 = vld [vmem:[%s275 + $0x3b] sm:$0xff]
        %v703 = vld [vmem:[%s275 + $0x43] sm:$0xff]
        %v704 = vld [vmem:[%s275 + $0x4b] sm:$0xff]
        %v705 = vld [vmem:[%s275 + $0x53] sm:$0xff]
        %v706 = vld [vmem:[%s275 + $0x5b] sm:$0xff]
        %v707 = vld [vmem:[%s275 + $0x63] sm:$0xff]
        %v708 = vld [vmem:[%s275 + $0x6b] sm:$0xff]
        %v709 = vld [vmem:[%s275 + $0x73] sm:$0xff]
        %v710 = vld [vmem:[%s275 + $0x7b] sm:$0xff]
        %s711 = scalar_lea.vmem %s1, 6
        %v712 = vld [vmem:[%s711] sm:$0x3]
        %v714 = vsel %vm311, %v695, 0
        %v717 = vsel %vm311, %v696, 0
        %v720 = vsel %vm311, %v697, 0
        %v723 = vsel %vm311, %v698, 0
        %v726 = vsel %vm311, %v699, 0
        %v729 = vsel %vm311, %v700, 0
        %v732 = vsel %vm311, %v701, 0
        %v735 = vsel %vm311, %v702, 0
        %v738 = vsel %vm311, %v703, 0
        %v741 = vsel %vm311, %v704, 0
        %v744 = vsel %vm311, %v705, 0
        %v747 = vsel %vm311, %v706, 0
        %v750 = vsel %vm311, %v707, 0
        %v753 = vsel %vm311, %v708, 0
        %v756 = vsel %vm311, %v709, 0
        %v759 = vsel %vm311, %v710, 0
        %v762 = vsel %vm360, %v712, 0
        %764 = vmatpush.msra.mxu0 0.0
        %765 = vmatpush.msra.mxu0 0.0
        %766 = vmatpush.msra.mxu0 0.0
        %767 = vmatpush.msra.mxu0 0.0
        %768 = vmatpush.msra.mxu0 0.0
        %769 = vmatpush.msra.mxu0 0.0
        %770 = vmatpush.msra.mxu0 0.0
        %771 = vmatpush.msra.mxu0 0.0
        %772 = vmatpush.msra.mxu0 0.0
        %773 = vmatpush.msra.mxu0 0.0
        %774 = vmatpush.msra.mxu0 0.0
        %775 = vmatpush.msra.mxu0 0.0
        %776 = vmatpush.msra.mxu0 0.0
        %777 = vmatpush.msra.mxu0 0.0
        %778 = vmatpush.msra.mxu0 0.0
        %779 = vmatpush.msra.mxu0 %v762
        %780 = vmatmul.f32.gmra.mxu0 %v714
        %v781 = vpop.f32.mrf.mxu0
        %v782 = vadd.f32 0.0, %v781
        %783 = vmatmul.f32.gmra.mxu0 %v717
        %v784 = vpop.f32.mrf.mxu0
        %v785 = vadd.f32 0.0, %v784
        %786 = vmatmul.f32.gmra.mxu0 %v720
        %v787 = vpop.f32.mrf.mxu0
        %v788 = vadd.f32 0.0, %v787
        %789 = vmatmul.f32.gmra.mxu0 %v723
        %v790 = vpop.f32.mrf.mxu0
        %v791 = vadd.f32 0.0, %v790
        %792 = vmatmul.f32.gmra.mxu0 %v726
        %v793 = vpop.f32.mrf.mxu0
        %v794 = vadd.f32 0.0, %v793
        %795 = vmatmul.f32.gmra.mxu0 %v729
        %v796 = vpop.f32.mrf.mxu0
        %v797 = vadd.f32 0.0, %v796
        %798 = vmatmul.f32.gmra.mxu0 %v732
        %v799 = vpop.f32.mrf.mxu0
        %v800 = vadd.f32 0.0, %v799
        %801 = vmatmul.f32.gmra.mxu0 %v735
        %v802 = vpop.f32.mrf.mxu0
        %v803 = vadd.f32 0.0, %v802
        %804 = vmatmul.f32.gmra.mxu0 %v738
        %v805 = vpop.f32.mrf.mxu0
        %v806 = vadd.f32 0.0, %v805
        %807 = vmatmul.f32.gmra.mxu0 %v741
        %v808 = vpop.f32.mrf.mxu0
        %v809 = vadd.f32 0.0, %v808
        %810 = vmatmul.f32.gmra.mxu0 %v744
        %v811 = vpop.f32.mrf.mxu0
        %v812 = vadd.f32 0.0, %v811
        %813 = vmatmul.f32.gmra.mxu0 %v747
        %v814 = vpop.f32.mrf.mxu0
        %v815 = vadd.f32 0.0, %v814
        %816 = vmatmul.f32.gmra.mxu0 %v750
        %v817 = vpop.f32.mrf.mxu0
        %v818 = vadd.f32 0.0, %v817
        %819 = vmatmul.f32.gmra.mxu0 %v753
        %v820 = vpop.f32.mrf.mxu0
        %v821 = vadd.f32 0.0, %v820
        %822 = vmatmul.f32.gmra.mxu0 %v756
        %v823 = vpop.f32.mrf.mxu0
        %v824 = vadd.f32 0.0, %v823
        %825 = vmatmul.f32.gmra.mxu0 %v759
        %v826 = vpop.f32.mrf.mxu0
        %v827 = vadd.f32 0.0, %v826
        %828 = vdwg.mxu0
        %v829 = vadd.f32 %v679, %v782
        %v830 = vadd.f32 %v680, %v785
        %v831 = vadd.f32 %v681, %v788
        %v832 = vadd.f32 %v682, %v791
        %v833 = vadd.f32 %v683, %v794
        %v834 = vadd.f32 %v684, %v797
        %v835 = vadd.f32 %v685, %v800
        %v836 = vadd.f32 %v686, %v803
        %v837 = vadd.f32 %v687, %v806
        %v838 = vadd.f32 %v688, %v809
        %v839 = vadd.f32 %v689, %v812
        %v840 = vadd.f32 %v690, %v815
        %v841 = vadd.f32 %v691, %v818
        %v842 = vadd.f32 %v692, %v821
        %v843 = vadd.f32 %v693, %v824
        %v844 = vadd.f32 %v694, %v827
        %v845 = vld [vmem:[%s275 + $0x4] sm:$0xff]
        %v846 = vld [vmem:[%s275 + $0xc] sm:$0xff]
        %v847 = vld [vmem:[%s275 + $0x14] sm:$0xff]
        %v848 = vld [vmem:[%s275 + $0x1c] sm:$0xff]
        %v849 = vld [vmem:[%s275 + $0x24] sm:$0xff]
        %v850 = vld [vmem:[%s275 + $0x2c] sm:$0xff]
        %v851 = vld [vmem:[%s275 + $0x34] sm:$0xff]
        %v852 = vld [vmem:[%s275 + $0x3c] sm:$0xff]
        %v853 = vld [vmem:[%s275 + $0x44] sm:$0xff]
        %v854 = vld [vmem:[%s275 + $0x4c] sm:$0xff]
        %v855 = vld [vmem:[%s275 + $0x54] sm:$0xff]
        %v856 = vld [vmem:[%s275 + $0x5c] sm:$0xff]
        %v857 = vld [vmem:[%s275 + $0x64] sm:$0xff]
        %v858 = vld [vmem:[%s275 + $0x6c] sm:$0xff]
        %v859 = vld [vmem:[%s275 + $0x74] sm:$0xff]
        %v860 = vld [vmem:[%s275 + $0x7c] sm:$0xff]
        %s861 = scalar_lea.vmem %s1, 8
        %v862 = vld [vmem:[%s861] sm:$0x3]
        %v864 = vsel %vm311, %v845, 0
        %v867 = vsel %vm311, %v846, 0
        %v870 = vsel %vm311, %v847, 0
        %v873 = vsel %vm311, %v848, 0
        %v876 = vsel %vm311, %v849, 0
        %v879 = vsel %vm311, %v850, 0
        %v882 = vsel %vm311, %v851, 0
        %v885 = vsel %vm311, %v852, 0
        %v888 = vsel %vm311, %v853, 0
        %v891 = vsel %vm311, %v854, 0
        %v894 = vsel %vm311, %v855, 0
        %v897 = vsel %vm311, %v856, 0
        %v900 = vsel %vm311, %v857, 0
        %v903 = vsel %vm311, %v858, 0
        %v906 = vsel %vm311, %v859, 0
        %v909 = vsel %vm311, %v860, 0
        %v912 = vsel %vm360, %v862, 0
        %914 = vmatpush.msra.mxu0 0.0
        %915 = vmatpush.msra.mxu0 0.0
        %916 = vmatpush.msra.mxu0 0.0
        %917 = vmatpush.msra.mxu0 0.0
        %918 = vmatpush.msra.mxu0 0.0
        %919 = vmatpush.msra.mxu0 0.0
        %920 = vmatpush.msra.mxu0 0.0
        %921 = vmatpush.msra.mxu0 0.0
        %922 = vmatpush.msra.mxu0 0.0
        %923 = vmatpush.msra.mxu0 0.0
        %924 = vmatpush.msra.mxu0 0.0
        %925 = vmatpush.msra.mxu0 0.0
        %926 = vmatpush.msra.mxu0 0.0
        %927 = vmatpush.msra.mxu0 0.0
        %928 = vmatpush.msra.mxu0 0.0
        %929 = vmatpush.msra.mxu0 %v912
        %930 = vmatmul.f32.gmra.mxu0 %v864
        %v931 = vpop.f32.mrf.mxu0
        %v932 = vadd.f32 0.0, %v931
        %933 = vmatmul.f32.gmra.mxu0 %v867
        %v934 = vpop.f32.mrf.mxu0
        %v935 = vadd.f32 0.0, %v934
        %936 = vmatmul.f32.gmra.mxu0 %v870
        %v937 = vpop.f32.mrf.mxu0
        %v938 = vadd.f32 0.0, %v937
        %939 = vmatmul.f32.gmra.mxu0 %v873
        %v940 = vpop.f32.mrf.mxu0
        %v941 = vadd.f32 0.0, %v940
        %942 = vmatmul.f32.gmra.mxu0 %v876
        %v943 = vpop.f32.mrf.mxu0
        %v944 = vadd.f32 0.0, %v943
        %945 = vmatmul.f32.gmra.mxu0 %v879
        %v946 = vpop.f32.mrf.mxu0
        %v947 = vadd.f32 0.0, %v946
        %948 = vmatmul.f32.gmra.mxu0 %v882
        %v949 = vpop.f32.mrf.mxu0
        %v950 = vadd.f32 0.0, %v949
        %951 = vmatmul.f32.gmra.mxu0 %v885
        %v952 = vpop.f32.mrf.mxu0
        %v953 = vadd.f32 0.0, %v952
        %954 = vmatmul.f32.gmra.mxu0 %v888
        %v955 = vpop.f32.mrf.mxu0
        %v956 = vadd.f32 0.0, %v955
        %957 = vmatmul.f32.gmra.mxu0 %v891
        %v958 = vpop.f32.mrf.mxu0
        %v959 = vadd.f32 0.0, %v958
        %960 = vmatmul.f32.gmra.mxu0 %v894
        %v961 = vpop.f32.mrf.mxu0
        %v962 = vadd.f32 0.0, %v961
        %963 = vmatmul.f32.gmra.mxu0 %v897
        %v964 = vpop.f32.mrf.mxu0
        %v965 = vadd.f32 0.0, %v964
        %966 = vmatmul.f32.gmra.mxu0 %v900
        %v967 = vpop.f32.mrf.mxu0
        %v968 = vadd.f32 0.0, %v967
        %969 = vmatmul.f32.gmra.mxu0 %v903
        %v970 = vpop.f32.mrf.mxu0
        %v971 = vadd.f32 0.0, %v970
        %972 = vmatmul.f32.gmra.mxu0 %v906
        %v973 = vpop.f32.mrf.mxu0
        %v974 = vadd.f32 0.0, %v973
        %975 = vmatmul.f32.gmra.mxu0 %v909
        %v976 = vpop.f32.mrf.mxu0
        %v977 = vadd.f32 0.0, %v976
        %978 = vdwg.mxu0
        %v979 = vadd.f32 %v829, %v932
        %v980 = vadd.f32 %v830, %v935
        %v981 = vadd.f32 %v831, %v938
        %v982 = vadd.f32 %v832, %v941
        %v983 = vadd.f32 %v833, %v944
        %v984 = vadd.f32 %v834, %v947
        %v985 = vadd.f32 %v835, %v950
        %v986 = vadd.f32 %v836, %v953
        %v987 = vadd.f32 %v837, %v956
        %v988 = vadd.f32 %v838, %v959
        %v989 = vadd.f32 %v839, %v962
        %v990 = vadd.f32 %v840, %v965
        %v991 = vadd.f32 %v841, %v968
        %v992 = vadd.f32 %v842, %v971
        %v993 = vadd.f32 %v843, %v974
        %v994 = vadd.f32 %v844, %v977
        %v995 = vld [vmem:[%s275 + $0x5] sm:$0xff]
        %v996 = vld [vmem:[%s275 + $0xd] sm:$0xff]
        %v997 = vld [vmem:[%s275 + $0x15] sm:$0xff]
        %v998 = vld [vmem:[%s275 + $0x1d] sm:$0xff]
        %v999 = vld [vmem:[%s275 + $0x25] sm:$0xff]
        %v1000 = vld [vmem:[%s275 + $0x2d] sm:$0xff]
        %v1001 = vld [vmem:[%s275 + $0x35] sm:$0xff]
        %v1002 = vld [vmem:[%s275 + $0x3d] sm:$0xff]
        %v1003 = vld [vmem:[%s275 + $0x45] sm:$0xff]
        %v1004 = vld [vmem:[%s275 + $0x4d] sm:$0xff]
        %v1005 = vld [vmem:[%s275 + $0x55] sm:$0xff]
        %v1006 = vld [vmem:[%s275 + $0x5d] sm:$0xff]
        %v1007 = vld [vmem:[%s275 + $0x65] sm:$0xff]
        %v1008 = vld [vmem:[%s275 + $0x6d] sm:$0xff]
        %v1009 = vld [vmem:[%s275 + $0x75] sm:$0xff]
        %v1010 = vld [vmem:[%s275 + $0x7d] sm:$0xff]
        %s1011 = scalar_lea.vmem %s1, 10
        %v1012 = vld [vmem:[%s1011] sm:$0x3]
        %v1014 = vsel %vm311, %v995, 0
        %v1017 = vsel %vm311, %v996, 0
        %v1020 = vsel %vm311, %v997, 0
        %v1023 = vsel %vm311, %v998, 0
        %v1026 = vsel %vm311, %v999, 0
        %v1029 = vsel %vm311, %v1000, 0
        %v1032 = vsel %vm311, %v1001, 0
        %v1035 = vsel %vm311, %v1002, 0
        %v1038 = vsel %vm311, %v1003, 0
        %v1041 = vsel %vm311, %v1004, 0
        %v1044 = vsel %vm311, %v1005, 0
        %v1047 = vsel %vm311, %v1006, 0
        %v1050 = vsel %vm311, %v1007, 0
        %v1053 = vsel %vm311, %v1008, 0
        %v1056 = vsel %vm311, %v1009, 0
        %v1059 = vsel %vm311, %v1010, 0
        %v1062 = vsel %vm360, %v1012, 0
        %1064 = vmatpush.msra.mxu0 0.0
        %1065 = vmatpush.msra.mxu0 0.0
        %1066 = vmatpush.msra.mxu0 0.0
        %1067 = vmatpush.msra.mxu0 0.0
        %1068 = vmatpush.msra.mxu0 0.0
        %1069 = vmatpush.msra.mxu0 0.0
        %1070 = vmatpush.msra.mxu0 0.0
        %1071 = vmatpush.msra.mxu0 0.0
        %1072 = vmatpush.msra.mxu0 0.0
        %1073 = vmatpush.msra.mxu0 0.0
        %1074 = vmatpush.msra.mxu0 0.0
        %1075 = vmatpush.msra.mxu0 0.0
        %1076 = vmatpush.msra.mxu0 0.0
        %1077 = vmatpush.msra.mxu0 0.0
        %1078 = vmatpush.msra.mxu0 0.0
        %1079 = vmatpush.msra.mxu0 %v1062
        %1080 = vmatmul.f32.gmra.mxu0 %v1014
        %v1081 = vpop.f32.mrf.mxu0
        %v1082 = vadd.f32 0.0, %v1081
        %1083 = vmatmul.f32.gmra.mxu0 %v1017
        %v1084 = vpop.f32.mrf.mxu0
        %v1085 = vadd.f32 0.0, %v1084
        %1086 = vmatmul.f32.gmra.mxu0 %v1020
        %v1087 = vpop.f32.mrf.mxu0
        %v1088 = vadd.f32 0.0, %v1087
        %1089 = vmatmul.f32.gmra.mxu0 %v1023
        %v1090 = vpop.f32.mrf.mxu0
        %v1091 = vadd.f32 0.0, %v1090
        %1092 = vmatmul.f32.gmra.mxu0 %v1026
        %v1093 = vpop.f32.mrf.mxu0
        %v1094 = vadd.f32 0.0, %v1093
        %1095 = vmatmul.f32.gmra.mxu0 %v1029
        %v1096 = vpop.f32.mrf.mxu0
        %v1097 = vadd.f32 0.0, %v1096
        %1098 = vmatmul.f32.gmra.mxu0 %v1032
        %v1099 = vpop.f32.mrf.mxu0
        %v1100 = vadd.f32 0.0, %v1099
        %1101 = vmatmul.f32.gmra.mxu0 %v1035
        %v1102 = vpop.f32.mrf.mxu0
        %v1103 = vadd.f32 0.0, %v1102
        %1104 = vmatmul.f32.gmra.mxu0 %v1038
        %v1105 = vpop.f32.mrf.mxu0
        %v1106 = vadd.f32 0.0, %v1105
        %1107 = vmatmul.f32.gmra.mxu0 %v1041
        %v1108 = vpop.f32.mrf.mxu0
        %v1109 = vadd.f32 0.0, %v1108
        %1110 = vmatmul.f32.gmra.mxu0 %v1044
        %v1111 = vpop.f32.mrf.mxu0
        %v1112 = vadd.f32 0.0, %v1111
        %1113 = vmatmul.f32.gmra.mxu0 %v1047
        %v1114 = vpop.f32.mrf.mxu0
        %v1115 = vadd.f32 0.0, %v1114
        %1116 = vmatmul.f32.gmra.mxu0 %v1050
        %v1117 = vpop.f32.mrf.mxu0
        %v1118 = vadd.f32 0.0, %v1117
        %1119 = vmatmul.f32.gmra.mxu0 %v1053
        %v1120 = vpop.f32.mrf.mxu0
        %v1121 = vadd.f32 0.0, %v1120
        %1122 = vmatmul.f32.gmra.mxu0 %v1056
        %v1123 = vpop.f32.mrf.mxu0
        %v1124 = vadd.f32 0.0, %v1123
        %1125 = vmatmul.f32.gmra.mxu0 %v1059
        %v1126 = vpop.f32.mrf.mxu0
        %v1127 = vadd.f32 0.0, %v1126
        %1128 = vdwg.mxu0
        %v1129 = vadd.f32 %v979, %v1082
        %v1130 = vadd.f32 %v980, %v1085
        %v1131 = vadd.f32 %v981, %v1088
        %v1132 = vadd.f32 %v982, %v1091
        %v1133 = vadd.f32 %v983, %v1094
        %v1134 = vadd.f32 %v984, %v1097
        %v1135 = vadd.f32 %v985, %v1100
        %v1136 = vadd.f32 %v986, %v1103
        %v1137 = vadd.f32 %v987, %v1106
        %v1138 = vadd.f32 %v988, %v1109
        %v1139 = vadd.f32 %v989, %v1112
        %v1140 = vadd.f32 %v990, %v1115
        %v1141 = vadd.f32 %v991, %v1118
        %v1142 = vadd.f32 %v992, %v1121
        %v1143 = vadd.f32 %v993, %v1124
        %v1144 = vadd.f32 %v994, %v1127
        %v1145 = vld [vmem:[%s275 + $0x6] sm:$0xff]
        %v1146 = vld [vmem:[%s275 + $0xe] sm:$0xff]
        %v1147 = vld [vmem:[%s275 + $0x16] sm:$0xff]
        %v1148 = vld [vmem:[%s275 + $0x1e] sm:$0xff]
        %v1149 = vld [vmem:[%s275 + $0x26] sm:$0xff]
        %v1150 = vld [vmem:[%s275 + $0x2e] sm:$0xff]
        %v1151 = vld [vmem:[%s275 + $0x36] sm:$0xff]
        %v1152 = vld [vmem:[%s275 + $0x3e] sm:$0xff]
        %v1153 = vld [vmem:[%s275 + $0x46] sm:$0xff]
        %v1154 = vld [vmem:[%s275 + $0x4e] sm:$0xff]
        %v1155 = vld [vmem:[%s275 + $0x56] sm:$0xff]
        %v1156 = vld [vmem:[%s275 + $0x5e] sm:$0xff]
        %v1157 = vld [vmem:[%s275 + $0x66] sm:$0xff]
        %v1158 = vld [vmem:[%s275 + $0x6e] sm:$0xff]
        %v1159 = vld [vmem:[%s275 + $0x76] sm:$0xff]
        %v1160 = vld [vmem:[%s275 + $0x7e] sm:$0xff]
        %s1161 = scalar_lea.vmem %s1, 12
        %v1162 = vld [vmem:[%s1161] sm:$0x3]
        %v1164 = vsel %vm311, %v1145, 0
        %v1167 = vsel %vm311, %v1146, 0
        %v1170 = vsel %vm311, %v1147, 0
        %v1173 = vsel %vm311, %v1148, 0
        %v1176 = vsel %vm311, %v1149, 0
        %v1179 = vsel %vm311, %v1150, 0
        %v1182 = vsel %vm311, %v1151, 0
        %v1185 = vsel %vm311, %v1152, 0
        %v1188 = vsel %vm311, %v1153, 0
        %v1191 = vsel %vm311, %v1154, 0
        %v1194 = vsel %vm311, %v1155, 0
        %v1197 = vsel %vm311, %v1156, 0
        %v1200 = vsel %vm311, %v1157, 0
        %v1203 = vsel %vm311, %v1158, 0
        %v1206 = vsel %vm311, %v1159, 0
        %v1209 = vsel %vm311, %v1160, 0
        %v1212 = vsel %vm360, %v1162, 0
        %1214 = vmatpush.msra.mxu0 0.0
        %1215 = vmatpush.msra.mxu0 0.0
        %1216 = vmatpush.msra.mxu0 0.0
        %1217 = vmatpush.msra.mxu0 0.0
        %1218 = vmatpush.msra.mxu0 0.0
        %1219 = vmatpush.msra.mxu0 0.0
        %1220 = vmatpush.msra.mxu0 0.0
        %1221 = vmatpush.msra.mxu0 0.0
        %1222 = vmatpush.msra.mxu0 0.0
        %1223 = vmatpush.msra.mxu0 0.0
        %1224 = vmatpush.msra.mxu0 0.0
        %1225 = vmatpush.msra.mxu0 0.0
        %1226 = vmatpush.msra.mxu0 0.0
        %1227 = vmatpush.msra.mxu0 0.0
        %1228 = vmatpush.msra.mxu0 0.0
        %1229 = vmatpush.msra.mxu0 %v1212
        %1230 = vmatmul.f32.gmra.mxu0 %v1164
        %v1231 = vpop.f32.mrf.mxu0
        %v1232 = vadd.f32 0.0, %v1231
        %1233 = vmatmul.f32.gmra.mxu0 %v1167
        %v1234 = vpop.f32.mrf.mxu0
        %v1235 = vadd.f32 0.0, %v1234
        %1236 = vmatmul.f32.gmra.mxu0 %v1170
        %v1237 = vpop.f32.mrf.mxu0
        %v1238 = vadd.f32 0.0, %v1237
        %1239 = vmatmul.f32.gmra.mxu0 %v1173
        %v1240 = vpop.f32.mrf.mxu0
        %v1241 = vadd.f32 0.0, %v1240
        %1242 = vmatmul.f32.gmra.mxu0 %v1176
        %v1243 = vpop.f32.mrf.mxu0
        %v1244 = vadd.f32 0.0, %v1243
        %1245 = vmatmul.f32.gmra.mxu0 %v1179
        %v1246 = vpop.f32.mrf.mxu0
        %v1247 = vadd.f32 0.0, %v1246
        %1248 = vmatmul.f32.gmra.mxu0 %v1182
        %v1249 = vpop.f32.mrf.mxu0
        %v1250 = vadd.f32 0.0, %v1249
        %1251 = vmatmul.f32.gmra.mxu0 %v1185
        %v1252 = vpop.f32.mrf.mxu0
        %v1253 = vadd.f32 0.0, %v1252
        %1254 = vmatmul.f32.gmra.mxu0 %v1188
        %v1255 = vpop.f32.mrf.mxu0
        %v1256 = vadd.f32 0.0, %v1255
        %1257 = vmatmul.f32.gmra.mxu0 %v1191
        %v1258 = vpop.f32.mrf.mxu0
        %v1259 = vadd.f32 0.0, %v1258
        %1260 = vmatmul.f32.gmra.mxu0 %v1194
        %v1261 = vpop.f32.mrf.mxu0
        %v1262 = vadd.f32 0.0, %v1261
        %1263 = vmatmul.f32.gmra.mxu0 %v1197
        %v1264 = vpop.f32.mrf.mxu0
        %v1265 = vadd.f32 0.0, %v1264
        %1266 = vmatmul.f32.gmra.mxu0 %v1200
        %v1267 = vpop.f32.mrf.mxu0
        %v1268 = vadd.f32 0.0, %v1267
        %1269 = vmatmul.f32.gmra.mxu0 %v1203
        %v1270 = vpop.f32.mrf.mxu0
        %v1271 = vadd.f32 0.0, %v1270
        %1272 = vmatmul.f32.gmra.mxu0 %v1206
        %v1273 = vpop.f32.mrf.mxu0
        %v1274 = vadd.f32 0.0, %v1273
        %1275 = vmatmul.f32.gmra.mxu0 %v1209
        %v1276 = vpop.f32.mrf.mxu0
        %v1277 = vadd.f32 0.0, %v1276
        %1278 = vdwg.mxu0
        %v1279 = vadd.f32 %v1129, %v1232
        %v1280 = vadd.f32 %v1130, %v1235
        %v1281 = vadd.f32 %v1131, %v1238
        %v1282 = vadd.f32 %v1132, %v1241
        %v1283 = vadd.f32 %v1133, %v1244
        %v1284 = vadd.f32 %v1134, %v1247
        %v1285 = vadd.f32 %v1135, %v1250
        %v1286 = vadd.f32 %v1136, %v1253
        %v1287 = vadd.f32 %v1137, %v1256
        %v1288 = vadd.f32 %v1138, %v1259
        %v1289 = vadd.f32 %v1139, %v1262
        %v1290 = vadd.f32 %v1140, %v1265
        %v1291 = vadd.f32 %v1141, %v1268
        %v1292 = vadd.f32 %v1142, %v1271
        %v1293 = vadd.f32 %v1143, %v1274
        %v1294 = vadd.f32 %v1144, %v1277
        %v1295 = vld [vmem:[%s275 + $0x7] sm:$0xff]
        %v1296 = vld [vmem:[%s275 + $0xf] sm:$0xff]
        %v1297 = vld [vmem:[%s275 + $0x17] sm:$0xff]
        %v1298 = vld [vmem:[%s275 + $0x1f] sm:$0xff]
        %v1299 = vld [vmem:[%s275 + $0x27] sm:$0xff]
        %v1300 = vld [vmem:[%s275 + $0x2f] sm:$0xff]
        %v1301 = vld [vmem:[%s275 + $0x37] sm:$0xff]
        %v1302 = vld [vmem:[%s275 + $0x3f] sm:$0xff]
        %v1303 = vld [vmem:[%s275 + $0x47] sm:$0xff]
        %v1304 = vld [vmem:[%s275 + $0x4f] sm:$0xff]
        %v1305 = vld [vmem:[%s275 + $0x57] sm:$0xff]
        %v1306 = vld [vmem:[%s275 + $0x5f] sm:$0xff]
        %v1307 = vld [vmem:[%s275 + $0x67] sm:$0xff]
        %v1308 = vld [vmem:[%s275 + $0x6f] sm:$0xff]
        %v1309 = vld [vmem:[%s275 + $0x77] sm:$0xff]
        %v1310 = vld [vmem:[%s275 + $0x7f] sm:$0xff]
        %s1311 = scalar_lea.vmem %s1, 14
        %v1312 = vld [vmem:[%s1311] sm:$0x3]
        %v1314 = vsel %vm311, %v1295, 0
        %v1317 = vsel %vm311, %v1296, 0
        %v1320 = vsel %vm311, %v1297, 0
        %v1323 = vsel %vm311, %v1298, 0
        %v1326 = vsel %vm311, %v1299, 0
        %v1329 = vsel %vm311, %v1300, 0
        %v1332 = vsel %vm311, %v1301, 0
        %v1335 = vsel %vm311, %v1302, 0
        %v1338 = vsel %vm311, %v1303, 0
        %v1341 = vsel %vm311, %v1304, 0
        %v1344 = vsel %vm311, %v1305, 0
        %v1347 = vsel %vm311, %v1306, 0
        %v1350 = vsel %vm311, %v1307, 0
        %v1353 = vsel %vm311, %v1308, 0
        %v1356 = vsel %vm311, %v1309, 0
        %v1359 = vsel %vm311, %v1310, 0
        %v1362 = vsel %vm360, %v1312, 0
        %1364 = vmatpush.msra.mxu0 0.0
        %1365 = vmatpush.msra.mxu0 0.0
        %1366 = vmatpush.msra.mxu0 0.0
        %1367 = vmatpush.msra.mxu0 0.0
        %1368 = vmatpush.msra.mxu0 0.0
        %1369 = vmatpush.msra.mxu0 0.0
        %1370 = vmatpush.msra.mxu0 0.0
        %1371 = vmatpush.msra.mxu0 0.0
        %1372 = vmatpush.msra.mxu0 0.0
        %1373 = vmatpush.msra.mxu0 0.0
        %1374 = vmatpush.msra.mxu0 0.0
        %1375 = vmatpush.msra.mxu0 0.0
        %1376 = vmatpush.msra.mxu0 0.0
        %1377 = vmatpush.msra.mxu0 0.0
        %1378 = vmatpush.msra.mxu0 0.0
        %1379 = vmatpush.msra.mxu0 %v1362
        %1380 = vmatmul.f32.gmra.mxu0 %v1314
        %v1381 = vpop.f32.mrf.mxu0
        %v1382 = vadd.f32 0.0, %v1381
        %1383 = vmatmul.f32.gmra.mxu0 %v1317
        %v1384 = vpop.f32.mrf.mxu0
        %v1385 = vadd.f32 0.0, %v1384
        %1386 = vmatmul.f32.gmra.mxu0 %v1320
        %v1387 = vpop.f32.mrf.mxu0
        %v1388 = vadd.f32 0.0, %v1387
        %1389 = vmatmul.f32.gmra.mxu0 %v1323
        %v1390 = vpop.f32.mrf.mxu0
        %v1391 = vadd.f32 0.0, %v1390
        %1392 = vmatmul.f32.gmra.mxu0 %v1326
        %v1393 = vpop.f32.mrf.mxu0
        %v1394 = vadd.f32 0.0, %v1393
        %1395 = vmatmul.f32.gmra.mxu0 %v1329
        %v1396 = vpop.f32.mrf.mxu0
        %v1397 = vadd.f32 0.0, %v1396
        %1398 = vmatmul.f32.gmra.mxu0 %v1332
        %v1399 = vpop.f32.mrf.mxu0
        %v1400 = vadd.f32 0.0, %v1399
        %1401 = vmatmul.f32.gmra.mxu0 %v1335
        %v1402 = vpop.f32.mrf.mxu0
        %v1403 = vadd.f32 0.0, %v1402
        %1404 = vmatmul.f32.gmra.mxu0 %v1338
        %v1405 = vpop.f32.mrf.mxu0
        %v1406 = vadd.f32 0.0, %v1405
        %1407 = vmatmul.f32.gmra.mxu0 %v1341
        %v1408 = vpop.f32.mrf.mxu0
        %v1409 = vadd.f32 0.0, %v1408
        %1410 = vmatmul.f32.gmra.mxu0 %v1344
        %v1411 = vpop.f32.mrf.mxu0
        %v1412 = vadd.f32 0.0, %v1411
        %1413 = vmatmul.f32.gmra.mxu0 %v1347
        %v1414 = vpop.f32.mrf.mxu0
        %v1415 = vadd.f32 0.0, %v1414
        %1416 = vmatmul.f32.gmra.mxu0 %v1350
        %v1417 = vpop.f32.mrf.mxu0
        %v1418 = vadd.f32 0.0, %v1417
        %1419 = vmatmul.f32.gmra.mxu0 %v1353
        %v1420 = vpop.f32.mrf.mxu0
        %v1421 = vadd.f32 0.0, %v1420
        %1422 = vmatmul.f32.gmra.mxu0 %v1356
        %v1423 = vpop.f32.mrf.mxu0
        %v1424 = vadd.f32 0.0, %v1423
        %1425 = vmatmul.f32.gmra.mxu0 %v1359
        %v1426 = vpop.f32.mrf.mxu0
        %v1427 = vadd.f32 0.0, %v1426
        %1428 = vdwg.mxu0
        %v1429 = vadd.f32 %v1279, %v1382
        %v1430 = vadd.f32 %v1280, %v1385
        %v1431 = vadd.f32 %v1281, %v1388
        %v1432 = vadd.f32 %v1282, %v1391
        %v1433 = vadd.f32 %v1283, %v1394
        %v1434 = vadd.f32 %v1284, %v1397
        %v1435 = vadd.f32 %v1285, %v1400
        %v1436 = vadd.f32 %v1286, %v1403
        %v1437 = vadd.f32 %v1287, %v1406
        %v1438 = vadd.f32 %v1288, %v1409
        %v1439 = vadd.f32 %v1289, %v1412
        %v1440 = vadd.f32 %v1290, %v1415
        %v1441 = vadd.f32 %v1291, %v1418
        %v1442 = vadd.f32 %v1292, %v1421
        %v1443 = vadd.f32 %v1293, %v1424
        %v1444 = vadd.f32 %v1294, %v1427
        %v1445 = vld [vmem:[%s2] sm:$0x1]
        %v1447 = vperm.slane %v1445, 0
        %v1449 = vadd.f32 %v1429, %v1447
        %v1450 = vadd.f32 %v1430, %v1447
        %v1451 = vadd.f32 %v1431, %v1447
        %v1452 = vadd.f32 %v1432, %v1447
        %v1453 = vadd.f32 %v1433, %v1447
        %v1454 = vadd.f32 %v1434, %v1447
        %v1455 = vadd.f32 %v1435, %v1447
        %v1456 = vadd.f32 %v1436, %v1447
        %v1457 = vadd.f32 %v1437, %v1447
        %v1458 = vadd.f32 %v1438, %v1447
        %v1459 = vadd.f32 %v1439, %v1447
        %v1460 = vadd.f32 %v1440, %v1447
        %v1461 = vadd.f32 %v1441, %v1447
        %v1462 = vadd.f32 %v1442, %v1447
        %v1463 = vadd.f32 %v1443, %v1447
        %v1464 = vadd.f32 %v1444, %v1447
        %v1465 = vmax.f32 %v1449, 0.0
        %v1466 = vmax.f32 %v1450, 0.0
        %v1467 = vmax.f32 %v1451, 0.0
        %v1468 = vmax.f32 %v1452, 0.0
        %v1469 = vmax.f32 %v1453, 0.0
        %v1470 = vmax.f32 %v1454, 0.0
        %v1471 = vmax.f32 %v1455, 0.0
        %v1472 = vmax.f32 %v1456, 0.0
        %v1473 = vmax.f32 %v1457, 0.0
        %v1474 = vmax.f32 %v1458, 0.0
        %v1475 = vmax.f32 %v1459, 0.0
        %v1476 = vmax.f32 %v1460, 0.0
        %v1477 = vmax.f32 %v1461, 0.0
        %v1478 = vmax.f32 %v1462, 0.0
        %v1479 = vmax.f32 %v1463, 0.0
        %v1480 = vmax.f32 %v1464, 0.0
        %1481 = vst [vmem:[#allocation2] sm:$0xff] %v1465
        %1482 = vst [vmem:[#allocation2 + $0x8] sm:$0xff] %v1466
        %1483 = vst [vmem:[#allocation2 + $0x10] sm:$0xff] %v1467
        %1484 = vst [vmem:[#allocation2 + $0x18] sm:$0xff] %v1468
        %1485 = vst [vmem:[#allocation2 + $0x20] sm:$0xff] %v1469
        %1486 = vst [vmem:[#allocation2 + $0x28] sm:$0xff] %v1470
        %1487 = vst [vmem:[#allocation2 + $0x30] sm:$0xff] %v1471
        %1488 = vst [vmem:[#allocation2 + $0x38] sm:$0xff] %v1472
        %1489 = vst [vmem:[#allocation2 + $0x40] sm:$0xff] %v1473
        %1490 = vst [vmem:[#allocation2 + $0x48] sm:$0xff] %v1474
        %1491 = vst [vmem:[#allocation2 + $0x50] sm:$0xff] %v1475
        %1492 = vst [vmem:[#allocation2 + $0x58] sm:$0xff] %v1476
        %1493 = vst [vmem:[#allocation2 + $0x60] sm:$0xff] %v1477
        %1494 = vst [vmem:[#allocation2 + $0x68] sm:$0xff] %v1478
        %1495 = vst [vmem:[#allocation2 + $0x70] sm:$0xff] %v1479
        %1496 = vst [vmem:[#allocation2 + $0x78] sm:$0xff] %v1480
        %v1497 = vld [vmem:[#allocation2] ss:$2 sm:$0xff]
        %s1498 = scalar_lea.vmem [#allocation2], 16
        %v1499 = vld [vmem:[%s1498] ss:$2 sm:$0xff]
        %s1500 = scalar_lea.vmem [#allocation2], 32
        %v1501 = vld [vmem:[%s1500] ss:$2 sm:$0xff]
        %s1502 = scalar_lea.vmem [#allocation2], 48
        %v1503 = vld [vmem:[%s1502] ss:$2 sm:$0xff]
        %s1504 = scalar_lea.vmem [#allocation2], 64
        %v1505 = vld [vmem:[%s1504] ss:$2 sm:$0xff]
        %s1506 = scalar_lea.vmem [#allocation2], 80
        %v1507 = vld [vmem:[%s1506] ss:$2 sm:$0xff]
        %s1508 = scalar_lea.vmem [#allocation2], 96
        %v1509 = vld [vmem:[%s1508] ss:$2 sm:$0xff]
        %s1510 = scalar_lea.vmem [#allocation2], 112
        %v1511 = vld [vmem:[%s1510] ss:$2 sm:$0xff]
        %s1512 = scalar_lea.vmem [#allocation2], 1
        %v1513 = vld [vmem:[%s1512] ss:$2 sm:$0xff]
        %s1514 = scalar_lea.vmem [#allocation2], 17
        %v1515 = vld [vmem:[%s1514] ss:$2 sm:$0xff]
        %s1516 = scalar_lea.vmem [#allocation2], 33
        %v1517 = vld [vmem:[%s1516] ss:$2 sm:$0xff]
        %s1518 = scalar_lea.vmem [#allocation2], 49
        %v1519 = vld [vmem:[%s1518] ss:$2 sm:$0xff]
        %s1520 = scalar_lea.vmem [#allocation2], 65
        %v1521 = vld [vmem:[%s1520] ss:$2 sm:$0xff]
        %s1522 = scalar_lea.vmem [#allocation2], 81
        %v1523 = vld [vmem:[%s1522] ss:$2 sm:$0xff]
        %s1524 = scalar_lea.vmem [#allocation2], 97
        %v1525 = vld [vmem:[%s1524] ss:$2 sm:$0xff]
        %s1526 = scalar_lea.vmem [#allocation2], 113
        %v1527 = vld [vmem:[%s1526] ss:$2 sm:$0xff]
        %v1528 = vmax.f32 %v1497, %v1513
        %v1529 = vmax.f32 %v1499, %v1515
        %v1530 = vmax.f32 %v1501, %v1517
        %v1531 = vmax.f32 %v1503, %v1519
        %v1532 = vmax.f32 %v1505, %v1521
        %v1533 = vmax.f32 %v1507, %v1523
        %v1534 = vmax.f32 %v1509, %v1525
        %v1535 = vmax.f32 %v1511, %v1527
        %1536 = vst [vmem:[#allocation2 + $0x1] sm:$0xff] %v1528
        %1537 = vst [vmem:[#allocation2 + $0x9] sm:$0xff] %v1529
        %1538 = vst [vmem:[#allocation2 + $0x11] sm:$0xff] %v1530
        %1539 = vst [vmem:[#allocation2 + $0x19] sm:$0xff] %v1531
        %1540 = vst [vmem:[#allocation2 + $0x21] sm:$0xff] %v1532
        %1541 = vst [vmem:[#allocation2 + $0x29] sm:$0xff] %v1533
        %1542 = vst [vmem:[#allocation2 + $0x31] sm:$0xff] %v1534
        %1543 = vst [vmem:[#allocation2 + $0x39] sm:$0xff] %v1535
        %1544 = vst [vmem:[#allocation2] sm:$0x1] 0.0
        %v1545 = vld [vmem:[#allocation2] ss:$2 sm:$0xff]
        %s1546 = scalar_lea.vmem [#allocation2], 16
        %v1547 = vld [vmem:[%s1546] ss:$2 sm:$0xff]
        %s1548 = scalar_lea.vmem [#allocation2], 32
        %v1549 = vld [vmem:[%s1548] ss:$2 sm:$0xff]
        %s1550 = scalar_lea.vmem [#allocation2], 48
        %v1551 = vld [vmem:[%s1550] ss:$2 sm:$0xff]
        %v1552 = vld [vmem:[%s1512] ss:$2 sm:$0xff]
        %v1553 = vld [vmem:[%s1514] ss:$2 sm:$0xff]
        %v1554 = vld [vmem:[%s1516] ss:$2 sm:$0xff]
        %v1555 = vld [vmem:[%s1518] ss:$2 sm:$0xff]
        %s1556 = scalar_lea.vmem [#allocation2], 2
        %v1557 = vld [vmem:[%s1556] ss:$2 sm:$0xff]
        %s1558 = scalar_lea.vmem [#allocation2], 18
        %v1559 = vld [vmem:[%s1558] ss:$2 sm:$0xff]
        %s1560 = scalar_lea.vmem [#allocation2], 34
        %v1561 = vld [vmem:[%s1560] ss:$2 sm:$0xff]
        %s1562 = scalar_lea.vmem [#allocation2], 50
        %v1563 = vld [vmem:[%s1562] ss:$2 sm:$0xff]
        %v1564 = vld [vmem:[%s3] sm:$0xff]
        %v1565 = vld [vmem:[%s3 + $0x8] sm:$0xff]
        %v1566 = vld [vmem:[%s3 + $0x10] sm:$0xff]
        %v1567 = vld [vmem:[%s3 + $0x18] sm:$0xff]
        %v1568 = vld [vmem:[%s3 + $0x20] sm:$0xff]
        %v1569 = vld [vmem:[%s3 + $0x28] sm:$0xff]
        %v1570 = vld [vmem:[%s3 + $0x30] sm:$0xff]
        %v1571 = vld [vmem:[%s3 + $0x38] sm:$0xff]
        %v1572 = vld [vmem:[%s3 + $0x40] sm:$0xff]
        %v1573 = vld [vmem:[%s3 + $0x48] sm:$0xff]
        %v1574 = vld [vmem:[%s3 + $0x50] sm:$0xff]
        %v1575 = vld [vmem:[%s3 + $0x58] sm:$0xff]
        %v1576 = vld [vmem:[%s3 + $0x60] sm:$0xff]
        %v1577 = vld [vmem:[%s3 + $0x68] sm:$0xff]
        %v1578 = vld [vmem:[%s3 + $0x70] sm:$0xff]
        %v1579 = vld [vmem:[%s3 + $0x78] sm:$0xff]
        %v1580 = vld [vmem:[%s3 + $0x80] sm:$0xff]
        %v1581 = vld [vmem:[%s3 + $0x88] sm:$0xff]
        %v1582 = vld [vmem:[%s3 + $0x90] sm:$0xff]
        %v1583 = vld [vmem:[%s3 + $0x98] sm:$0xff]
        %v1584 = vld [vmem:[%s3 + $0xa0] sm:$0xff]
        %v1585 = vld [vmem:[%s3 + $0xa8] sm:$0xff]
        %v1586 = vld [vmem:[%s3 + $0xb0] sm:$0xff]
        %v1587 = vld [vmem:[%s3 + $0xb8] sm:$0xff]
        %v1588 = vld [vmem:[%s3 + $0xc0] sm:$0xff]
        %v1589 = vld [vmem:[%s3 + $0xc8] sm:$0xff]
        %v1590 = vld [vmem:[%s3 + $0xd0] sm:$0xff]
        %v1591 = vld [vmem:[%s3 + $0xd8] sm:$0xff]
        %v1592 = vld [vmem:[%s3 + $0xe0] sm:$0xff]
        %v1593 = vld [vmem:[%s3 + $0xe8] sm:$0xff]
        %v1594 = vld [vmem:[%s3 + $0xf0] sm:$0xff]
        %v1595 = vld [vmem:[%s3 + $0xf8] sm:$0xff]
        %s1596 = scalar_lea.vmem %s3, 256
        %v1597 = vld [vmem:[%s1596] sm:$0xff]
        %v1598 = vld [vmem:[%s1596 + $0x8] sm:$0xff]
        %v1599 = vld [vmem:[%s1596 + $0x10] sm:$0xff]
        %v1600 = vld [vmem:[%s1596 + $0x18] sm:$0xff]
        %v1601 = vld [vmem:[%s1596 + $0x20] sm:$0xff]
        %v1602 = vld [vmem:[%s1596 + $0x28] sm:$0xff]
        %v1603 = vld [vmem:[%s1596 + $0x30] sm:$0xff]
        %v1604 = vld [vmem:[%s1596 + $0x38] sm:$0xff]
        %v1605 = vld [vmem:[%s1596 + $0x40] sm:$0xff]
        %v1606 = vld [vmem:[%s1596 + $0x48] sm:$0xff]
        %v1607 = vld [vmem:[%s1596 + $0x50] sm:$0xff]
        %v1608 = vld [vmem:[%s1596 + $0x58] sm:$0xff]
        %v1609 = vld [vmem:[%s1596 + $0x60] sm:$0xff]
        %v1610 = vld [vmem:[%s1596 + $0x68] sm:$0xff]
        %v1611 = vld [vmem:[%s1596 + $0x70] sm:$0xff]
        %v1612 = vld [vmem:[%s1596 + $0x78] sm:$0xff]
        %v1613 = vld [vmem:[%s1596 + $0x80] sm:$0xff]
        %v1614 = vld [vmem:[%s1596 + $0x88] sm:$0xff]
        %v1615 = vld [vmem:[%s1596 + $0x90] sm:$0xff]
        %v1616 = vld [vmem:[%s1596 + $0x98] sm:$0xff]
        %v1617 = vld [vmem:[%s1596 + $0xa0] sm:$0xff]
        %v1618 = vld [vmem:[%s1596 + $0xa8] sm:$0xff]
        %v1619 = vld [vmem:[%s1596 + $0xb0] sm:$0xff]
        %v1620 = vld [vmem:[%s1596 + $0xb8] sm:$0xff]
        %v1621 = vld [vmem:[%s1596 + $0xc0] sm:$0xff]
        %v1622 = vld [vmem:[%s1596 + $0xc8] sm:$0xff]
        %v1623 = vld [vmem:[%s1596 + $0xd0] sm:$0xff]
        %v1624 = vld [vmem:[%s1596 + $0xd8] sm:$0xff]
        %v1625 = vld [vmem:[%s1596 + $0xe0] sm:$0xff]
        %v1626 = vld [vmem:[%s1596 + $0xe8] sm:$0xff]
        %v1627 = vld [vmem:[%s1596 + $0xf0] sm:$0xff]
        %v1628 = vld [vmem:[%s1596 + $0xf8] sm:$0xff]
        %1629 = vmatpush.msra.mxu0 %v1627
        %1630 = vmatpush.msra.mxu0 %v1625
        %1631 = vmatpush.msra.mxu0 %v1623
        %1632 = vmatpush.msra.mxu0 %v1621
        %1633 = vmatpush.msra.mxu0 %v1619
        %1634 = vmatpush.msra.mxu0 %v1617
        %1635 = vmatpush.msra.mxu0 %v1615
        %1636 = vmatpush.msra.mxu0 %v1613
        %1637 = vmatpush.msra.mxu0 %v1611
        %1638 = vmatpush.msra.mxu0 %v1609
        %1639 = vmatpush.msra.mxu0 %v1607
        %1640 = vmatpush.msra.mxu0 %v1605
        %1641 = vmatpush.msra.mxu0 %v1603
        %1642 = vmatpush.msra.mxu0 %v1601
        %1643 = vmatpush.msra.mxu0 %v1599
        %1644 = vmatpush.msra.mxu0 %v1597
        %1645 = vmatmul.f32.gmra.mxu0 %v1552
        %v1646 = vpop.f32.mrf.mxu0
        %v1647 = vadd.f32 0.0, %v1646
        %1648 = vmatmul.f32.gmra.mxu0 %v1553
        %v1649 = vpop.f32.mrf.mxu0
        %v1650 = vadd.f32 0.0, %v1649
        %1651 = vmatmul.f32.gmra.mxu0 %v1554
        %v1652 = vpop.f32.mrf.mxu0
        %v1653 = vadd.f32 0.0, %v1652
        %1654 = vmatmul.f32.gmra.mxu0 %v1555
        %v1655 = vpop.f32.mrf.mxu0
        %v1656 = vadd.f32 0.0, %v1655
        %1657 = vdwg.mxu0
        %1658 = vmatpush.msra.mxu0 %v1628
        %1659 = vmatpush.msra.mxu0 %v1626
        %1660 = vmatpush.msra.mxu0 %v1624
        %1661 = vmatpush.msra.mxu0 %v1622
        %1662 = vmatpush.msra.mxu0 %v1620
        %1663 = vmatpush.msra.mxu0 %v1618
        %1664 = vmatpush.msra.mxu0 %v1616
        %1665 = vmatpush.msra.mxu0 %v1614
        %1666 = vmatpush.msra.mxu0 %v1612
        %1667 = vmatpush.msra.mxu0 %v1610
        %1668 = vmatpush.msra.mxu0 %v1608
        %1669 = vmatpush.msra.mxu0 %v1606
        %1670 = vmatpush.msra.mxu0 %v1604
        %1671 = vmatpush.msra.mxu0 %v1602
        %1672 = vmatpush.msra.mxu0 %v1600
        %1673 = vmatpush.msra.mxu0 %v1598
        %1674 = vmatmul.f32.gmra.mxu0 %v1552
        %v1675 = vpop.f32.mrf.mxu0
        %v1676 = vadd.f32 0.0, %v1675
        %1677 = vmatmul.f32.gmra.mxu0 %v1553
        %v1678 = vpop.f32.mrf.mxu0
        %v1679 = vadd.f32 0.0, %v1678
        %1680 = vmatmul.f32.gmra.mxu0 %v1554
        %v1681 = vpop.f32.mrf.mxu0
        %v1682 = vadd.f32 0.0, %v1681
        %1683 = vmatmul.f32.gmra.mxu0 %v1555
        %v1684 = vpop.f32.mrf.mxu0
        %v1685 = vadd.f32 0.0, %v1684
        %1686 = vdwg.mxu0
        %1687 = vmatpush.msra.mxu0 %v1594
        %1688 = vmatpush.msra.mxu0 %v1592
        %1689 = vmatpush.msra.mxu0 %v1590
        %1690 = vmatpush.msra.mxu0 %v1588
        %1691 = vmatpush.msra.mxu0 %v1586
        %1692 = vmatpush.msra.mxu0 %v1584
        %1693 = vmatpush.msra.mxu0 %v1582
        %1694 = vmatpush.msra.mxu0 %v1580
        %1695 = vmatpush.msra.mxu0 %v1578
        %1696 = vmatpush.msra.mxu0 %v1576
        %1697 = vmatpush.msra.mxu0 %v1574
        %1698 = vmatpush.msra.mxu0 %v1572
        %1699 = vmatpush.msra.mxu0 %v1570
        %1700 = vmatpush.msra.mxu0 %v1568
        %1701 = vmatpush.msra.mxu0 %v1566
        %1702 = vmatpush.msra.mxu0 %v1564
        %1703 = vmatmul.f32.gmra.mxu0 %v1545
        %v1704 = vpop.f32.mrf.mxu0
        %v1705 = vadd.f32 %v1647, %v1704
        %1706 = vmatmul.f32.gmra.mxu0 %v1547
        %v1707 = vpop.f32.mrf.mxu0
        %v1708 = vadd.f32 %v1650, %v1707
        %1709 = vmatmul.f32.gmra.mxu0 %v1549
        %v1710 = vpop.f32.mrf.mxu0
        %v1711 = vadd.f32 %v1653, %v1710
        %1712 = vmatmul.f32.gmra.mxu0 %v1551
        %v1713 = vpop.f32.mrf.mxu0
        %v1714 = vadd.f32 %v1656, %v1713
        %1715 = vdwg.mxu0
        %1716 = vmatpush.msra.mxu0 %v1595
        %1717 = vmatpush.msra.mxu0 %v1593
        %1718 = vmatpush.msra.mxu0 %v1591
        %1719 = vmatpush.msra.mxu0 %v1589
        %1720 = vmatpush.msra.mxu0 %v1587
        %1721 = vmatpush.msra.mxu0 %v1585
        %1722 = vmatpush.msra.mxu0 %v1583
        %1723 = vmatpush.msra.mxu0 %v1581
        %1724 = vmatpush.msra.mxu0 %v1579
        %1725 = vmatpush.msra.mxu0 %v1577
        %1726 = vmatpush.msra.mxu0 %v1575
        %1727 = vmatpush.msra.mxu0 %v1573
        %1728 = vmatpush.msra.mxu0 %v1571
        %1729 = vmatpush.msra.mxu0 %v1569
        %1730 = vmatpush.msra.mxu0 %v1567
        %1731 = vmatpush.msra.mxu0 %v1565
        %1732 = vmatmul.f32.gmra.mxu0 %v1545
        %v1733 = vpop.f32.mrf.mxu0
        %v1734 = vadd.f32 %v1676, %v1733
        %1735 = vmatmul.f32.gmra.mxu0 %v1547
        %v1736 = vpop.f32.mrf.mxu0
        %v1737 = vadd.f32 %v1679, %v1736
        %1738 = vmatmul.f32.gmra.mxu0 %v1549
        %v1739 = vpop.f32.mrf.mxu0
        %v1740 = vadd.f32 %v1682, %v1739
        %1741 = vmatmul.f32.gmra.mxu0 %v1551
        %v1742 = vpop.f32.mrf.mxu0
        %v1743 = vadd.f32 %v1685, %v1742
        %1744 = vdwg.mxu0
        %s1745 = scalar_lea.vmem %s3, 512
        %v1746 = vld [vmem:[%s1745] sm:$0xff]
        %v1747 = vld [vmem:[%s1745 + $0x8] sm:$0xff]
        %v1748 = vld [vmem:[%s1745 + $0x10] sm:$0xff]
        %v1749 = vld [vmem:[%s1745 + $0x18] sm:$0xff]
        %v1750 = vld [vmem:[%s1745 + $0x20] sm:$0xff]
        %v1751 = vld [vmem:[%s1745 + $0x28] sm:$0xff]
        %v1752 = vld [vmem:[%s1745 + $0x30] sm:$0xff]
        %v1753 = vld [vmem:[%s1745 + $0x38] sm:$0xff]
        %v1754 = vld [vmem:[%s1745 + $0x40] sm:$0xff]
        %v1755 = vld [vmem:[%s1745 + $0x48] sm:$0xff]
        %v1756 = vld [vmem:[%s1745 + $0x50] sm:$0xff]
        %v1757 = vld [vmem:[%s1745 + $0x58] sm:$0xff]
        %v1758 = vld [vmem:[%s1745 + $0x60] sm:$0xff]
        %v1759 = vld [vmem:[%s1745 + $0x68] sm:$0xff]
        %v1760 = vld [vmem:[%s1745 + $0x70] sm:$0xff]
        %v1761 = vld [vmem:[%s1745 + $0x78] sm:$0xff]
        %v1762 = vld [vmem:[%s1745 + $0x80] sm:$0xff]
        %v1763 = vld [vmem:[%s1745 + $0x88] sm:$0xff]
        %v1764 = vld [vmem:[%s1745 + $0x90] sm:$0xff]
        %v1765 = vld [vmem:[%s1745 + $0x98] sm:$0xff]
        %v1766 = vld [vmem:[%s1745 + $0xa0] sm:$0xff]
        %v1767 = vld [vmem:[%s1745 + $0xa8] sm:$0xff]
        %v1768 = vld [vmem:[%s1745 + $0xb0] sm:$0xff]
        %v1769 = vld [vmem:[%s1745 + $0xb8] sm:$0xff]
        %v1770 = vld [vmem:[%s1745 + $0xc0] sm:$0xff]
        %v1771 = vld [vmem:[%s1745 + $0xc8] sm:$0xff]
        %v1772 = vld [vmem:[%s1745 + $0xd0] sm:$0xff]
        %v1773 = vld [vmem:[%s1745 + $0xd8] sm:$0xff]
        %v1774 = vld [vmem:[%s1745 + $0xe0] sm:$0xff]
        %v1775 = vld [vmem:[%s1745 + $0xe8] sm:$0xff]
        %v1776 = vld [vmem:[%s1745 + $0xf0] sm:$0xff]
        %v1777 = vld [vmem:[%s1745 + $0xf8] sm:$0xff]
        %1778 = vmatpush.msra.mxu0 %v1776
        %1779 = vmatpush.msra.mxu0 %v1774
        %1780 = vmatpush.msra.mxu0 %v1772
        %1781 = vmatpush.msra.mxu0 %v1770
        %1782 = vmatpush.msra.mxu0 %v1768
        %1783 = vmatpush.msra.mxu0 %v1766
        %1784 = vmatpush.msra.mxu0 %v1764
        %1785 = vmatpush.msra.mxu0 %v1762
        %1786 = vmatpush.msra.mxu0 %v1760
        %1787 = vmatpush.msra.mxu0 %v1758
        %1788 = vmatpush.msra.mxu0 %v1756
        %1789 = vmatpush.msra.mxu0 %v1754
        %1790 = vmatpush.msra.mxu0 %v1752
        %1791 = vmatpush.msra.mxu0 %v1750
        %1792 = vmatpush.msra.mxu0 %v1748
        %1793 = vmatpush.msra.mxu0 %v1746
        %1794 = vmatmul.f32.gmra.mxu0 %v1557
        %v1795 = vpop.f32.mrf.mxu0
        %v1796 = vadd.f32 0.0, %v1795
        %1797 = vmatmul.f32.gmra.mxu0 %v1559
        %v1798 = vpop.f32.mrf.mxu0
        %v1799 = vadd.f32 0.0, %v1798
        %1800 = vmatmul.f32.gmra.mxu0 %v1561
        %v1801 = vpop.f32.mrf.mxu0
        %v1802 = vadd.f32 0.0, %v1801
        %1803 = vmatmul.f32.gmra.mxu0 %v1563
        %v1804 = vpop.f32.mrf.mxu0
        %v1805 = vadd.f32 0.0, %v1804
        %1806 = vdwg.mxu0
        %1807 = vmatpush.msra.mxu0 %v1777
        %1808 = vmatpush.msra.mxu0 %v1775
        %1809 = vmatpush.msra.mxu0 %v1773
        %1810 = vmatpush.msra.mxu0 %v1771
        %1811 = vmatpush.msra.mxu0 %v1769
        %1812 = vmatpush.msra.mxu0 %v1767
        %1813 = vmatpush.msra.mxu0 %v1765
        %1814 = vmatpush.msra.mxu0 %v1763
        %1815 = vmatpush.msra.mxu0 %v1761
        %1816 = vmatpush.msra.mxu0 %v1759
        %1817 = vmatpush.msra.mxu0 %v1757
        %1818 = vmatpush.msra.mxu0 %v1755
        %1819 = vmatpush.msra.mxu0 %v1753
        %1820 = vmatpush.msra.mxu0 %v1751
        %1821 = vmatpush.msra.mxu0 %v1749
        %1822 = vmatpush.msra.mxu0 %v1747
        %1823 = vmatmul.f32.gmra.mxu0 %v1557
        %v1824 = vpop.f32.mrf.mxu0
        %v1825 = vadd.f32 0.0, %v1824
        %1826 = vmatmul.f32.gmra.mxu0 %v1559
        %v1827 = vpop.f32.mrf.mxu0
        %v1828 = vadd.f32 0.0, %v1827
        %1829 = vmatmul.f32.gmra.mxu0 %v1561
        %v1830 = vpop.f32.mrf.mxu0
        %v1831 = vadd.f32 0.0, %v1830
        %1832 = vmatmul.f32.gmra.mxu0 %v1563
        %v1833 = vpop.f32.mrf.mxu0
        %v1834 = vadd.f32 0.0, %v1833
        %1835 = vdwg.mxu0
        %v1836 = vadd.f32 %v1705, %v1796
        %v1837 = vadd.f32 %v1734, %v1825
        %v1838 = vadd.f32 %v1708, %v1799
        %v1839 = vadd.f32 %v1737, %v1828
        %v1840 = vadd.f32 %v1711, %v1802
        %v1841 = vadd.f32 %v1740, %v1831
        %v1842 = vadd.f32 %v1714, %v1805
        %v1843 = vadd.f32 %v1743, %v1834
        %v1844 = vld [vmem:[%s4] sm:$0x3]
        %v1846 = vperm.slane %v1844, 0
        %v1847 = vperm.slane %v1844, 1
        %v1850 = vadd.f32 %v1836, %v1846
        %v1851 = vadd.f32 %v1837, %v1847
        %v1852 = vadd.f32 %v1838, %v1846
        %v1853 = vadd.f32 %v1839, %v1847
        %v1854 = vadd.f32 %v1840, %v1846
        %v1855 = vadd.f32 %v1841, %v1847
        %v1856 = vadd.f32 %v1842, %v1846
        %v1857 = vadd.f32 %v1843, %v1847
        %v1858 = vmax.f32 %v1850, 0.0
        %v1859 = vmax.f32 %v1852, 0.0
        %v1860 = vmax.f32 %v1854, 0.0
        %v1861 = vmax.f32 %v1856, 0.0
        %v1862 = vadd.f32 %v1858, %v1851
        %v1863 = vadd.f32 %v1859, %v1853
        %v1864 = vadd.f32 %v1860, %v1855
        %v1865 = vadd.f32 %v1861, %v1857
        %v1866 = vmax.f32 %v1862, 0.0
        %v1867 = vmax.f32 %v1863, 0.0
        %v1868 = vmax.f32 %v1864, 0.0
        %v1869 = vmax.f32 %v1865, 0.0
        %1870 = vst [vmem:[#allocation2 + $0x1] sm:$0xff] %v1866
        %1871 = vst [vmem:[#allocation2 + $0x9] sm:$0xff] %v1867
        %1872 = vst [vmem:[#allocation2 + $0x11] sm:$0xff] %v1868
        %1873 = vst [vmem:[#allocation2 + $0x19] sm:$0xff] %v1869
        %v1874 = vld [vmem:[#allocation2] ss:$2 sm:$0xff]
        %v1875 = vld [vmem:[%s1546] ss:$2 sm:$0xff]
        %v1876 = vld [vmem:[%s1512] ss:$2 sm:$0xff]
        %v1877 = vld [vmem:[%s1514] ss:$2 sm:$0xff]
        %v1878 = vld [vmem:[%s1556] ss:$2 sm:$0xff]
        %v1879 = vld [vmem:[%s1558] ss:$2 sm:$0xff]
        %s1880 = scalar_lea.vmem %s3, 768
        %v1881 = vld [vmem:[%s1880] sm:$0xff]
        %v1882 = vld [vmem:[%s1880 + $0x8] sm:$0xff]
        %v1883 = vld [vmem:[%s1880 + $0x10] sm:$0xff]
        %v1884 = vld [vmem:[%s1880 + $0x18] sm:$0xff]
        %v1885 = vld [vmem:[%s1880 + $0x20] sm:$0xff]
        %v1886 = vld [vmem:[%s1880 + $0x28] sm:$0xff]
        %v1887 = vld [vmem:[%s1880 + $0x30] sm:$0xff]
        %v1888 = vld [vmem:[%s1880 + $0x38] sm:$0xff]
        %v1889 = vld [vmem:[%s1880 + $0x40] sm:$0xff]
        %v1890 = vld [vmem:[%s1880 + $0x48] sm:$0xff]
        %v1891 = vld [vmem:[%s1880 + $0x50] sm:$0xff]
        %v1892 = vld [vmem:[%s1880 + $0x58] sm:$0xff]
        %v1893 = vld [vmem:[%s1880 + $0x60] sm:$0xff]
        %v1894 = vld [vmem:[%s1880 + $0x68] sm:$0xff]
        %v1895 = vld [vmem:[%s1880 + $0x70] sm:$0xff]
        %v1896 = vld [vmem:[%s1880 + $0x78] sm:$0xff]
        %v1897 = vld [vmem:[%s1880 + $0x80] sm:$0xff]
        %v1898 = vld [vmem:[%s1880 + $0x88] sm:$0xff]
        %v1899 = vld [vmem:[%s1880 + $0x90] sm:$0xff]
        %v1900 = vld [vmem:[%s1880 + $0x98] sm:$0xff]
        %v1901 = vld [vmem:[%s1880 + $0xa0] sm:$0xff]
        %v1902 = vld [vmem:[%s1880 + $0xa8] sm:$0xff]
        %v1903 = vld [vmem:[%s1880 + $0xb0] sm:$0xff]
        %v1904 = vld [vmem:[%s1880 + $0xb8] sm:$0xff]
        %v1905 = vld [vmem:[%s1880 + $0xc0] sm:$0xff]
        %v1906 = vld [vmem:[%s1880 + $0xc8] sm:$0xff]
        %v1907 = vld [vmem:[%s1880 + $0xd0] sm:$0xff]
        %v1908 = vld [vmem:[%s1880 + $0xd8] sm:$0xff]
        %v1909 = vld [vmem:[%s1880 + $0xe0] sm:$0xff]
        %v1910 = vld [vmem:[%s1880 + $0xe8] sm:$0xff]
        %v1911 = vld [vmem:[%s1880 + $0xf0] sm:$0xff]
        %v1912 = vld [vmem:[%s1880 + $0xf8] sm:$0xff]
        %s1913 = scalar_lea.vmem %s3, 1024
        %v1914 = vld [vmem:[%s1913] sm:$0xff]
        %v1915 = vld [vmem:[%s1913 + $0x8] sm:$0xff]
        %v1916 = vld [vmem:[%s1913 + $0x10] sm:$0xff]
        %v1917 = vld [vmem:[%s1913 + $0x18] sm:$0xff]
        %v1918 = vld [vmem:[%s1913 + $0x20] sm:$0xff]
        %v1919 = vld [vmem:[%s1913 + $0x28] sm:$0xff]
        %v1920 = vld [vmem:[%s1913 + $0x30] sm:$0xff]
        %v1921 = vld [vmem:[%s1913 + $0x38] sm:$0xff]
        %v1922 = vld [vmem:[%s1913 + $0x40] sm:$0xff]
        %v1923 = vld [vmem:[%s1913 + $0x48] sm:$0xff]
        %v1924 = vld [vmem:[%s1913 + $0x50] sm:$0xff]
        %v1925 = vld [vmem:[%s1913 + $0x58] sm:$0xff]
        %v1926 = vld [vmem:[%s1913 + $0x60] sm:$0xff]
        %v1927 = vld [vmem:[%s1913 + $0x68] sm:$0xff]
        %v1928 = vld [vmem:[%s1913 + $0x70] sm:$0xff]
        %v1929 = vld [vmem:[%s1913 + $0x78] sm:$0xff]
        %v1930 = vld [vmem:[%s1913 + $0x80] sm:$0xff]
        %v1931 = vld [vmem:[%s1913 + $0x88] sm:$0xff]
        %v1932 = vld [vmem:[%s1913 + $0x90] sm:$0xff]
        %v1933 = vld [vmem:[%s1913 + $0x98] sm:$0xff]
        %v1934 = vld [vmem:[%s1913 + $0xa0] sm:$0xff]
        %v1935 = vld [vmem:[%s1913 + $0xa8] sm:$0xff]
        %v1936 = vld [vmem:[%s1913 + $0xb0] sm:$0xff]
        %v1937 = vld [vmem:[%s1913 + $0xb8] sm:$0xff]
        %v1938 = vld [vmem:[%s1913 + $0xc0] sm:$0xff]
        %v1939 = vld [vmem:[%s1913 + $0xc8] sm:$0xff]
        %v1940 = vld [vmem:[%s1913 + $0xd0] sm:$0xff]
        %v1941 = vld [vmem:[%s1913 + $0xd8] sm:$0xff]
        %v1942 = vld [vmem:[%s1913 + $0xe0] sm:$0xff]
        %v1943 = vld [vmem:[%s1913 + $0xe8] sm:$0xff]
        %v1944 = vld [vmem:[%s1913 + $0xf0] sm:$0xff]
        %v1945 = vld [vmem:[%s1913 + $0xf8] sm:$0xff]
        %1946 = vmatpush.msra.mxu0 %v1944
        %1947 = vmatpush.msra.mxu0 %v1942
        %1948 = vmatpush.msra.mxu0 %v1940
        %1949 = vmatpush.msra.mxu0 %v1938
        %1950 = vmatpush.msra.mxu0 %v1936
        %1951 = vmatpush.msra.mxu0 %v1934
        %1952 = vmatpush.msra.mxu0 %v1932
        %1953 = vmatpush.msra.mxu0 %v1930
        %1954 = vmatpush.msra.mxu0 %v1928
        %1955 = vmatpush.msra.mxu0 %v1926
        %1956 = vmatpush.msra.mxu0 %v1924
        %1957 = vmatpush.msra.mxu0 %v1922
        %1958 = vmatpush.msra.mxu0 %v1920
        %1959 = vmatpush.msra.mxu0 %v1918
        %1960 = vmatpush.msra.mxu0 %v1916
        %1961 = vmatpush.msra.mxu0 %v1914
        %1962 = vmatmul.f32.gmra.mxu0 %v1876
        %v1963 = vpop.f32.mrf.mxu0
        %v1964 = vadd.f32 0.0, %v1963
        %1965 = vmatmul.f32.gmra.mxu0 %v1877
        %v1966 = vpop.f32.mrf.mxu0
        %v1967 = vadd.f32 0.0, %v1966
        %1968 = vdwg.mxu0
        %1969 = vmatpush.msra.mxu0 %v1945
        %1970 = vmatpush.msra.mxu0 %v1943
        %1971 = vmatpush.msra.mxu0 %v1941
        %1972 = vmatpush.msra.mxu0 %v1939
        %1973 = vmatpush.msra.mxu0 %v1937
        %1974 = vmatpush.msra.mxu0 %v1935
        %1975 = vmatpush.msra.mxu0 %v1933
        %1976 = vmatpush.msra.mxu0 %v1931
        %1977 = vmatpush.msra.mxu0 %v1929
        %1978 = vmatpush.msra.mxu0 %v1927
        %1979 = vmatpush.msra.mxu0 %v1925
        %1980 = vmatpush.msra.mxu0 %v1923
        %1981 = vmatpush.msra.mxu0 %v1921
        %1982 = vmatpush.msra.mxu0 %v1919
        %1983 = vmatpush.msra.mxu0 %v1917
        %1984 = vmatpush.msra.mxu0 %v1915
        %1985 = vmatmul.f32.gmra.mxu0 %v1876
        %v1986 = vpop.f32.mrf.mxu0
        %v1987 = vadd.f32 0.0, %v1986
        %1988 = vmatmul.f32.gmra.mxu0 %v1877
        %v1989 = vpop.f32.mrf.mxu0
        %v1990 = vadd.f32 0.0, %v1989
        %1991 = vdwg.mxu0
        %1992 = vmatpush.msra.mxu0 %v1911
        %1993 = vmatpush.msra.mxu0 %v1909
        %1994 = vmatpush.msra.mxu0 %v1907
        %1995 = vmatpush.msra.mxu0 %v1905
        %1996 = vmatpush.msra.mxu0 %v1903
        %1997 = vmatpush.msra.mxu0 %v1901
        %1998 = vmatpush.msra.mxu0 %v1899
        %1999 = vmatpush.msra.mxu0 %v1897
        %2000 = vmatpush.msra.mxu0 %v1895
        %2001 = vmatpush.msra.mxu0 %v1893
        %2002 = vmatpush.msra.mxu0 %v1891
        %2003 = vmatpush.msra.mxu0 %v1889
        %2004 = vmatpush.msra.mxu0 %v1887
        %2005 = vmatpush.msra.mxu0 %v1885
        %2006 = vmatpush.msra.mxu0 %v1883
        %2007 = vmatpush.msra.mxu0 %v1881
        %2008 = vmatmul.f32.gmra.mxu0 %v1874
        %v2009 = vpop.f32.mrf.mxu0
        %v2010 = vadd.f32 %v1964, %v2009
        %2011 = vmatmul.f32.gmra.mxu0 %v1875
        %v2012 = vpop.f32.mrf.mxu0
        %v2013 = vadd.f32 %v1967, %v2012
        %2014 = vdwg.mxu0
        %2015 = vmatpush.msra.mxu0 %v1912
        %2016 = vmatpush.msra.mxu0 %v1910
        %2017 = vmatpush.msra.mxu0 %v1908
        %2018 = vmatpush.msra.mxu0 %v1906
        %2019 = vmatpush.msra.mxu0 %v1904
        %2020 = vmatpush.msra.mxu0 %v1902
        %2021 = vmatpush.msra.mxu0 %v1900
        %2022 = vmatpush.msra.mxu0 %v1898
        %2023 = vmatpush.msra.mxu0 %v1896
        %2024 = vmatpush.msra.mxu0 %v1894
        %2025 = vmatpush.msra.mxu0 %v1892
        %2026 = vmatpush.msra.mxu0 %v1890
        %2027 = vmatpush.msra.mxu0 %v1888
        %2028 = vmatpush.msra.mxu0 %v1886
        %2029 = vmatpush.msra.mxu0 %v1884
        %2030 = vmatpush.msra.mxu0 %v1882
        %2031 = vmatmul.f32.gmra.mxu0 %v1874
        %v2032 = vpop.f32.mrf.mxu0
        %v2033 = vadd.f32 %v1987, %v2032
        %2034 = vmatmul.f32.gmra.mxu0 %v1875
        %v2035 = vpop.f32.mrf.mxu0
        %v2036 = vadd.f32 %v1990, %v2035
        %2037 = vdwg.mxu0
        %s2038 = scalar_lea.vmem %s3, 1280
        %v2039 = vld [vmem:[%s2038] sm:$0xff]
        %v2040 = vld [vmem:[%s2038 + $0x8] sm:$0xff]
        %v2041 = vld [vmem:[%s2038 + $0x10] sm:$0xff]
        %v2042 = vld [vmem:[%s2038 + $0x18] sm:$0xff]
        %v2043 = vld [vmem:[%s2038 + $0x20] sm:$0xff]
        %v2044 = vld [vmem:[%s2038 + $0x28] sm:$0xff]
        %v2045 = vld [vmem:[%s2038 + $0x30] sm:$0xff]
        %v2046 = vld [vmem:[%s2038 + $0x38] sm:$0xff]
        %v2047 = vld [vmem:[%s2038 + $0x40] sm:$0xff]
        %v2048 = vld [vmem:[%s2038 + $0x48] sm:$0xff]
        %v2049 = vld [vmem:[%s2038 + $0x50] sm:$0xff]
        %v2050 = vld [vmem:[%s2038 + $0x58] sm:$0xff]
        %v2051 = vld [vmem:[%s2038 + $0x60] sm:$0xff]
        %v2052 = vld [vmem:[%s2038 + $0x68] sm:$0xff]
        %v2053 = vld [vmem:[%s2038 + $0x70] sm:$0xff]
        %v2054 = vld [vmem:[%s2038 + $0x78] sm:$0xff]
        %v2055 = vld [vmem:[%s2038 + $0x80] sm:$0xff]
        %v2056 = vld [vmem:[%s2038 + $0x88] sm:$0xff]
        %v2057 = vld [vmem:[%s2038 + $0x90] sm:$0xff]
        %v2058 = vld [vmem:[%s2038 + $0x98] sm:$0xff]
        %v2059 = vld [vmem:[%s2038 + $0xa0] sm:$0xff]
        %v2060 = vld [vmem:[%s2038 + $0xa8] sm:$0xff]
        %v2061 = vld [vmem:[%s2038 + $0xb0] sm:$0xff]
        %v2062 = vld [vmem:[%s2038 + $0xb8] sm:$0xff]
        %v2063 = vld [vmem:[%s2038 + $0xc0] sm:$0xff]
        %v2064 = vld [vmem:[%s2038 + $0xc8] sm:$0xff]
        %v2065 = vld [vmem:[%s2038 + $0xd0] sm:$0xff]
        %v2066 = vld [vmem:[%s2038 + $0xd8] sm:$0xff]
        %v2067 = vld [vmem:[%s2038 + $0xe0] sm:$0xff]
        %v2068 = vld [vmem:[%s2038 + $0xe8] sm:$0xff]
        %v2069 = vld [vmem:[%s2038 + $0xf0] sm:$0xff]
        %v2070 = vld [vmem:[%s2038 + $0xf8] sm:$0xff]
        %2071 = vmatpush.msra.mxu0 %v2069
        %2072 = vmatpush.msra.mxu0 %v2067
        %2073 = vmatpush.msra.mxu0 %v2065
        %2074 = vmatpush.msra.mxu0 %v2063
        %2075 = vmatpush.msra.mxu0 %v2061
        %2076 = vmatpush.msra.mxu0 %v2059
        %2077 = vmatpush.msra.mxu0 %v2057
        %2078 = vmatpush.msra.mxu0 %v2055
        %2079 = vmatpush.msra.mxu0 %v2053
        %2080 = vmatpush.msra.mxu0 %v2051
        %2081 = vmatpush.msra.mxu0 %v2049
        %2082 = vmatpush.msra.mxu0 %v2047
        %2083 = vmatpush.msra.mxu0 %v2045
        %2084 = vmatpush.msra.mxu0 %v2043
        %2085 = vmatpush.msra.mxu0 %v2041
        %2086 = vmatpush.msra.mxu0 %v2039
        %2087 = vmatmul.f32.gmra.mxu0 %v1878
        %v2088 = vpop.f32.mrf.mxu0
        %v2089 = vadd.f32 0.0, %v2088
        %2090 = vmatmul.f32.gmra.mxu0 %v1879
        %v2091 = vpop.f32.mrf.mxu0
        %v2092 = vadd.f32 0.0, %v2091
        %2093 = vdwg.mxu0
        %2094 = vmatpush.msra.mxu0 %v2070
        %2095 = vmatpush.msra.mxu0 %v2068
        %2096 = vmatpush.msra.mxu0 %v2066
        %2097 = vmatpush.msra.mxu0 %v2064
        %2098 = vmatpush.msra.mxu0 %v2062
        %2099 = vmatpush.msra.mxu0 %v2060
        %2100 = vmatpush.msra.mxu0 %v2058
        %2101 = vmatpush.msra.mxu0 %v2056
        %2102 = vmatpush.msra.mxu0 %v2054
        %2103 = vmatpush.msra.mxu0 %v2052
        %2104 = vmatpush.msra.mxu0 %v2050
        %2105 = vmatpush.msra.mxu0 %v2048
        %2106 = vmatpush.msra.mxu0 %v2046
        %2107 = vmatpush.msra.mxu0 %v2044
        %2108 = vmatpush.msra.mxu0 %v2042
        %2109 = vmatpush.msra.mxu0 %v2040
        %2110 = vmatmul.f32.gmra.mxu0 %v1878
        %v2111 = vpop.f32.mrf.mxu0
        %v2112 = vadd.f32 0.0, %v2111
        %2113 = vmatmul.f32.gmra.mxu0 %v1879
        %v2114 = vpop.f32.mrf.mxu0
        %v2115 = vadd.f32 0.0, %v2114
        %2116 = vdwg.mxu0
        %v2117 = vadd.f32 %v2010, %v2089
        %v2118 = vadd.f32 %v2033, %v2112
        %v2119 = vadd.f32 %v2013, %v2092
        %v2120 = vadd.f32 %v2036, %v2115
        %s2121 = scalar_lea.vmem %s4, 2
        %v2122 = vld [vmem:[%s2121] sm:$0x3]
        %v2124 = vperm.slane %v2122, 0
        %v2125 = vperm.slane %v2122, 1
        %v2128 = vadd.f32 %v2117, %v2124
        %v2129 = vadd.f32 %v2118, %v2125
        %v2130 = vadd.f32 %v2119, %v2124
        %v2131 = vadd.f32 %v2120, %v2125
        %v2132 = vmax.f32 %v2128, 0.0
        %v2133 = vmax.f32 %v2130, 0.0
        %v2134 = vadd.f32 %v2132, %v2129
        %v2135 = vadd.f32 %v2133, %v2131
        %v2136 = vmax.f32 %v2134, 0.0
        %v2137 = vmax.f32 %v2135, 0.0
        %2138 = vst [vmem:[#allocation2 + $0x1] sm:$0xff] %v2136
        %2139 = vst [vmem:[#allocation2 + $0x9] sm:$0xff] %v2137
        %v2140 = vld [vmem:[#allocation2] ss:$2 sm:$0xff]
        %v2141 = vld [vmem:[%s1512] ss:$2 sm:$0xff]
        %v2142 = vld [vmem:[%s1556] ss:$2 sm:$0xff]
        %s2143 = scalar_lea.vmem %s3, 1536
        %v2144 = vld [vmem:[%s2143] sm:$0xff]
        %v2145 = vld [vmem:[%s2143 + $0x8] sm:$0xff]
        %v2146 = vld [vmem:[%s2143 + $0x10] sm:$0xff]
        %v2147 = vld [vmem:[%s2143 + $0x18] sm:$0xff]
        %v2148 = vld [vmem:[%s2143 + $0x20] sm:$0xff]
        %v2149 = vld [vmem:[%s2143 + $0x28] sm:$0xff]
        %v2150 = vld [vmem:[%s2143 + $0x30] sm:$0xff]
        %v2151 = vld [vmem:[%s2143 + $0x38] sm:$0xff]
        %v2152 = vld [vmem:[%s2143 + $0x40] sm:$0xff]
        %v2153 = vld [vmem:[%s2143 + $0x48] sm:$0xff]
        %v2154 = vld [vmem:[%s2143 + $0x50] sm:$0xff]
        %v2155 = vld [vmem:[%s2143 + $0x58] sm:$0xff]
        %v2156 = vld [vmem:[%s2143 + $0x60] sm:$0xff]
        %v2157 = vld [vmem:[%s2143 + $0x68] sm:$0xff]
        %v2158 = vld [vmem:[%s2143 + $0x70] sm:$0xff]
        %v2159 = vld [vmem:[%s2143 + $0x78] sm:$0xff]
        %v2160 = vld [vmem:[%s2143 + $0x80] sm:$0xff]
        %v2161 = vld [vmem:[%s2143 + $0x88] sm:$0xff]
        %v2162 = vld [vmem:[%s2143 + $0x90] sm:$0xff]
        %v2163 = vld [vmem:[%s2143 + $0x98] sm:$0xff]
        %v2164 = vld [vmem:[%s2143 + $0xa0] sm:$0xff]
        %v2165 = vld [vmem:[%s2143 + $0xa8] sm:$0xff]
        %v2166 = vld [vmem:[%s2143 + $0xb0] sm:$0xff]
        %v2167 = vld [vmem:[%s2143 + $0xb8] sm:$0xff]
        %v2168 = vld [vmem:[%s2143 + $0xc0] sm:$0xff]
        %v2169 = vld [vmem:[%s2143 + $0xc8] sm:$0xff]
        %v2170 = vld [vmem:[%s2143 + $0xd0] sm:$0xff]
        %v2171 = vld [vmem:[%s2143 + $0xd8] sm:$0xff]
        %v2172 = vld [vmem:[%s2143 + $0xe0] sm:$0xff]
        %v2173 = vld [vmem:[%s2143 + $0xe8] sm:$0xff]
        %v2174 = vld [vmem:[%s2143 + $0xf0] sm:$0xff]
        %v2175 = vld [vmem:[%s2143 + $0xf8] sm:$0xff]
        %s2176 = scalar_lea.vmem %s3, 1792
        %v2177 = vld [vmem:[%s2176] sm:$0xff]
        %v2178 = vld [vmem:[%s2176 + $0x8] sm:$0xff]
        %v2179 = vld [vmem:[%s2176 + $0x10] sm:$0xff]
        %v2180 = vld [vmem:[%s2176 + $0x18] sm:$0xff]
        %v2181 = vld [vmem:[%s2176 + $0x20] sm:$0xff]
        %v2182 = vld [vmem:[%s2176 + $0x28] sm:$0xff]
        %v2183 = vld [vmem:[%s2176 + $0x30] sm:$0xff]
        %v2184 = vld [vmem:[%s2176 + $0x38] sm:$0xff]
        %v2185 = vld [vmem:[%s2176 + $0x40] sm:$0xff]
        %v2186 = vld [vmem:[%s2176 + $0x48] sm:$0xff]
        %v2187 = vld [vmem:[%s2176 + $0x50] sm:$0xff]
        %v2188 = vld [vmem:[%s2176 + $0x58] sm:$0xff]
        %v2189 = vld [vmem:[%s2176 + $0x60] sm:$0xff]
        %v2190 = vld [vmem:[%s2176 + $0x68] sm:$0xff]
        %v2191 = vld [vmem:[%s2176 + $0x70] sm:$0xff]
        %v2192 = vld [vmem:[%s2176 + $0x78] sm:$0xff]
        %v2193 = vld [vmem:[%s2176 + $0x80] sm:$0xff]
        %v2194 = vld [vmem:[%s2176 + $0x88] sm:$0xff]
        %v2195 = vld [vmem:[%s2176 + $0x90] sm:$0xff]
        %v2196 = vld [vmem:[%s2176 + $0x98] sm:$0xff]
        %v2197 = vld [vmem:[%s2176 + $0xa0] sm:$0xff]
        %v2198 = vld [vmem:[%s2176 + $0xa8] sm:$0xff]
        %v2199 = vld [vmem:[%s2176 + $0xb0] sm:$0xff]
        %v2200 = vld [vmem:[%s2176 + $0xb8] sm:$0xff]
        %v2201 = vld [vmem:[%s2176 + $0xc0] sm:$0xff]
        %v2202 = vld [vmem:[%s2176 + $0xc8] sm:$0xff]
        %v2203 = vld [vmem:[%s2176 + $0xd0] sm:$0xff]
        %v2204 = vld [vmem:[%s2176 + $0xd8] sm:$0xff]
        %v2205 = vld [vmem:[%s2176 + $0xe0] sm:$0xff]
        %v2206 = vld [vmem:[%s2176 + $0xe8] sm:$0xff]
        %v2207 = vld [vmem:[%s2176 + $0xf0] sm:$0xff]
        %v2208 = vld [vmem:[%s2176 + $0xf8] sm:$0xff]
        %2209 = vmatpush.msra.mxu0 %v2207
        %2210 = vmatpush.msra.mxu0 %v2205
        %2211 = vmatpush.msra.mxu0 %v2203
        %2212 = vmatpush.msra.mxu0 %v2201
        %2213 = vmatpush.msra.mxu0 %v2199
        %2214 = vmatpush.msra.mxu0 %v2197
        %2215 = vmatpush.msra.mxu0 %v2195
        %2216 = vmatpush.msra.mxu0 %v2193
        %2217 = vmatpush.msra.mxu0 %v2191
        %2218 = vmatpush.msra.mxu0 %v2189
        %2219 = vmatpush.msra.mxu0 %v2187
        %2220 = vmatpush.msra.mxu0 %v2185
        %2221 = vmatpush.msra.mxu0 %v2183
        %2222 = vmatpush.msra.mxu0 %v2181
        %2223 = vmatpush.msra.mxu0 %v2179
        %2224 = vmatpush.msra.mxu0 %v2177
        %2225 = vmatmul.f32.gmra.mxu0 %v2141
        %v2226 = vpop.f32.mrf.mxu0
        %v2227 = vadd.f32 0.0, %v2226
        %2228 = vdwg.mxu0
        %2229 = vmatpush.msra.mxu0 %v2208
        %2230 = vmatpush.msra.mxu0 %v2206
        %2231 = vmatpush.msra.mxu0 %v2204
        %2232 = vmatpush.msra.mxu0 %v2202
        %2233 = vmatpush.msra.mxu0 %v2200
        %2234 = vmatpush.msra.mxu0 %v2198
        %2235 = vmatpush.msra.mxu0 %v2196
        %2236 = vmatpush.msra.mxu0 %v2194
        %2237 = vmatpush.msra.mxu0 %v2192
        %2238 = vmatpush.msra.mxu0 %v2190
        %2239 = vmatpush.msra.mxu0 %v2188
        %2240 = vmatpush.msra.mxu0 %v2186
        %2241 = vmatpush.msra.mxu0 %v2184
        %2242 = vmatpush.msra.mxu0 %v2182
        %2243 = vmatpush.msra.mxu0 %v2180
        %2244 = vmatpush.msra.mxu0 %v2178
        %2245 = vmatmul.f32.gmra.mxu0 %v2141
        %v2246 = vpop.f32.mrf.mxu0
        %v2247 = vadd.f32 0.0, %v2246
        %2248 = vdwg.mxu0
        %2249 = vmatpush.msra.mxu0 %v2174
        %2250 = vmatpush.msra.mxu0 %v2172
        %2251 = vmatpush.msra.mxu0 %v2170
        %2252 = vmatpush.msra.mxu0 %v2168
        %2253 = vmatpush.msra.mxu0 %v2166
        %2254 = vmatpush.msra.mxu0 %v2164
        %2255 = vmatpush.msra.mxu0 %v2162
        %2256 = vmatpush.msra.mxu0 %v2160
        %2257 = vmatpush.msra.mxu0 %v2158
        %2258 = vmatpush.msra.mxu0 %v2156
        %2259 = vmatpush.msra.mxu0 %v2154
        %2260 = vmatpush.msra.mxu0 %v2152
        %2261 = vmatpush.msra.mxu0 %v2150
        %2262 = vmatpush.msra.mxu0 %v2148
        %2263 = vmatpush.msra.mxu0 %v2146
        %2264 = vmatpush.msra.mxu0 %v2144
        %2265 = vmatmul.f32.gmra.mxu0 %v2140
        %v2266 = vpop.f32.mrf.mxu0
        %v2267 = vadd.f32 %v2227, %v2266
        %2268 = vdwg.mxu0
        %2269 = vmatpush.msra.mxu0 %v2175
        %2270 = vmatpush.msra.mxu0 %v2173
        %2271 = vmatpush.msra.mxu0 %v2171
        %2272 = vmatpush.msra.mxu0 %v2169
        %2273 = vmatpush.msra.mxu0 %v2167
        %2274 = vmatpush.msra.mxu0 %v2165
        %2275 = vmatpush.msra.mxu0 %v2163
        %2276 = vmatpush.msra.mxu0 %v2161
        %2277 = vmatpush.msra.mxu0 %v2159
        %2278 = vmatpush.msra.mxu0 %v2157
        %2279 = vmatpush.msra.mxu0 %v2155
        %2280 = vmatpush.msra.mxu0 %v2153
        %2281 = vmatpush.msra.mxu0 %v2151
        %2282 = vmatpush.msra.mxu0 %v2149
        %2283 = vmatpush.msra.mxu0 %v2147
        %2284 = vmatpush.msra.mxu0 %v2145
        %2285 = vmatmul.f32.gmra.mxu0 %v2140
        %v2286 = vpop.f32.mrf.mxu0
        %v2287 = vadd.f32 %v2247, %v2286
        %2288 = vdwg.mxu0
        %s2289 = scalar_lea.vmem %s3, 2048
        %v2290 = vld [vmem:[%s2289] sm:$0xff]
        %v2291 = vld [vmem:[%s2289 + $0x8] sm:$0xff]
        %v2292 = vld [vmem:[%s2289 + $0x10] sm:$0xff]
        %v2293 = vld [vmem:[%s2289 + $0x18] sm:$0xff]
        %v2294 = vld [vmem:[%s2289 + $0x20] sm:$0xff]
        %v2295 = vld [vmem:[%s2289 + $0x28] sm:$0xff]
        %v2296 = vld [vmem:[%s2289 + $0x30] sm:$0xff]
        %v2297 = vld [vmem:[%s2289 + $0x38] sm:$0xff]
        %v2298 = vld [vmem:[%s2289 + $0x40] sm:$0xff]
        %v2299 = vld [vmem:[%s2289 + $0x48] sm:$0xff]
        %v2300 = vld [vmem:[%s2289 + $0x50] sm:$0xff]
        %v2301 = vld [vmem:[%s2289 + $0x58] sm:$0xff]
        %v2302 = vld [vmem:[%s2289 + $0x60] sm:$0xff]
        %v2303 = vld [vmem:[%s2289 + $0x68] sm:$0xff]
        %v2304 = vld [vmem:[%s2289 + $0x70] sm:$0xff]
        %v2305 = vld [vmem:[%s2289 + $0x78] sm:$0xff]
        %v2306 = vld [vmem:[%s2289 + $0x80] sm:$0xff]
        %v2307 = vld [vmem:[%s2289 + $0x88] sm:$0xff]
        %v2308 = vld [vmem:[%s2289 + $0x90] sm:$0xff]
        %v2309 = vld [vmem:[%s2289 + $0x98] sm:$0xff]
        %v2310 = vld [vmem:[%s2289 + $0xa0] sm:$0xff]
        %v2311 = vld [vmem:[%s2289 + $0xa8] sm:$0xff]
        %v2312 = vld [vmem:[%s2289 + $0xb0] sm:$0xff]
        %v2313 = vld [vmem:[%s2289 + $0xb8] sm:$0xff]
        %v2314 = vld [vmem:[%s2289 + $0xc0] sm:$0xff]
        %v2315 = vld [vmem:[%s2289 + $0xc8] sm:$0xff]
        %v2316 = vld [vmem:[%s2289 + $0xd0] sm:$0xff]
        %v2317 = vld [vmem:[%s2289 + $0xd8] sm:$0xff]
        %v2318 = vld [vmem:[%s2289 + $0xe0] sm:$0xff]
        %v2319 = vld [vmem:[%s2289 + $0xe8] sm:$0xff]
        %v2320 = vld [vmem:[%s2289 + $0xf0] sm:$0xff]
        %v2321 = vld [vmem:[%s2289 + $0xf8] sm:$0xff]
        %2322 = vmatpush.msra.mxu0 %v2320
        %2323 = vmatpush.msra.mxu0 %v2318
        %2324 = vmatpush.msra.mxu0 %v2316
        %2325 = vmatpush.msra.mxu0 %v2314
        %2326 = vmatpush.msra.mxu0 %v2312
        %2327 = vmatpush.msra.mxu0 %v2310
        %2328 = vmatpush.msra.mxu0 %v2308
        %2329 = vmatpush.msra.mxu0 %v2306
        %2330 = vmatpush.msra.mxu0 %v2304
        %2331 = vmatpush.msra.mxu0 %v2302
        %2332 = vmatpush.msra.mxu0 %v2300
        %2333 = vmatpush.msra.mxu0 %v2298
        %2334 = vmatpush.msra.mxu0 %v2296
        %2335 = vmatpush.msra.mxu0 %v2294
        %2336 = vmatpush.msra.mxu0 %v2292
        %2337 = vmatpush.msra.mxu0 %v2290
        %2338 = vmatmul.f32.gmra.mxu0 %v2142
        %v2339 = vpop.f32.mrf.mxu0
        %v2340 = vadd.f32 0.0, %v2339
        %2341 = vdwg.mxu0
        %2342 = vmatpush.msra.mxu0 %v2321
        %2343 = vmatpush.msra.mxu0 %v2319
        %2344 = vmatpush.msra.mxu0 %v2317
        %2345 = vmatpush.msra.mxu0 %v2315
        %2346 = vmatpush.msra.mxu0 %v2313
        %2347 = vmatpush.msra.mxu0 %v2311
        %2348 = vmatpush.msra.mxu0 %v2309
        %2349 = vmatpush.msra.mxu0 %v2307
        %2350 = vmatpush.msra.mxu0 %v2305
        %2351 = vmatpush.msra.mxu0 %v2303
        %2352 = vmatpush.msra.mxu0 %v2301
        %2353 = vmatpush.msra.mxu0 %v2299
        %2354 = vmatpush.msra.mxu0 %v2297
        %2355 = vmatpush.msra.mxu0 %v2295
        %2356 = vmatpush.msra.mxu0 %v2293
        %2357 = vmatpush.msra.mxu0 %v2291
        %2358 = vmatmul.f32.gmra.mxu0 %v2142
        %v2359 = vpop.f32.mrf.mxu0
        %v2360 = vadd.f32 0.0, %v2359
        %2361 = vdwg.mxu0
        %v2362 = vadd.f32 %v2267, %v2340
        %v2363 = vadd.f32 %v2287, %v2360
        %s2364 = scalar_lea.vmem %s4, 4
        %v2365 = vld [vmem:[%s2364] sm:$0x3]
        %v2367 = vperm.slane %v2365, 0
        %v2368 = vperm.slane %v2365, 1
        %v2371 = vadd.f32 %v2362, %v2367
        %v2372 = vadd.f32 %v2363, %v2368
        %v2373 = vmax.f32 %v2371, 0.0
        %v2374 = vadd.f32 %v2373, %v2372
        %v2375 = vmax.f32 %v2374, 0.0
        %2376 = vst [vmem:[#allocation2 + $0x1] sm:$0xff] %v2375
        %v2377 = vld [vmem:[#allocation2] ss:$2 sm:$0xf]
        %v2378 = vld [vmem:[%s1512] ss:$2 sm:$0xf]
        %v2379 = vld [vmem:[%s1556] ss:$2 sm:$0xf]
        %s2380 = scalar_lea.vmem %s3, 2304
        %v2381 = vld [vmem:[%s2380] sm:$0xff]
        %v2382 = vld [vmem:[%s2380 + $0x8] sm:$0xff]
        %v2383 = vld [vmem:[%s2380 + $0x10] sm:$0xff]
        %v2384 = vld [vmem:[%s2380 + $0x18] sm:$0xff]
        %v2385 = vld [vmem:[%s2380 + $0x20] sm:$0xff]
        %v2386 = vld [vmem:[%s2380 + $0x28] sm:$0xff]
        %v2387 = vld [vmem:[%s2380 + $0x30] sm:$0xff]
        %v2388 = vld [vmem:[%s2380 + $0x38] sm:$0xff]
        %v2389 = vld [vmem:[%s2380 + $0x40] sm:$0xff]
        %v2390 = vld [vmem:[%s2380 + $0x48] sm:$0xff]
        %v2391 = vld [vmem:[%s2380 + $0x50] sm:$0xff]
        %v2392 = vld [vmem:[%s2380 + $0x58] sm:$0xff]
        %v2393 = vld [vmem:[%s2380 + $0x60] sm:$0xff]
        %v2394 = vld [vmem:[%s2380 + $0x68] sm:$0xff]
        %v2395 = vld [vmem:[%s2380 + $0x70] sm:$0xff]
        %v2396 = vld [vmem:[%s2380 + $0x78] sm:$0xff]
        %v2397 = vld [vmem:[%s2380 + $0x80] sm:$0xff]
        %v2398 = vld [vmem:[%s2380 + $0x88] sm:$0xff]
        %v2399 = vld [vmem:[%s2380 + $0x90] sm:$0xff]
        %v2400 = vld [vmem:[%s2380 + $0x98] sm:$0xff]
        %v2401 = vld [vmem:[%s2380 + $0xa0] sm:$0xff]
        %v2402 = vld [vmem:[%s2380 + $0xa8] sm:$0xff]
        %v2403 = vld [vmem:[%s2380 + $0xb0] sm:$0xff]
        %v2404 = vld [vmem:[%s2380 + $0xb8] sm:$0xff]
        %v2405 = vld [vmem:[%s2380 + $0xc0] sm:$0xff]
        %v2406 = vld [vmem:[%s2380 + $0xc8] sm:$0xff]
        %v2407 = vld [vmem:[%s2380 + $0xd0] sm:$0xff]
        %v2408 = vld [vmem:[%s2380 + $0xd8] sm:$0xff]
        %v2409 = vld [vmem:[%s2380 + $0xe0] sm:$0xff]
        %v2410 = vld [vmem:[%s2380 + $0xe8] sm:$0xff]
        %v2411 = vld [vmem:[%s2380 + $0xf0] sm:$0xff]
        %v2412 = vld [vmem:[%s2380 + $0xf8] sm:$0xff]
        %s2413 = scalar_lea.vmem %s3, 2560
        %v2414 = vld [vmem:[%s2413] sm:$0xff]
        %v2415 = vld [vmem:[%s2413 + $0x8] sm:$0xff]
        %v2416 = vld [vmem:[%s2413 + $0x10] sm:$0xff]
        %v2417 = vld [vmem:[%s2413 + $0x18] sm:$0xff]
        %v2418 = vld [vmem:[%s2413 + $0x20] sm:$0xff]
        %v2419 = vld [vmem:[%s2413 + $0x28] sm:$0xff]
        %v2420 = vld [vmem:[%s2413 + $0x30] sm:$0xff]
        %v2421 = vld [vmem:[%s2413 + $0x38] sm:$0xff]
        %v2422 = vld [vmem:[%s2413 + $0x40] sm:$0xff]
        %v2423 = vld [vmem:[%s2413 + $0x48] sm:$0xff]
        %v2424 = vld [vmem:[%s2413 + $0x50] sm:$0xff]
        %v2425 = vld [vmem:[%s2413 + $0x58] sm:$0xff]
        %v2426 = vld [vmem:[%s2413 + $0x60] sm:$0xff]
        %v2427 = vld [vmem:[%s2413 + $0x68] sm:$0xff]
        %v2428 = vld [vmem:[%s2413 + $0x70] sm:$0xff]
        %v2429 = vld [vmem:[%s2413 + $0x78] sm:$0xff]
        %v2430 = vld [vmem:[%s2413 + $0x80] sm:$0xff]
        %v2431 = vld [vmem:[%s2413 + $0x88] sm:$0xff]
        %v2432 = vld [vmem:[%s2413 + $0x90] sm:$0xff]
        %v2433 = vld [vmem:[%s2413 + $0x98] sm:$0xff]
        %v2434 = vld [vmem:[%s2413 + $0xa0] sm:$0xff]
        %v2435 = vld [vmem:[%s2413 + $0xa8] sm:$0xff]
        %v2436 = vld [vmem:[%s2413 + $0xb0] sm:$0xff]
        %v2437 = vld [vmem:[%s2413 + $0xb8] sm:$0xff]
        %v2438 = vld [vmem:[%s2413 + $0xc0] sm:$0xff]
        %v2439 = vld [vmem:[%s2413 + $0xc8] sm:$0xff]
        %v2440 = vld [vmem:[%s2413 + $0xd0] sm:$0xff]
        %v2441 = vld [vmem:[%s2413 + $0xd8] sm:$0xff]
        %v2442 = vld [vmem:[%s2413 + $0xe0] sm:$0xff]
        %v2443 = vld [vmem:[%s2413 + $0xe8] sm:$0xff]
        %v2444 = vld [vmem:[%s2413 + $0xf0] sm:$0xff]
        %v2445 = vld [vmem:[%s2413 + $0xf8] sm:$0xff]
        %2446 = vmatpush.msra.mxu0 %v2444
        %2447 = vmatpush.msra.mxu0 %v2442
        %2448 = vmatpush.msra.mxu0 %v2440
        %2449 = vmatpush.msra.mxu0 %v2438
        %2450 = vmatpush.msra.mxu0 %v2436
        %2451 = vmatpush.msra.mxu0 %v2434
        %2452 = vmatpush.msra.mxu0 %v2432
        %2453 = vmatpush.msra.mxu0 %v2430
        %2454 = vmatpush.msra.mxu0 %v2428
        %2455 = vmatpush.msra.mxu0 %v2426
        %2456 = vmatpush.msra.mxu0 %v2424
        %2457 = vmatpush.msra.mxu0 %v2422
        %2458 = vmatpush.msra.mxu0 %v2420
        %2459 = vmatpush.msra.mxu0 %v2418
        %2460 = vmatpush.msra.mxu0 %v2416
        %2461 = vmatpush.msra.mxu0 %v2414
        %2462 = vmatmul.f32.gmra.mxu0 %v2378
        %v2463 = vpop.f32.mrf.mxu0
        %v2464 = vadd.f32 0.0, %v2463
        %2465 = vdwg.mxu0
        %2466 = vmatpush.msra.mxu0 %v2445
        %2467 = vmatpush.msra.mxu0 %v2443
        %2468 = vmatpush.msra.mxu0 %v2441
        %2469 = vmatpush.msra.mxu0 %v2439
        %2470 = vmatpush.msra.mxu0 %v2437
        %2471 = vmatpush.msra.mxu0 %v2435
        %2472 = vmatpush.msra.mxu0 %v2433
        %2473 = vmatpush.msra.mxu0 %v2431
        %2474 = vmatpush.msra.mxu0 %v2429
        %2475 = vmatpush.msra.mxu0 %v2427
        %2476 = vmatpush.msra.mxu0 %v2425
        %2477 = vmatpush.msra.mxu0 %v2423
        %2478 = vmatpush.msra.mxu0 %v2421
        %2479 = vmatpush.msra.mxu0 %v2419
        %2480 = vmatpush.msra.mxu0 %v2417
        %2481 = vmatpush.msra.mxu0 %v2415
        %2482 = vmatmul.f32.gmra.mxu0 %v2378
        %v2483 = vpop.f32.mrf.mxu0
        %v2484 = vadd.f32 0.0, %v2483
        %2485 = vdwg.mxu0
        %2486 = vmatpush.msra.mxu0 %v2411
        %2487 = vmatpush.msra.mxu0 %v2409
        %2488 = vmatpush.msra.mxu0 %v2407
        %2489 = vmatpush.msra.mxu0 %v2405
        %2490 = vmatpush.msra.mxu0 %v2403
        %2491 = vmatpush.msra.mxu0 %v2401
        %2492 = vmatpush.msra.mxu0 %v2399
        %2493 = vmatpush.msra.mxu0 %v2397
        %2494 = vmatpush.msra.mxu0 %v2395
        %2495 = vmatpush.msra.mxu0 %v2393
        %2496 = vmatpush.msra.mxu0 %v2391
        %2497 = vmatpush.msra.mxu0 %v2389
        %2498 = vmatpush.msra.mxu0 %v2387
        %2499 = vmatpush.msra.mxu0 %v2385
        %2500 = vmatpush.msra.mxu0 %v2383
        %2501 = vmatpush.msra.mxu0 %v2381
        %2502 = vmatmul.f32.gmra.mxu0 %v2377
        %v2503 = vpop.f32.mrf.mxu0
        %v2504 = vadd.f32 %v2464, %v2503
        %2505 = vdwg.mxu0
        %2506 = vmatpush.msra.mxu0 %v2412
        %2507 = vmatpush.msra.mxu0 %v2410
        %2508 = vmatpush.msra.mxu0 %v2408
        %2509 = vmatpush.msra.mxu0 %v2406
        %2510 = vmatpush.msra.mxu0 %v2404
        %2511 = vmatpush.msra.mxu0 %v2402
        %2512 = vmatpush.msra.mxu0 %v2400
        %2513 = vmatpush.msra.mxu0 %v2398
        %2514 = vmatpush.msra.mxu0 %v2396
        %2515 = vmatpush.msra.mxu0 %v2394
        %2516 = vmatpush.msra.mxu0 %v2392
        %2517 = vmatpush.msra.mxu0 %v2390
        %2518 = vmatpush.msra.mxu0 %v2388
        %2519 = vmatpush.msra.mxu0 %v2386
        %2520 = vmatpush.msra.mxu0 %v2384
        %2521 = vmatpush.msra.mxu0 %v2382
        %2522 = vmatmul.f32.gmra.mxu0 %v2377
        %v2523 = vpop.f32.mrf.mxu0
        %v2524 = vadd.f32 %v2484, %v2523
        %2525 = vdwg.mxu0
        %s2526 = scalar_lea.vmem %s3, 2816
        %v2527 = vld [vmem:[%s2526] sm:$0xff]
        %v2528 = vld [vmem:[%s2526 + $0x8] sm:$0xff]
        %v2529 = vld [vmem:[%s2526 + $0x10] sm:$0xff]
        %v2530 = vld [vmem:[%s2526 + $0x18] sm:$0xff]
        %v2531 = vld [vmem:[%s2526 + $0x20] sm:$0xff]
        %v2532 = vld [vmem:[%s2526 + $0x28] sm:$0xff]
        %v2533 = vld [vmem:[%s2526 + $0x30] sm:$0xff]
        %v2534 = vld [vmem:[%s2526 + $0x38] sm:$0xff]
        %v2535 = vld [vmem:[%s2526 + $0x40] sm:$0xff]
        %v2536 = vld [vmem:[%s2526 + $0x48] sm:$0xff]
        %v2537 = vld [vmem:[%s2526 + $0x50] sm:$0xff]
        %v2538 = vld [vmem:[%s2526 + $0x58] sm:$0xff]
        %v2539 = vld [vmem:[%s2526 + $0x60] sm:$0xff]
        %v2540 = vld [vmem:[%s2526 + $0x68] sm:$0xff]
        %v2541 = vld [vmem:[%s2526 + $0x70] sm:$0xff]
        %v2542 = vld [vmem:[%s2526 + $0x78] sm:$0xff]
        %v2543 = vld [vmem:[%s2526 + $0x80] sm:$0xff]
        %v2544 = vld [vmem:[%s2526 + $0x88] sm:$0xff]
        %v2545 = vld [vmem:[%s2526 + $0x90] sm:$0xff]
        %v2546 = vld [vmem:[%s2526 + $0x98] sm:$0xff]
        %v2547 = vld [vmem:[%s2526 + $0xa0] sm:$0xff]
        %v2548 = vld [vmem:[%s2526 + $0xa8] sm:$0xff]
        %v2549 = vld [vmem:[%s2526 + $0xb0] sm:$0xff]
        %v2550 = vld [vmem:[%s2526 + $0xb8] sm:$0xff]
        %v2551 = vld [vmem:[%s2526 + $0xc0] sm:$0xff]
        %v2552 = vld [vmem:[%s2526 + $0xc8] sm:$0xff]
        %v2553 = vld [vmem:[%s2526 + $0xd0] sm:$0xff]
        %v2554 = vld [vmem:[%s2526 + $0xd8] sm:$0xff]
        %v2555 = vld [vmem:[%s2526 + $0xe0] sm:$0xff]
        %v2556 = vld [vmem:[%s2526 + $0xe8] sm:$0xff]
        %v2557 = vld [vmem:[%s2526 + $0xf0] sm:$0xff]
        %v2558 = vld [vmem:[%s2526 + $0xf8] sm:$0xff]
        %2559 = vmatpush.msra.mxu0 %v2557
        %2560 = vmatpush.msra.mxu0 %v2555
        %2561 = vmatpush.msra.mxu0 %v2553
        %2562 = vmatpush.msra.mxu0 %v2551
        %2563 = vmatpush.msra.mxu0 %v2549
        %2564 = vmatpush.msra.mxu0 %v2547
        %2565 = vmatpush.msra.mxu0 %v2545
        %2566 = vmatpush.msra.mxu0 %v2543
        %2567 = vmatpush.msra.mxu0 %v2541
        %2568 = vmatpush.msra.mxu0 %v2539
        %2569 = vmatpush.msra.mxu0 %v2537
        %2570 = vmatpush.msra.mxu0 %v2535
        %2571 = vmatpush.msra.mxu0 %v2533
        %2572 = vmatpush.msra.mxu0 %v2531
        %2573 = vmatpush.msra.mxu0 %v2529
        %2574 = vmatpush.msra.mxu0 %v2527
        %2575 = vmatmul.f32.gmra.mxu0 %v2379
        %v2576 = vpop.f32.mrf.mxu0
        %v2577 = vadd.f32 0.0, %v2576
        %2578 = vdwg.mxu0
        %2579 = vmatpush.msra.mxu0 %v2558
        %2580 = vmatpush.msra.mxu0 %v2556
        %2581 = vmatpush.msra.mxu0 %v2554
        %2582 = vmatpush.msra.mxu0 %v2552
        %2583 = vmatpush.msra.mxu0 %v2550
        %2584 = vmatpush.msra.mxu0 %v2548
        %2585 = vmatpush.msra.mxu0 %v2546
        %2586 = vmatpush.msra.mxu0 %v2544
        %2587 = vmatpush.msra.mxu0 %v2542
        %2588 = vmatpush.msra.mxu0 %v2540
        %2589 = vmatpush.msra.mxu0 %v2538
        %2590 = vmatpush.msra.mxu0 %v2536
        %2591 = vmatpush.msra.mxu0 %v2534
        %2592 = vmatpush.msra.mxu0 %v2532
        %2593 = vmatpush.msra.mxu0 %v2530
        %2594 = vmatpush.msra.mxu0 %v2528
        %2595 = vmatmul.f32.gmra.mxu0 %v2379
        %v2596 = vpop.f32.mrf.mxu0
        %v2597 = vadd.f32 0.0, %v2596
        %2598 = vdwg.mxu0
        %v2599 = vadd.f32 %v2504, %v2577
        %v2600 = vadd.f32 %v2524, %v2597
        %s2601 = scalar_lea.vmem %s4, 6
        %v2602 = vld [vmem:[%s2601] sm:$0x3]
        %v2604 = vperm.slane %v2602, 0
        %v2605 = vperm.slane %v2602, 1
        %v2608 = vadd.f32 %v2599, %v2604
        %v2609 = vadd.f32 %v2600, %v2605
        %v2610 = vmax.f32 %v2608, 0.0
        %v2611 = vadd.f32 %v2610, %v2609
        %v2612 = vmax.f32 %v2611, 0.0
        %vm2613 = vcmask 1043456
        %v2614 = vsel %vm2613, %v2612, 0.0
        %v2615 = vrot.slane %v2614, 4
        %v2616 = vadd.f32 %v2614, %v2615
        %v2617 = vrot.slane %v2616, 2
        %v2618 = vadd.f32 %v2616, %v2617
        %v2619 = vrot.slane %v2618, 1
        %v2620 = vadd.f32 %v2618, %v2619
        %v2621 = vrcp.pop 4.0
        %v2622 = vmul.f32 4.0, %v2621
        %v2623 = vsub.f32 1.0, %v2622
        %v2624 = vmul.f32 %v2621, %v2623
        %v2625 = vadd.f32 %v2621, %v2624
        %vm2626 = vweird.f32 %v2621
        %v2627 = vsel %vm2626, %v2621, %v2625
        %v2628 = vmul.f32 %v2620, %v2627
        %v2629 = vld [vmem:[%s5] sm:$0xff]
        %v2630 = vld [vmem:[%s5 + $0x8] sm:$0xff]
        %v2631 = vld [vmem:[%s5 + $0x10] sm:$0xff]
        %v2632 = vld [vmem:[%s5 + $0x18] sm:$0xff]
        %v2633 = vld [vmem:[%s5 + $0x20] sm:$0xff]
        %v2634 = vld [vmem:[%s5 + $0x28] sm:$0xff]
        %v2635 = vld [vmem:[%s5 + $0x30] sm:$0xff]
        %v2636 = vld [vmem:[%s5 + $0x38] sm:$0xff]
        %v2637 = vld [vmem:[%s5 + $0x40] sm:$0xff]
        %v2638 = vld [vmem:[%s5 + $0x48] sm:$0xff]
        %v2639 = vld [vmem:[%s5 + $0x50] sm:$0xff]
        %v2640 = vld [vmem:[%s5 + $0x58] sm:$0xff]
        %v2641 = vld [vmem:[%s5 + $0x60] sm:$0xff]
        %v2642 = vld [vmem:[%s5 + $0x68] sm:$0xff]
        %v2643 = vld [vmem:[%s5 + $0x70] sm:$0xff]
        %v2644 = vld [vmem:[%s5 + $0x78] sm:$0xff]
        %v2645 = vld [vmem:[%s6] sm:$0x1]
        %2646 = vmatpush.msra.mxu0 %v2644
        %2647 = vmatpush.msra.mxu0 %v2643
        %2648 = vmatpush.msra.mxu0 %v2642
        %2649 = vmatpush.msra.mxu0 %v2641
        %2650 = vmatpush.msra.mxu0 %v2640
        %2651 = vmatpush.msra.mxu0 %v2639
        %2652 = vmatpush.msra.mxu0 %v2638
        %2653 = vmatpush.msra.mxu0 %v2637
        %2654 = vmatpush.msra.mxu0 %v2636
        %2655 = vmatpush.msra.mxu0 %v2635
        %2656 = vmatpush.msra.mxu0 %v2634
        %2657 = vmatpush.msra.mxu0 %v2633
        %2658 = vmatpush.msra.mxu0 %v2632
        %2659 = vmatpush.msra.mxu0 %v2631
        %2660 = vmatpush.msra.mxu0 %v2630
        %2661 = vmatpush.msra.mxu0 %v2629
        %2662 = vmatmul.f32.gmra.mxu0 %v2628
        %v2663 = vpop.f32.mrf.mxu0
        %v2664 = vadd.f32 %v2645, %v2663
        %2665 = vdwg.mxu0
        %vm2666 = vcmask 57344
        %2667 = vst.msk [vmem:[%s270] sm:$0x1] %vm2666, %v2664
        %s2668 = sand.u32 %s181, 1
        %s2669 = scalar_lea.sflag [#allocation4], %s2668
        %s2670 = sand.u32 %s181, 1
        %s2671 = scalar_lea.vmem [#allocation3], %s2670
        // Predicated region
        $region49: #{modulation_classifier_forward.1} parent=47 // pred_check
          %p2672 = pneg %p191
        $region50: #{modulation_classifier_forward.1} parent=47 // pred_check_branch
          %2674 = sbr.rel (%p2672) target = $region52
        $region51: #{modulation_classifier_forward.1} parent=47 // pred_region
          %2676 = vsyncadd %s2669, 0
          %s2677 = scalar_lea.hbm %s7, %s21
          %s2679 = sshll.u32 %s2671, 4
          %s2680 = int_to_ptr.vmem [resolvable:$true] %s2679
          %s2681 = sshll.u32 %s2677, 4
          %s2682 = int_to_ptr.hbm [resolvable:$true] %s2681
          %2684 = dma.vmem_to_hbm [thread:$0]  %s2680, 16, %s2682, %s2669
        $region52: #{modulation_classifier_forward.1} parent=47 // pred_fallthru
          _
      $region48: #{modulation_classifier_forward.1} parent=5 // pred_fallthru
        _
      %p2685 = scmp.le.s32.totalorder 2, %s16
      // Predicated region
      $region53: #{modulation_classifier_forward.1} parent=5 // pred_check
        %p2686 = pneg %p2685
      $region54: #{modulation_classifier_forward.1} parent=5 // pred_check_branch
        %2688 = sbr.rel (%p2686) target = $region56
      $region55: #{modulation_classifier_forward.1} parent=5 // pred_region
        %s2689 = ssub.s32 %s16, 2
        // Predicated region
        $region57: #{modulation_classifier_forward.1} parent=55 // pred_check
          %p2690 = pneg %p197
        $region58: #{modulation_classifier_forward.1} parent=55 // pred_check_branch
          %2692 = sbr.rel (%p2690) target = $region60
        $region59: #{modulation_classifier_forward.1} parent=55 // pred_region
          %s2693 = sand.u32 %s182, 1
          %s2694 = scalar_lea.sflag [#allocation4], %s2693
          %s2695 = sand.u32 %s182, 1
          %s2696 = scalar_lea.vmem [#allocation3], %s2695
          %2698 = dma.done %s2694, 16
        $region60: #{modulation_classifier_forward.1} parent=55 // pred_fallthru
          _
      $region56: #{modulation_classifier_forward.1} parent=5 // pred_fallthru
        _
    $region6: #{modulation_classifier_forward.1} parent=1 // loop_footer
      %s20 = sadd.s32 1, %s16
    $region7: #{modulation_classifier_forward.1} parent=1 // loop_footer_branch
      %15 = sbr.rel target = $region3
    $region8: #{modulation_classifier_forward.1} parent=1 // loop_exit
      _
    %2699 = vsyncpa [#allocation4], 1
    %s2700 = scalar_lea.sflag [#allocation4], 1
    %2701 = vsyncpa %s2700, 1

</llo_original>
